<compile_context>
chip_gen: v7x
topology: tpu7x:2x2x1
jax: 0.10.0
libtpu: 0.0.40
codegen_flags: <defaults>
</compile_context>

<pallas_src>
import functools

import jax
import jax.numpy as jnp
from jax.experimental import pallas as pl
from jax.experimental.pallas import tpu as pltpu


def _round_up(x, m):
    return (x + m - 1) // m * m


def _log_sigmoid(x):
    # numerically stable log(sigmoid(x)) = min(x, 0) - log(1 + exp(-|x|))
    return jnp.minimum(x, 0.0) - jnp.log(1.0 + jnp.exp(-jnp.abs(x)))


def _pad_lanes(v, width):
    d = width - v.shape[1]
    if d == 0:
        return v
    return jnp.concatenate([v, jnp.zeros((v.shape[0], d), v.dtype)], axis=1)


# ---------------------------------------------------------------------------
# Fused kernel: embedding gather + attention + GRU stack + out-proj + pgen
# ---------------------------------------------------------------------------
def fused_decoder_kernel(tok_ref, emb_hbm, hid_ref, enc_ref, w_attn_ref, w_gru_ref,
                         w_out_ref, bias_ref,
                         logp_ref, nh_ref, misc_ref,
                         emb_scr, emb_sem, *, V, S):
    f32, bf16 = jnp.float32, jnp.bfloat16
    n_layers, Bp, Hp = hid_ref.shape
    Sp = enc_ref.shape[1]
    Vp = logp_ref.shape[1]
    S_blk = misc_ref.shape[1] - Hp - 128

    # ---- 1. embedding row gather: token ids in SMEM, table in HBM (pl.ANY) ----------
    copies = []
    for b in range(Bp):
        cp = pltpu.make_async_copy(emb_hbm.at[pl.ds(tok_ref[b], 1)],
                                   emb_scr.at[pl.ds(b, 1)],
                                   emb_sem.at[b])
        cp.start()
        copies.append(cp)

    # ---- 2. attention (independent of the embedding -> overlaps the gather DMAs) ----
    # score[b,s] = <hid[b], W@enc[b,s] + b> == <hid[b]@W, enc[b,s]> + <hid[b], b>
    hid_top = hid_ref[n_layers - 1]                                      # [Bp, Hp]
    enc = enc_ref[...]                                                   # [Bp, Sp, Hp]
    b_attn = bias_ref[:, 0:Hp]                                           # [1, Hp]
    hproj = jnp.dot(hid_top.astype(bf16), w_attn_ref[...],
                    preferred_element_type=f32)                          # [Bp, Hp]
    hb = jnp.sum(hid_top * b_attn, axis=-1, keepdims=True)               # [Bp, 1]
    # VPU multiply + reduce (avoids M=1 MXU matmul and the in-kernel transpose of enc)
    scores = jnp.sum(hproj[:, None, :] * enc, axis=-1) + hb              # [Bp, Sp]
    if Sp > S:
        smask = jax.lax.broadcasted_iota(jnp.int32, (1, Sp), 1) < S
        scores = jnp.where(smask, scores, -1e30)
    m = jnp.max(scores, axis=-1, keepdims=True)
    e = jnp.exp(scores - m)
    aw = e / jnp.sum(e, axis=-1, keepdims=True)                          # exact softmax
    ctx = jnp.sum(aw[:, :, None] * enc, axis=1)                          # [Bp, Hp]

    # ---- 3. finish the embedding gather ----------------------------------------------
    for cp in copies:
        cp.wait()
    emb = emb_scr[...]                                                   # [Bp, Hp] f32

    # ---- 4. GRU stack: fused-gate matmuls, lane-aligned gate slices ------------------
    x = jnp.concatenate([emb, ctx], axis=1)                              # [Bp, 2Hp]
    row = 0
    for layer in range(n_layers):
        in_rows = 2 * Hp if layer == 0 else Hp
        wx = w_gru_ref[row:row + in_rows, :]                             # bf16 [in, 3Hp]
        row += in_rows
        wh = w_gru_ref[row:row + Hp, :]                                  # bf16 [Hp, 3Hp]
        row += Hp
        boff = Hp + 4 * Hp * layer
        b_r = bias_ref[:, boff:boff + Hp]
        b_z = bias_ref[:, boff + Hp:boff + 2 * Hp]
        b_in = bias_ref[:, boff + 2 * Hp:boff + 3 * Hp]
        b_hn = bias_ref[:, boff + 3 * Hp:boff + 4 * Hp]
        h = hid_ref[layer]                                               # [Bp, Hp] f32
        gx = jnp.dot(x.astype(bf16), wx, preferred_element_type=f32)     # [Bp, 3Hp]
        gh = jnp.dot(h.astype(bf16), wh, preferred_element_type=f32)     # [Bp, 3Hp]
        r = jax.nn.sigmoid(gx[:, 0:Hp] + gh[:, 0:Hp] + b_r)
        z = jax.nn.sigmoid(gx[:, Hp:2 * Hp] + gh[:, Hp:2 * Hp] + b_z)
        n = jnp.tanh(gx[:, 2 * Hp:3 * Hp] + b_in + r * (gh[:, 2 * Hp:3 * Hp] + b_hn))
        h_new = (1.0 - z) * n + z * h
        nh_ref[layer] = h_new
        x = h_new
        # TODO(synk): inter-layer GRU dropout (dropout_p=0.1) skipped — eval-mode semantics.
    gout = x                                                             # [Bp, Hp]

    # ---- 5. out-projection + pgen (folded into spare column V) + log_softmax --------
    off_pg = Hp + 4 * Hp * n_layers
    off_bo = off_pg + Hp
    w_pg_e = bias_ref[:, off_pg:off_pg + Hp]                             # [1, Hp]
    b_out = bias_ref[:, off_bo:off_bo + Vp]                              # [1, Vp]

    xo = jnp.concatenate([gout, ctx], axis=1).astype(bf16)               # [Bp, 2Hp]
    logits = jnp.dot(xo, w_out_ref[...], preferred_element_type=f32) + b_out  # [Bp, Vp]
    # column V of the fused out-proj carries the pgen hid/ctx projection + b_pg
    pg_lin = logits[:, V:V + 1] + jnp.sum(emb * w_pg_e, axis=-1, keepdims=True)

    col = jax.lax.broadcasted_iota(jnp.int32, (1, Vp), 1)
    logits = jnp.where(col < V, logits, -1e30)                           # mask pad cols
    mx = jnp.max(logits, axis=-1, keepdims=True)
    lse = jnp.log(jnp.sum(jnp.exp(logits - mx), axis=-1, keepdims=True)) + mx
    logp_ref[...] = (logits - lse) + _log_sigmoid(pg_lin)                # lane-dense

    # ---- 6. pack small outputs into one lane-dense slab ------------------------------
    pgen = jax.nn.sigmoid(pg_lin)                                        # [Bp, 1]
    aw_blk = _pad_lanes(aw, S_blk)
    pg_blk = _pad_lanes(pgen, 128)
    misc_ref[...] = jnp.concatenate([ctx, aw_blk, pg_blk], axis=1)       # [Bp, Hp+S_blk+128]


# ---------------------------------------------------------------------------
# Forward wrapper: pad batch/H/V, one fused pallas_call, slice outputs.
# ---------------------------------------------------------------------------
def attn_decoder_forward(packed, tokens, hidden, encoder_outputs):
    f32 = jnp.float32
    B = tokens.shape[0]
    n_layers, _, H = hidden.shape
    S = encoder_outputs.shape[1]
    V = packed["emb"].shape[0]
    Hp = packed["w_attn"].shape[0]
    Vp = packed["w_out"].shape[1]
    Bp = _round_up(max(B, 8), 8)          # >= 8 sublanes
    Sp = _round_up(S, 8)
    S_blk = _round_up(max(S, 1), 128)

    tok_p = jnp.zeros((Bp,), jnp.int32).at[:B].set(tokens.astype(jnp.int32))
    hid_p = jnp.zeros((n_layers, Bp, Hp), f32).at[:, :B, :H].set(hidden.astype(f32))
    enc_p = jnp.zeros((Bp, Sp, Hp), f32).at[:B, :S, :H].set(encoder_outputs.astype(f32))

    kernel = functools.partial(fused_decoder_kernel, V=V, S=S)

    out_shapes = (jax.ShapeDtypeStruct((Bp, Vp), f32),                    # log_probs (padded)
                  jax.ShapeDtypeStruct((n_layers, Bp, Hp), f32),          # new hidden (padded)
                  jax.ShapeDtypeStruct((Bp, Hp + S_blk + 128), f32))      # ctx | aw | pgen slab

    vmem = lambda: pl.BlockSpec(memory_space=pltpu.MemorySpace.VMEM)
    smem = lambda: pl.BlockSpec(memory_space=pltpu.MemorySpace.SMEM)
    hbm = lambda: pl.BlockSpec(memory_space=pl.ANY)

    logp_p, nh_p, misc = pl.pallas_call(
        kernel,
        out_shape=out_shapes,
        in_specs=[smem(),               # token ids
                  hbm(),                # embedding table stays in HBM (row gather)
                  vmem(),               # hidden
                  vmem(),               # encoder_outputs
                  vmem(),               # w_attn (bf16)
                  vmem(),               # fused GRU weight slab (bf16)
                  vmem(),               # fused out-proj (+pgen) weight slab (bf16)
                  vmem()],              # packed bias slab (f32)
        out_specs=(vmem(), vmem(), vmem()),
        scratch_shapes=[pltpu.VMEM((Bp, Hp), f32),
                        pltpu.SemaphoreType.DMA((Bp,))],
        compiler_params=pltpu.CompilerParams(vmem_limit_bytes=32 * 1024 * 1024),
    )(tok_p, packed["emb"], hid_p, enc_p,
      packed["w_attn"], packed["w_gru"], packed["w_out"], packed["bias"])

    log_probs = logp_p[:B, :V]
    nh = nh_p[:, :B, :H]
    ctx = misc[:B, :H]
    attn_weights = misc[:B, Hp:Hp + S].reshape(B, 1, S)
    pgen = misc[:B, Hp + S_blk:Hp + S_blk + 1]
    return log_probs, nh, ctx, attn_weights, pgen


# ---------------------------------------------------------------------------
# Parameter construction (natural layout) + packing into padded/fused slabs.
# ---------------------------------------------------------------------------
def init_params(key, hidden_size, output_size, n_layers):
    H, V = hidden_size, output_size
    keys = iter(jax.random.split(key, 128))

    def unif(shape, bound):
        return jax.random.uniform(next(keys), shape, jnp.float32, -bound, bound)

    p = {}
    p["emb"] = jax.random.normal(next(keys), (V, H), jnp.float32)      # nn.Embedding(V, H)

    b = 1.0 / (H ** 0.5)
    p["w_attn"] = unif((H, H), b)      # stored so hproj = hid @ w_attn
    p["b_attn"] = unif((1, H), b)

    p["gru"] = []
    for layer in range(n_layers):
        in_dim = 2 * H if layer == 0 else H
        p["gru"].append(dict(
            wx_r=unif((in_dim, H), b), wx_z=unif((in_dim, H), b), wx_n=unif((in_dim, H), b),
            wh_r=unif((H, H), b), wh_z=unif((H, H), b), wh_n=unif((H, H), b),
            b_r=unif((1, H), b),       # b_ir + b_hr folded
            b_z=unif((1, H), b),       # b_iz + b_hz folded
            b_in=unif((1, H), b),
            b_hn=unif((1, H), b),
        ))

    b_out = 1.0 / ((2 * H) ** 0.5)
    p["w_out_h"] = unif((H, V), b_out)        # out Linear(2H, V), split halves, [in, out]
    p["w_out_c"] = unif((H, V), b_out)
    p["b_out"] = unif((1, V), b_out)

    b_pg = 1.0 / ((3 * H) ** 0.5)
    p["w_pg_e"] = unif((1, H), b_pg)          # pgen Linear(3H, 1), split rows
    p["w_pg_h"] = unif((1, H), b_pg)
    p["w_pg_c"] = unif((1, H), b_pg)
    p["b_pg"] = unif((1, 1), b_pg)
    return p


def pack_params(p, hidden_size, output_size, n_layers):
    """Pack params into the padded, fused, lane-aligned slabs the kernel expects."""
    H, V = hidden_size, output_size
    Hp = _round_up(H, 128)
    Vp = _round_up(V + 1, 128)        # +1 spare column carries the folded pgen projection
    f32, bf16 = jnp.float32, jnp.bfloat16

    # embedding table: [V, Hp] f32, stays in HBM and is row-gathered in-kernel
    emb = jnp.zeros((V, Hp), f32).at[:, :H].set(p["emb"])

    w_attn = jnp.zeros((Hp, Hp), f32).at[:H, :H].set(p["w_attn"]).astype(bf16)

    # GRU slab: [2Hp + Hp] rows for layer 0, [Hp + Hp] per later layer; cols = 3*Hp (gates r,z,n)
    n_rows = 3 * Hp + (n_layers - 1) * 2 * Hp
    w_gru = jnp.zeros((n_rows, 3 * Hp), f32)
    row = 0
    for layer, lp in enumerate(p["gru"]):
        if layer == 0:
            for g, name in enumerate(["wx_r", "wx_z", "wx_n"]):
                w = lp[name]                                   # [2H, H]
                w_gru = w_gru.at[row:row + H, g * Hp:g * Hp + H].set(w[:H])        # emb part
                w_gru = w_gru.at[row + Hp:row + Hp + H, g * Hp:g * Hp + H].set(w[H:])  # ctx part
            row += 2 * Hp
        else:
            for g, name in enumerate(["wx_r", "wx_z", "wx_n"]):
                w_gru = w_gru.at[row:row + H, g * Hp:g * Hp + H].set(lp[name])
            row += Hp
        for g, name in enumerate(["wh_r", "wh_z", "wh_n"]):
            w_gru = w_gru.at[row:row + H, g * Hp:g * Hp + H].set(lp[name])
        row += Hp
    w_gru = w_gru.astype(bf16)

    # out-projection slab [2Hp, Vp]; spare column V carries the pgen hid/ctx projection
    w_out = jnp.zeros((2 * Hp, Vp), f32)
    w_out = w_out.at[0:H, 0:V].set(p["w_out_h"])
    w_out = w_out.at[Hp:Hp + H, 0:V].set(p["w_out_c"])
    w_out = w_out.at[0:H, V].set(p["w_pg_h"][0])
    w_out = w_out.at[Hp:Hp + H, V].set(p["w_pg_c"][0])
    w_out = w_out.astype(bf16)

    # packed bias slab: [b_attn | per-layer (b_r,b_z,b_in,b_hn) | w_pg_e | b_out(+b_pg)]
    nb = Hp * (2 + 4 * n_layers) + Vp
    bias = jnp.zeros((1, nb), f32)
    bias = bias.at[0, 0:H].set(p["b_attn"][0])
    off = Hp
    for lp in p["gru"]:
        bias = bias.at[0, off:off + H].set(lp["b_r"][0])
        bias = bias.at[0, off + Hp:off + Hp + H].set(lp["b_z"][0])
        bias = bias.at[0, off + 2 * Hp:off + 2 * Hp + H].set(lp["b_in"][0])
        bias = bias.at[0, off + 3 * Hp:off + 3 * Hp + H].set(lp["b_hn"][0])
        off += 4 * Hp
    bias = bias.at[0, off:off + H].set(p["w_pg_e"][0])
    off += Hp
    bias = bias.at[0, off:off + V].set(p["b_out"][0])
    bias = bias.at[0, off + V].set(p["b_pg"][0, 0])

    return {"emb": emb, "w_attn": w_attn, "w_gru": w_gru, "w_out": w_out, "bias": bias}


if __name__ == "__main__":
    H = 32          # hidden_size
    V = 64          # output_size (vocab)
    n_layers = 2    # LAYER_DEPTH
    B = 2           # batch
    S = 8           # encoder seq_len

    root = jax.random.PRNGKey(0)
    k_par, k_tok, k_hid, k_enc = jax.random.split(root, 4)

    params = init_params(k_par, H, V, n_layers)
    packed = pack_params(params, H, V, n_layers)
    tokens = jax.random.randint(k_tok, (B,), 0, V, dtype=jnp.int32)
    hidden = 0.1 * jax.random.normal(k_hid, (n_layers, B, H), jnp.float32)
    encoder_outputs = jax.random.normal(k_enc, (B, S, H), jnp.float32)

    fwd = jax.jit(attn_decoder_forward)
    outs = fwd(packed, tokens, hidden, encoder_outputs)
    jax.block_until_ready(outs)

    log_probs, nh, ctx, attn_weights, pgen = outs
    assert log_probs.shape == (B, V)
    assert nh.shape == (n_layers, B, H)
    assert ctx.shape == (B, H)
    assert attn_weights.shape == (B, 1, S)
    assert pgen.shape == (B, 1)
    assert bool(jnp.all(jnp.isfinite(log_probs)))
    assert bool(jnp.all(jnp.isfinite(nh)))
    # internal consistency: attention weights sum to 1 (exact softmax), and
    # exp(logsumexp(log_probs)) == pgen  (since log_probs = log_softmax + log(pgen))
    assert bool(jnp.all(jnp.abs(jnp.sum(attn_weights, axis=-1) - 1.0) < 1e-4))
    assert bool(jnp.all(jnp.abs(jnp.exp(jax.nn.logsumexp(log_probs, axis=-1)) - pgen[:, 0]) < 1e-3))
    print("KERNEL_OK")
</pallas_src>

<mosaic_0001>
module attributes {stable_mosaic.version = 11 : i64} {
  func.func @fused_decoder_kernel(%arg0: memref<8xi32, #tpu.memory_space<smem>>, %arg1: memref<64x128xf32, #tpu.memory_space<any>>, %arg2: memref<2x8x128xf32, #tpu.memory_space<vmem>>, %arg3: memref<8x8x128xf32, #tpu.memory_space<vmem>>, %arg4: memref<128x128xbf16, #tpu.memory_space<vmem>>, %arg5: memref<640x384xbf16, #tpu.memory_space<vmem>>, %arg6: memref<256x128xbf16, #tpu.memory_space<vmem>>, %arg7: memref<1x1408xf32, #tpu.memory_space<vmem>>, %arg8: memref<8x128xf32, #tpu.memory_space<vmem>>, %arg9: memref<2x8x128xf32, #tpu.memory_space<vmem>>, %arg10: memref<8x384xf32, #tpu.memory_space<vmem>>, %arg11: memref<8x128xf32, #tpu.memory_space<vmem>>, %arg12: memref<8x!tpu.dma_semaphore, #tpu.memory_space<semaphore_mem>>) attributes {dimension_semantics = [], scalar_prefetch = 0 : i64, scratch_operands = 2 : i64, tpu.core_type = #tpu.core_type<tc>} {
    %c0 = arith.constant 0 : index
    %0 = memref.load %arg0[%c0] : memref<8xi32, #tpu.memory_space<smem>>
    %c0_i32 = arith.constant 0 : i32
    %c0_i32_0 = arith.constant 0 : i32
    %1 = tpu.memref_slice %arg1[%0, %c0_i32_0] : memref<64x128xf32, #tpu.memory_space<any>> -> memref<1x128xf32, #tpu.memory_space<any>>
    %c0_i32_1 = arith.constant 0 : i32
    %c0_i32_2 = arith.constant 0 : i32
    %2 = tpu.memref_slice %arg11[%c0_i32_1, %c0_i32_2] : memref<8x128xf32, #tpu.memory_space<vmem>> -> memref<1x128xf32, #tpu.memory_space<vmem>>
    %3 = tpu.memref_slice %arg12[%c0_i32] : memref<8x!tpu.dma_semaphore, #tpu.memory_space<semaphore_mem>> -> memref<1x!tpu.dma_semaphore, #tpu.memory_space<semaphore_mem>>
    %4 = tpu.memref_squeeze %3 : memref<1x!tpu.dma_semaphore, #tpu.memory_space<semaphore_mem>> -> memref<!tpu.dma_semaphore, #tpu.memory_space<semaphore_mem>>
    tpu.enqueue_dma source(%1 : memref<1x128xf32, #tpu.memory_space<any>>) target(%2 : memref<1x128xf32, #tpu.memory_space<vmem>>) target_semaphore(%4 : memref<!tpu.dma_semaphore, #tpu.memory_space<semaphore_mem>>)
    %c1 = arith.constant 1 : index
    %5 = memref.load %arg0[%c1] : memref<8xi32, #tpu.memory_space<smem>>
    %c1_i32 = arith.constant 1 : i32
    %c0_i32_3 = arith.constant 0 : i32
    %6 = tpu.memref_slice %arg1[%5, %c0_i32_3] : memref<64x128xf32, #tpu.memory_space<any>> -> memref<1x128xf32, #tpu.memory_space<any>>
    %c1_i32_4 = arith.constant 1 : i32
    %c0_i32_5 = arith.constant 0 : i32
    %7 = tpu.memref_slice %arg11[%c1_i32_4, %c0_i32_5] : memref<8x128xf32, #tpu.memory_space<vmem>> -> memref<1x128xf32, #tpu.memory_space<vmem>>
    %8 = tpu.memref_slice %arg12[%c1_i32] : memref<8x!tpu.dma_semaphore, #tpu.memory_space<semaphore_mem>> -> memref<1x!tpu.dma_semaphore, #tpu.memory_space<semaphore_mem>>
    %9 = tpu.memref_squeeze %8 : memref<1x!tpu.dma_semaphore, #tpu.memory_space<semaphore_mem>> -> memref<!tpu.dma_semaphore, #tpu.memory_space<semaphore_mem>>
    tpu.enqueue_dma source(%6 : memref<1x128xf32, #tpu.memory_space<any>>) target(%7 : memref<1x128xf32, #tpu.memory_space<vmem>>) target_semaphore(%9 : memref<!tpu.dma_semaphore, #tpu.memory_space<semaphore_mem>>)
    %c2 = arith.constant 2 : index
    %10 = memref.load %arg0[%c2] : memref<8xi32, #tpu.memory_space<smem>>
    %c2_i32 = arith.constant 2 : i32
    %c0_i32_6 = arith.constant 0 : i32
    %11 = tpu.memref_slice %arg1[%10, %c0_i32_6] : memref<64x128xf32, #tpu.memory_space<any>> -> memref<1x128xf32, #tpu.memory_space<any>>
    %c2_i32_7 = arith.constant 2 : i32
    %c0_i32_8 = arith.constant 0 : i32
    %12 = tpu.memref_slice %arg11[%c2_i32_7, %c0_i32_8] : memref<8x128xf32, #tpu.memory_space<vmem>> -> memref<1x128xf32, #tpu.memory_space<vmem>>
    %13 = tpu.memref_slice %arg12[%c2_i32] : memref<8x!tpu.dma_semaphore, #tpu.memory_space<semaphore_mem>> -> memref<1x!tpu.dma_semaphore, #tpu.memory_space<semaphore_mem>>
    %14 = tpu.memref_squeeze %13 : memref<1x!tpu.dma_semaphore, #tpu.memory_space<semaphore_mem>> -> memref<!tpu.dma_semaphore, #tpu.memory_space<semaphore_mem>>
    tpu.enqueue_dma source(%11 : memref<1x128xf32, #tpu.memory_space<any>>) target(%12 : memref<1x128xf32, #tpu.memory_space<vmem>>) target_semaphore(%14 : memref<!tpu.dma_semaphore, #tpu.memory_space<semaphore_mem>>)
    %c3 = arith.constant 3 : index
    %15 = memref.load %arg0[%c3] : memref<8xi32, #tpu.memory_space<smem>>
    %c3_i32 = arith.constant 3 : i32
    %c0_i32_9 = arith.constant 0 : i32
    %16 = tpu.memref_slice %arg1[%15, %c0_i32_9] : memref<64x128xf32, #tpu.memory_space<any>> -> memref<1x128xf32, #tpu.memory_space<any>>
    %c3_i32_10 = arith.constant 3 : i32
    %c0_i32_11 = arith.constant 0 : i32
    %17 = tpu.memref_slice %arg11[%c3_i32_10, %c0_i32_11] : memref<8x128xf32, #tpu.memory_space<vmem>> -> memref<1x128xf32, #tpu.memory_space<vmem>>
    %18 = tpu.memref_slice %arg12[%c3_i32] : memref<8x!tpu.dma_semaphore, #tpu.memory_space<semaphore_mem>> -> memref<1x!tpu.dma_semaphore, #tpu.memory_space<semaphore_mem>>
    %19 = tpu.memref_squeeze %18 : memref<1x!tpu.dma_semaphore, #tpu.memory_space<semaphore_mem>> -> memref<!tpu.dma_semaphore, #tpu.memory_space<semaphore_mem>>
    tpu.enqueue_dma source(%16 : memref<1x128xf32, #tpu.memory_space<any>>) target(%17 : memref<1x128xf32, #tpu.memory_space<vmem>>) target_semaphore(%19 : memref<!tpu.dma_semaphore, #tpu.memory_space<semaphore_mem>>)
    %c4 = arith.constant 4 : index
    %20 = memref.load %arg0[%c4] : memref<8xi32, #tpu.memory_space<smem>>
    %c4_i32 = arith.constant 4 : i32
    %c0_i32_12 = arith.constant 0 : i32
    %21 = tpu.memref_slice %arg1[%20, %c0_i32_12] : memref<64x128xf32, #tpu.memory_space<any>> -> memref<1x128xf32, #tpu.memory_space<any>>
    %c4_i32_13 = arith.constant 4 : i32
    %c0_i32_14 = arith.constant 0 : i32
    %22 = tpu.memref_slice %arg11[%c4_i32_13, %c0_i32_14] : memref<8x128xf32, #tpu.memory_space<vmem>> -> memref<1x128xf32, #tpu.memory_space<vmem>>
    %23 = tpu.memref_slice %arg12[%c4_i32] : memref<8x!tpu.dma_semaphore, #tpu.memory_space<semaphore_mem>> -> memref<1x!tpu.dma_semaphore, #tpu.memory_space<semaphore_mem>>
    %24 = tpu.memref_squeeze %23 : memref<1x!tpu.dma_semaphore, #tpu.memory_space<semaphore_mem>> -> memref<!tpu.dma_semaphore, #tpu.memory_space<semaphore_mem>>
    tpu.enqueue_dma source(%21 : memref<1x128xf32, #tpu.memory_space<any>>) target(%22 : memref<1x128xf32, #tpu.memory_space<vmem>>) target_semaphore(%24 : memref<!tpu.dma_semaphore, #tpu.memory_space<semaphore_mem>>)
    %c5 = arith.constant 5 : index
    %25 = memref.load %arg0[%c5] : memref<8xi32, #tpu.memory_space<smem>>
    %c5_i32 = arith.constant 5 : i32
    %c0_i32_15 = arith.constant 0 : i32
    %26 = tpu.memref_slice %arg1[%25, %c0_i32_15] : memref<64x128xf32, #tpu.memory_space<any>> -> memref<1x128xf32, #tpu.memory_space<any>>
    %c5_i32_16 = arith.constant 5 : i32
    %c0_i32_17 = arith.constant 0 : i32
    %27 = tpu.memref_slice %arg11[%c5_i32_16, %c0_i32_17] : memref<8x128xf32, #tpu.memory_space<vmem>> -> memref<1x128xf32, #tpu.memory_space<vmem>>
    %28 = tpu.memref_slice %arg12[%c5_i32] : memref<8x!tpu.dma_semaphore, #tpu.memory_space<semaphore_mem>> -> memref<1x!tpu.dma_semaphore, #tpu.memory_space<semaphore_mem>>
    %29 = tpu.memref_squeeze %28 : memref<1x!tpu.dma_semaphore, #tpu.memory_space<semaphore_mem>> -> memref<!tpu.dma_semaphore, #tpu.memory_space<semaphore_mem>>
    tpu.enqueue_dma source(%26 : memref<1x128xf32, #tpu.memory_space<any>>) target(%27 : memref<1x128xf32, #tpu.memory_space<vmem>>) target_semaphore(%29 : memref<!tpu.dma_semaphore, #tpu.memory_space<semaphore_mem>>)
    %c6 = arith.constant 6 : index
    %30 = memref.load %arg0[%c6] : memref<8xi32, #tpu.memory_space<smem>>
    %c6_i32 = arith.constant 6 : i32
    %c0_i32_18 = arith.constant 0 : i32
    %31 = tpu.memref_slice %arg1[%30, %c0_i32_18] : memref<64x128xf32, #tpu.memory_space<any>> -> memref<1x128xf32, #tpu.memory_space<any>>
    %c6_i32_19 = arith.constant 6 : i32
    %c0_i32_20 = arith.constant 0 : i32
    %32 = tpu.memref_slice %arg11[%c6_i32_19, %c0_i32_20] : memref<8x128xf32, #tpu.memory_space<vmem>> -> memref<1x128xf32, #tpu.memory_space<vmem>>
    %33 = tpu.memref_slice %arg12[%c6_i32] : memref<8x!tpu.dma_semaphore, #tpu.memory_space<semaphore_mem>> -> memref<1x!tpu.dma_semaphore, #tpu.memory_space<semaphore_mem>>
    %34 = tpu.memref_squeeze %33 : memref<1x!tpu.dma_semaphore, #tpu.memory_space<semaphore_mem>> -> memref<!tpu.dma_semaphore, #tpu.memory_space<semaphore_mem>>
    tpu.enqueue_dma source(%31 : memref<1x128xf32, #tpu.memory_space<any>>) target(%32 : memref<1x128xf32, #tpu.memory_space<vmem>>) target_semaphore(%34 : memref<!tpu.dma_semaphore, #tpu.memory_space<semaphore_mem>>)
    %c7 = arith.constant 7 : index
    %35 = memref.load %arg0[%c7] : memref<8xi32, #tpu.memory_space<smem>>
    %c7_i32 = arith.constant 7 : i32
    %c0_i32_21 = arith.constant 0 : i32
    %36 = tpu.memref_slice %arg1[%35, %c0_i32_21] : memref<64x128xf32, #tpu.memory_space<any>> -> memref<1x128xf32, #tpu.memory_space<any>>
    %c7_i32_22 = arith.constant 7 : i32
    %c0_i32_23 = arith.constant 0 : i32
    %37 = tpu.memref_slice %arg11[%c7_i32_22, %c0_i32_23] : memref<8x128xf32, #tpu.memory_space<vmem>> -> memref<1x128xf32, #tpu.memory_space<vmem>>
    %38 = tpu.memref_slice %arg12[%c7_i32] : memref<8x!tpu.dma_semaphore, #tpu.memory_space<semaphore_mem>> -> memref<1x!tpu.dma_semaphore, #tpu.memory_space<semaphore_mem>>
    %39 = tpu.memref_squeeze %38 : memref<1x!tpu.dma_semaphore, #tpu.memory_space<semaphore_mem>> -> memref<!tpu.dma_semaphore, #tpu.memory_space<semaphore_mem>>
    tpu.enqueue_dma source(%36 : memref<1x128xf32, #tpu.memory_space<any>>) target(%37 : memref<1x128xf32, #tpu.memory_space<vmem>>) target_semaphore(%39 : memref<!tpu.dma_semaphore, #tpu.memory_space<semaphore_mem>>)
    %c1_24 = arith.constant 1 : index
    %c0_25 = arith.constant 0 : index
    %c0_26 = arith.constant 0 : index
    %40 = vector.load %arg2[%c1_24, %c0_25, %c0_26] : memref<2x8x128xf32, #tpu.memory_space<vmem>>, vector<1x8x128xf32>
    %41 = vector.shape_cast %40 : vector<1x8x128xf32> to vector<8x128xf32>
    %c0_27 = arith.constant 0 : index
    %c0_28 = arith.constant 0 : index
    %c0_29 = arith.constant 0 : index
    %42 = vector.load %arg3[%c0_27, %c0_28, %c0_29] : memref<8x8x128xf32, #tpu.memory_space<vmem>>, vector<8x8x128xf32>
    %c0_30 = arith.constant 0 : index
    %c0_31 = arith.constant 0 : index
    %43 = vector.load %arg7[%c0_30, %c0_31] : memref<1x1408xf32, #tpu.memory_space<vmem>>, vector<1x128xf32>
    %44 = arith.truncf %41 : vector<8x128xf32> to vector<8x128xbf16>
    %c0_32 = arith.constant 0 : index
    %c0_33 = arith.constant 0 : index
    %45 = vector.load %arg4[%c0_32, %c0_33] : memref<128x128xbf16, #tpu.memory_space<vmem>>, vector<128x128xbf16>
    %cst = arith.constant dense<0.000000e+00> : vector<8x128xf32>
    %46 = tpu.matmul %44, %45, %cst {dimension_numbers = #tpu.dot_dimension_numbers<[1], [0], [0], [1], [0, 0, 1, 1], [], []>} : vector<8x128xbf16>, vector<128x128xbf16>, vector<8x128xf32> -> vector<8x128xf32>
    %47 = vector.broadcast %43 : vector<1x128xf32> to vector<8x128xf32>
    %48 = arith.mulf %41, %47 : vector<8x128xf32>
    %cst_34 = arith.constant dense<0.000000e+00> : vector<8xf32>
    %49 = vector.multi_reduction <add>, %48, %cst_34 [1] : vector<8x128xf32> to vector<8xf32>
    %50 = vector.shape_cast %49 : vector<8xf32> to vector<8x1xf32>
    %51 = vector.shape_cast %46 : vector<8x128xf32> to vector<8x1x128xf32>
    %52 = vector.broadcast %51 : vector<8x1x128xf32> to vector<8x8x128xf32>
    %53 = arith.mulf %52, %42 : vector<8x8x128xf32>
    %cst_35 = arith.constant dense<0.000000e+00> : vector<8x8xf32>
    %54 = vector.multi_reduction <add>, %53, %cst_35 [2] : vector<8x8x128xf32> to vector<8x8xf32>
    %55 = vector.broadcast %50 : vector<8x1xf32> to vector<8x8xf32>
    %56 = arith.addf %54, %55 : vector<8x8xf32>
    %cst_36 = arith.constant dense<0xFF800000> : vector<8xf32>
    %57 = vector.multi_reduction <maximumf>, %56, %cst_36 [1] : vector<8x8xf32> to vector<8xf32>
    %58 = vector.shape_cast %57 : vector<8xf32> to vector<8x1xf32>
    %59 = vector.broadcast %58 : vector<8x1xf32> to vector<8x8xf32>
    %60 = arith.subf %56, %59 : vector<8x8xf32>
    %61 = math.exp %60 : vector<8x8xf32>
    %cst_37 = arith.constant dense<0.000000e+00> : vector<8xf32>
    %62 = vector.multi_reduction <add>, %61, %cst_37 [1] : vector<8x8xf32> to vector<8xf32>
    %63 = vector.shape_cast %62 : vector<8xf32> to vector<8x1xf32>
    %64 = vector.broadcast %63 : vector<8x1xf32> to vector<8x8xf32>
    %65 = arith.divf %61, %64 : vector<8x8xf32>
    %66 = vector.shape_cast %65 : vector<8x8xf32> to vector<8x8x1xf32>
    %67 = vector.broadcast %66 : vector<8x8x1xf32> to vector<8x8x128xf32>
    %68 = arith.mulf %67, %42 : vector<8x8x128xf32>
    %cst_38 = arith.constant dense<0.000000e+00> : vector<8x128xf32>
    %69 = vector.multi_reduction <add>, %68, %cst_38 [1] : vector<8x8x128xf32> to vector<8x128xf32>
    %c0_i32_39 = arith.constant 0 : i32
    %c0_i32_40 = arith.constant 0 : i32
    %70 = tpu.memref_slice %arg1[%0, %c0_i32_40] : memref<64x128xf32, #tpu.memory_space<any>> -> memref<1x128xf32, #tpu.memory_space<any>>
    %c0_i32_41 = arith.constant 0 : i32
    %c0_i32_42 = arith.constant 0 : i32
    %71 = tpu.memref_slice %arg11[%c0_i32_41, %c0_i32_42] : memref<8x128xf32, #tpu.memory_space<vmem>> -> memref<1x128xf32, #tpu.memory_space<vmem>>
    %72 = tpu.memref_slice %arg12[%c0_i32_39] : memref<8x!tpu.dma_semaphore, #tpu.memory_space<semaphore_mem>> -> memref<1x!tpu.dma_semaphore, #tpu.memory_space<semaphore_mem>>
    %73 = tpu.memref_squeeze %72 : memref<1x!tpu.dma_semaphore, #tpu.memory_space<semaphore_mem>> -> memref<!tpu.dma_semaphore, #tpu.memory_space<semaphore_mem>>
    tpu.wait_dma2 semaphore(%73 : memref<!tpu.dma_semaphore, #tpu.memory_space<semaphore_mem>>) src(%70 : memref<1x128xf32, #tpu.memory_space<any>>) dst(%71 : memref<1x128xf32, #tpu.memory_space<vmem>>)
    %c1_i32_43 = arith.constant 1 : i32
    %c0_i32_44 = arith.constant 0 : i32
    %74 = tpu.memref_slice %arg1[%5, %c0_i32_44] : memref<64x128xf32, #tpu.memory_space<any>> -> memref<1x128xf32, #tpu.memory_space<any>>
    %c1_i32_45 = arith.constant 1 : i32
    %c0_i32_46 = arith.constant 0 : i32
    %75 = tpu.memref_slice %arg11[%c1_i32_45, %c0_i32_46] : memref<8x128xf32, #tpu.memory_space<vmem>> -> memref<1x128xf32, #tpu.memory_space<vmem>>
    %76 = tpu.memref_slice %arg12[%c1_i32_43] : memref<8x!tpu.dma_semaphore, #tpu.memory_space<semaphore_mem>> -> memref<1x!tpu.dma_semaphore, #tpu.memory_space<semaphore_mem>>
    %77 = tpu.memref_squeeze %76 : memref<1x!tpu.dma_semaphore, #tpu.memory_space<semaphore_mem>> -> memref<!tpu.dma_semaphore, #tpu.memory_space<semaphore_mem>>
    tpu.wait_dma2 semaphore(%77 : memref<!tpu.dma_semaphore, #tpu.memory_space<semaphore_mem>>) src(%74 : memref<1x128xf32, #tpu.memory_space<any>>) dst(%75 : memref<1x128xf32, #tpu.memory_space<vmem>>)
    %c2_i32_47 = arith.constant 2 : i32
    %c0_i32_48 = arith.constant 0 : i32
    %78 = tpu.memref_slice %arg1[%10, %c0_i32_48] : memref<64x128xf32, #tpu.memory_space<any>> -> memref<1x128xf32, #tpu.memory_space<any>>
    %c2_i32_49 = arith.constant 2 : i32
    %c0_i32_50 = arith.constant 0 : i32
    %79 = tpu.memref_slice %arg11[%c2_i32_49, %c0_i32_50] : memref<8x128xf32, #tpu.memory_space<vmem>> -> memref<1x128xf32, #tpu.memory_space<vmem>>
    %80 = tpu.memref_slice %arg12[%c2_i32_47] : memref<8x!tpu.dma_semaphore, #tpu.memory_space<semaphore_mem>> -> memref<1x!tpu.dma_semaphore, #tpu.memory_space<semaphore_mem>>
    %81 = tpu.memref_squeeze %80 : memref<1x!tpu.dma_semaphore, #tpu.memory_space<semaphore_mem>> -> memref<!tpu.dma_semaphore, #tpu.memory_space<semaphore_mem>>
    tpu.wait_dma2 semaphore(%81 : memref<!tpu.dma_semaphore, #tpu.memory_space<semaphore_mem>>) src(%78 : memref<1x128xf32, #tpu.memory_space<any>>) dst(%79 : memref<1x128xf32, #tpu.memory_space<vmem>>)
    %c3_i32_51 = arith.constant 3 : i32
    %c0_i32_52 = arith.constant 0 : i32
    %82 = tpu.memref_slice %arg1[%15, %c0_i32_52] : memref<64x128xf32, #tpu.memory_space<any>> -> memref<1x128xf32, #tpu.memory_space<any>>
    %c3_i32_53 = arith.constant 3 : i32
    %c0_i32_54 = arith.constant 0 : i32
    %83 = tpu.memref_slice %arg11[%c3_i32_53, %c0_i32_54] : memref<8x128xf32, #tpu.memory_space<vmem>> -> memref<1x128xf32, #tpu.memory_space<vmem>>
    %84 = tpu.memref_slice %arg12[%c3_i32_51] : memref<8x!tpu.dma_semaphore, #tpu.memory_space<semaphore_mem>> -> memref<1x!tpu.dma_semaphore, #tpu.memory_space<semaphore_mem>>
    %85 = tpu.memref_squeeze %84 : memref<1x!tpu.dma_semaphore, #tpu.memory_space<semaphore_mem>> -> memref<!tpu.dma_semaphore, #tpu.memory_space<semaphore_mem>>
    tpu.wait_dma2 semaphore(%85 : memref<!tpu.dma_semaphore, #tpu.memory_space<semaphore_mem>>) src(%82 : memref<1x128xf32, #tpu.memory_space<any>>) dst(%83 : memref<1x128xf32, #tpu.memory_space<vmem>>)
    %c4_i32_55 = arith.constant 4 : i32
    %c0_i32_56 = arith.constant 0 : i32
    %86 = tpu.memref_slice %arg1[%20, %c0_i32_56] : memref<64x128xf32, #tpu.memory_space<any>> -> memref<1x128xf32, #tpu.memory_space<any>>
    %c4_i32_57 = arith.constant 4 : i32
    %c0_i32_58 = arith.constant 0 : i32
    %87 = tpu.memref_slice %arg11[%c4_i32_57, %c0_i32_58] : memref<8x128xf32, #tpu.memory_space<vmem>> -> memref<1x128xf32, #tpu.memory_space<vmem>>
    %88 = tpu.memref_slice %arg12[%c4_i32_55] : memref<8x!tpu.dma_semaphore, #tpu.memory_space<semaphore_mem>> -> memref<1x!tpu.dma_semaphore, #tpu.memory_space<semaphore_mem>>
    %89 = tpu.memref_squeeze %88 : memref<1x!tpu.dma_semaphore, #tpu.memory_space<semaphore_mem>> -> memref<!tpu.dma_semaphore, #tpu.memory_space<semaphore_mem>>
    tpu.wait_dma2 semaphore(%89 : memref<!tpu.dma_semaphore, #tpu.memory_space<semaphore_mem>>) src(%86 : memref<1x128xf32, #tpu.memory_space<any>>) dst(%87 : memref<1x128xf32, #tpu.memory_space<vmem>>)
    %c5_i32_59 = arith.constant 5 : i32
    %c0_i32_60 = arith.constant 0 : i32
    %90 = tpu.memref_slice %arg1[%25, %c0_i32_60] : memref<64x128xf32, #tpu.memory_space<any>> -> memref<1x128xf32, #tpu.memory_space<any>>
    %c5_i32_61 = arith.constant 5 : i32
    %c0_i32_62 = arith.constant 0 : i32
    %91 = tpu.memref_slice %arg11[%c5_i32_61, %c0_i32_62] : memref<8x128xf32, #tpu.memory_space<vmem>> -> memref<1x128xf32, #tpu.memory_space<vmem>>
    %92 = tpu.memref_slice %arg12[%c5_i32_59] : memref<8x!tpu.dma_semaphore, #tpu.memory_space<semaphore_mem>> -> memref<1x!tpu.dma_semaphore, #tpu.memory_space<semaphore_mem>>
    %93 = tpu.memref_squeeze %92 : memref<1x!tpu.dma_semaphore, #tpu.memory_space<semaphore_mem>> -> memref<!tpu.dma_semaphore, #tpu.memory_space<semaphore_mem>>
    tpu.wait_dma2 semaphore(%93 : memref<!tpu.dma_semaphore, #tpu.memory_space<semaphore_mem>>) src(%90 : memref<1x128xf32, #tpu.memory_space<any>>) dst(%91 : memref<1x128xf32, #tpu.memory_space<vmem>>)
    %c6_i32_63 = arith.constant 6 : i32
    %c0_i32_64 = arith.constant 0 : i32
    %94 = tpu.memref_slice %arg1[%30, %c0_i32_64] : memref<64x128xf32, #tpu.memory_space<any>> -> memref<1x128xf32, #tpu.memory_space<any>>
    %c6_i32_65 = arith.constant 6 : i32
    %c0_i32_66 = arith.constant 0 : i32
    %95 = tpu.memref_slice %arg11[%c6_i32_65, %c0_i32_66] : memref<8x128xf32, #tpu.memory_space<vmem>> -> memref<1x128xf32, #tpu.memory_space<vmem>>
    %96 = tpu.memref_slice %arg12[%c6_i32_63] : memref<8x!tpu.dma_semaphore, #tpu.memory_space<semaphore_mem>> -> memref<1x!tpu.dma_semaphore, #tpu.memory_space<semaphore_mem>>
    %97 = tpu.memref_squeeze %96 : memref<1x!tpu.dma_semaphore, #tpu.memory_space<semaphore_mem>> -> memref<!tpu.dma_semaphore, #tpu.memory_space<semaphore_mem>>
    tpu.wait_dma2 semaphore(%97 : memref<!tpu.dma_semaphore, #tpu.memory_space<semaphore_mem>>) src(%94 : memref<1x128xf32, #tpu.memory_space<any>>) dst(%95 : memref<1x128xf32, #tpu.memory_space<vmem>>)
    %c7_i32_67 = arith.constant 7 : i32
    %c0_i32_68 = arith.constant 0 : i32
    %98 = tpu.memref_slice %arg1[%35, %c0_i32_68] : memref<64x128xf32, #tpu.memory_space<any>> -> memref<1x128xf32, #tpu.memory_space<any>>
    %c7_i32_69 = arith.constant 7 : i32
    %c0_i32_70 = arith.constant 0 : i32
    %99 = tpu.memref_slice %arg11[%c7_i32_69, %c0_i32_70] : memref<8x128xf32, #tpu.memory_space<vmem>> -> memref<1x128xf32, #tpu.memory_space<vmem>>
    %100 = tpu.memref_slice %arg12[%c7_i32_67] : memref<8x!tpu.dma_semaphore, #tpu.memory_space<semaphore_mem>> -> memref<1x!tpu.dma_semaphore, #tpu.memory_space<semaphore_mem>>
    %101 = tpu.memref_squeeze %100 : memref<1x!tpu.dma_semaphore, #tpu.memory_space<semaphore_mem>> -> memref<!tpu.dma_semaphore, #tpu.memory_space<semaphore_mem>>
    tpu.wait_dma2 semaphore(%101 : memref<!tpu.dma_semaphore, #tpu.memory_space<semaphore_mem>>) src(%98 : memref<1x128xf32, #tpu.memory_space<any>>) dst(%99 : memref<1x128xf32, #tpu.memory_space<vmem>>)
    %c0_71 = arith.constant 0 : index
    %c0_72 = arith.constant 0 : index
    %102 = vector.load %arg11[%c0_71, %c0_72] : memref<8x128xf32, #tpu.memory_space<vmem>>, vector<8x128xf32>
    %103 = tpu.concatenate %102, %69 in 1 : vector<8x128xf32>, vector<8x128xf32> -> vector<8x256xf32>
    %c0_73 = arith.constant 0 : index
    %c0_74 = arith.constant 0 : index
    %104 = vector.load %arg5[%c0_73, %c0_74] : memref<640x384xbf16, #tpu.memory_space<vmem>>, vector<256x384xbf16>
    %c256 = arith.constant 256 : index
    %c0_75 = arith.constant 0 : index
    %105 = vector.load %arg5[%c256, %c0_75] : memref<640x384xbf16, #tpu.memory_space<vmem>>, vector<128x384xbf16>
    %c0_76 = arith.constant 0 : index
    %c128 = arith.constant 128 : index
    %106 = vector.load %arg7[%c0_76, %c128] : memref<1x1408xf32, #tpu.memory_space<vmem>>, vector<1x128xf32>
    %c0_77 = arith.constant 0 : index
    %c256_78 = arith.constant 256 : index
    %107 = vector.load %arg7[%c0_77, %c256_78] : memref<1x1408xf32, #tpu.memory_space<vmem>>, vector<1x128xf32>
    %c0_79 = arith.constant 0 : index
    %c384 = arith.constant 384 : index
    %108 = vector.load %arg7[%c0_79, %c384] : memref<1x1408xf32, #tpu.memory_space<vmem>>, vector<1x128xf32>
    %c0_80 = arith.constant 0 : index
    %c512 = arith.constant 512 : index
    %109 = vector.load %arg7[%c0_80, %c512] : memref<1x1408xf32, #tpu.memory_space<vmem>>, vector<1x128xf32>
    %c0_81 = arith.constant 0 : index
    %c0_82 = arith.constant 0 : index
    %c0_83 = arith.constant 0 : index
    %110 = vector.load %arg2[%c0_81, %c0_82, %c0_83] : memref<2x8x128xf32, #tpu.memory_space<vmem>>, vector<1x8x128xf32>
    %111 = vector.shape_cast %110 : vector<1x8x128xf32> to vector<8x128xf32>
    %112 = arith.truncf %103 : vector<8x256xf32> to vector<8x256xbf16>
    %cst_84 = arith.constant dense<0.000000e+00> : vector<8x384xf32>
    %113 = tpu.matmul %112, %104, %cst_84 {dimension_numbers = #tpu.dot_dimension_numbers<[1], [0], [0], [1], [0, 0, 1, 1], [], []>} : vector<8x256xbf16>, vector<256x384xbf16>, vector<8x384xf32> -> vector<8x384xf32>
    %114 = arith.truncf %111 : vector<8x128xf32> to vector<8x128xbf16>
    %cst_85 = arith.constant dense<0.000000e+00> : vector<8x384xf32>
    %115 = tpu.matmul %114, %105, %cst_85 {dimension_numbers = #tpu.dot_dimension_numbers<[1], [0], [0], [1], [0, 0, 1, 1], [], []>} : vector<8x128xbf16>, vector<128x384xbf16>, vector<8x384xf32> -> vector<8x384xf32>
    %116 = vector.extract_strided_slice %113 {offsets = [0, 0], sizes = [8, 128], strides = [1, 1]} : vector<8x384xf32> to vector<8x128xf32>
    %117 = vector.extract_strided_slice %115 {offsets = [0, 0], sizes = [8, 128], strides = [1, 1]} : vector<8x384xf32> to vector<8x128xf32>
    %118 = arith.addf %116, %117 : vector<8x128xf32>
    %119 = vector.broadcast %106 : vector<1x128xf32> to vector<8x128xf32>
    %120 = arith.addf %118, %119 : vector<8x128xf32>
    %121 = arith.negf %120 : vector<8x128xf32>
    %122 = math.exp %121 : vector<8x128xf32>
    %cst_86 = arith.constant 1.000000e+00 : f32
    %123 = vector.broadcast %cst_86 : f32 to vector<8x128xf32>
    %124 = arith.addf %123, %122 : vector<8x128xf32>
    %125 = arith.divf %123, %124 : vector<8x128xf32>
    %126 = vector.extract_strided_slice %113 {offsets = [0, 128], sizes = [8, 128], strides = [1, 1]} : vector<8x384xf32> to vector<8x128xf32>
    %127 = vector.extract_strided_slice %115 {offsets = [0, 128], sizes = [8, 128], strides = [1, 1]} : vector<8x384xf32> to vector<8x128xf32>
    %128 = arith.addf %126, %127 : vector<8x128xf32>
    %129 = vector.broadcast %107 : vector<1x128xf32> to vector<8x128xf32>
    %130 = arith.addf %128, %129 : vector<8x128xf32>
    %131 = arith.negf %130 : vector<8x128xf32>
    %132 = math.exp %131 : vector<8x128xf32>
    %cst_87 = arith.constant 1.000000e+00 : f32
    %133 = vector.broadcast %cst_87 : f32 to vector<8x128xf32>
    %134 = arith.addf %133, %132 : vector<8x128xf32>
    %135 = arith.divf %133, %134 : vector<8x128xf32>
    %136 = vector.extract_strided_slice %113 {offsets = [0, 256], sizes = [8, 128], strides = [1, 1]} : vector<8x384xf32> to vector<8x128xf32>
    %137 = vector.broadcast %108 : vector<1x128xf32> to vector<8x128xf32>
    %138 = arith.addf %136, %137 : vector<8x128xf32>
    %139 = vector.extract_strided_slice %115 {offsets = [0, 256], sizes = [8, 128], strides = [1, 1]} : vector<8x384xf32> to vector<8x128xf32>
    %140 = vector.broadcast %109 : vector<1x128xf32> to vector<8x128xf32>
    %141 = arith.addf %139, %140 : vector<8x128xf32>
    %142 = arith.mulf %125, %141 : vector<8x128xf32>
    %143 = arith.addf %138, %142 : vector<8x128xf32>
    %144 = math.tanh %143 : vector<8x128xf32>
    %cst_88 = arith.constant 1.000000e+00 : f32
    %145 = vector.broadcast %cst_88 : f32 to vector<8x128xf32>
    %146 = arith.subf %145, %135 : vector<8x128xf32>
    %147 = arith.mulf %146, %144 : vector<8x128xf32>
    %148 = arith.mulf %135, %111 : vector<8x128xf32>
    %149 = arith.addf %147, %148 : vector<8x128xf32>
    %c0_89 = arith.constant 0 : index
    %c0_90 = arith.constant 0 : index
    %c0_91 = arith.constant 0 : index
    %150 = vector.load %arg9[%c0_89, %c0_90, %c0_91] : memref<2x8x128xf32, #tpu.memory_space<vmem>>, vector<1x8x128xf32>
    %151 = vector.shape_cast %150 : vector<1x8x128xf32> to vector<8x128xf32>
    %152 = vector.shape_cast %149 : vector<8x128xf32> to vector<1x8x128xf32>
    tpu.vector_store %arg9[%c0_89, %c0_90, %c0_91], %152 {strides = array<i32>} : memref<2x8x128xf32, #tpu.memory_space<vmem>>, vector<1x8x128xf32>,
    %c384_92 = arith.constant 384 : index
    %c0_93 = arith.constant 0 : index
    %153 = vector.load %arg5[%c384_92, %c0_93] : memref<640x384xbf16, #tpu.memory_space<vmem>>, vector<128x384xbf16>
    %c512_94 = arith.constant 512 : index
    %c0_95 = arith.constant 0 : index
    %154 = vector.load %arg5[%c512_94, %c0_95] : memref<640x384xbf16, #tpu.memory_space<vmem>>, vector<128x384xbf16>
    %c0_96 = arith.constant 0 : index
    %c640 = arith.constant 640 : index
    %155 = vector.load %arg7[%c0_96, %c640] : memref<1x1408xf32, #tpu.memory_space<vmem>>, vector<1x128xf32>
    %c0_97 = arith.constant 0 : index
    %c768 = arith.constant 768 : index
    %156 = vector.load %arg7[%c0_97, %c768] : memref<1x1408xf32, #tpu.memory_space<vmem>>, vector<1x128xf32>
    %c0_98 = arith.constant 0 : index
    %c896 = arith.constant 896 : index
    %157 = vector.load %arg7[%c0_98, %c896] : memref<1x1408xf32, #tpu.memory_space<vmem>>, vector<1x128xf32>
    %c0_99 = arith.constant 0 : index
    %c1024 = arith.constant 1024 : index
    %158 = vector.load %arg7[%c0_99, %c1024] : memref<1x1408xf32, #tpu.memory_space<vmem>>, vector<1x128xf32>
    %c1_100 = arith.constant 1 : index
    %c0_101 = arith.constant 0 : index
    %c0_102 = arith.constant 0 : index
    %159 = vector.load %arg2[%c1_100, %c0_101, %c0_102] : memref<2x8x128xf32, #tpu.memory_space<vmem>>, vector<1x8x128xf32>
    %160 = vector.shape_cast %159 : vector<1x8x128xf32> to vector<8x128xf32>
    %161 = arith.truncf %149 : vector<8x128xf32> to vector<8x128xbf16>
    %cst_103 = arith.constant dense<0.000000e+00> : vector<8x384xf32>
    %162 = tpu.matmul %161, %153, %cst_103 {dimension_numbers = #tpu.dot_dimension_numbers<[1], [0], [0], [1], [0, 0, 1, 1], [], []>} : vector<8x128xbf16>, vector<128x384xbf16>, vector<8x384xf32> -> vector<8x384xf32>
    %163 = arith.truncf %160 : vector<8x128xf32> to vector<8x128xbf16>
    %cst_104 = arith.constant dense<0.000000e+00> : vector<8x384xf32>
    %164 = tpu.matmul %163, %154, %cst_104 {dimension_numbers = #tpu.dot_dimension_numbers<[1], [0], [0], [1], [0, 0, 1, 1], [], []>} : vector<8x128xbf16>, vector<128x384xbf16>, vector<8x384xf32> -> vector<8x384xf32>
    %165 = vector.extract_strided_slice %162 {offsets = [0, 0], sizes = [8, 128], strides = [1, 1]} : vector<8x384xf32> to vector<8x128xf32>
    %166 = vector.extract_strided_slice %164 {offsets = [0, 0], sizes = [8, 128], strides = [1, 1]} : vector<8x384xf32> to vector<8x128xf32>
    %167 = arith.addf %165, %166 : vector<8x128xf32>
    %168 = vector.broadcast %155 : vector<1x128xf32> to vector<8x128xf32>
    %169 = arith.addf %167, %168 : vector<8x128xf32>
    %170 = arith.negf %169 : vector<8x128xf32>
    %171 = math.exp %170 : vector<8x128xf32>
    %cst_105 = arith.constant 1.000000e+00 : f32
    %172 = vector.broadcast %cst_105 : f32 to vector<8x128xf32>
    %173 = arith.addf %172, %171 : vector<8x128xf32>
    %174 = arith.divf %172, %173 : vector<8x128xf32>
    %175 = vector.extract_strided_slice %162 {offsets = [0, 128], sizes = [8, 128], strides = [1, 1]} : vector<8x384xf32> to vector<8x128xf32>
    %176 = vector.extract_strided_slice %164 {offsets = [0, 128], sizes = [8, 128], strides = [1, 1]} : vector<8x384xf32> to vector<8x128xf32>
    %177 = arith.addf %175, %176 : vector<8x128xf32>
    %178 = vector.broadcast %156 : vector<1x128xf32> to vector<8x128xf32>
    %179 = arith.addf %177, %178 : vector<8x128xf32>
    %180 = arith.negf %179 : vector<8x128xf32>
    %181 = math.exp %180 : vector<8x128xf32>
    %cst_106 = arith.constant 1.000000e+00 : f32
    %182 = vector.broadcast %cst_106 : f32 to vector<8x128xf32>
    %183 = arith.addf %182, %181 : vector<8x128xf32>
    %184 = arith.divf %182, %183 : vector<8x128xf32>
    %185 = vector.extract_strided_slice %162 {offsets = [0, 256], sizes = [8, 128], strides = [1, 1]} : vector<8x384xf32> to vector<8x128xf32>
    %186 = vector.broadcast %157 : vector<1x128xf32> to vector<8x128xf32>
    %187 = arith.addf %185, %186 : vector<8x128xf32>
    %188 = vector.extract_strided_slice %164 {offsets = [0, 256], sizes = [8, 128], strides = [1, 1]} : vector<8x384xf32> to vector<8x128xf32>
    %189 = vector.broadcast %158 : vector<1x128xf32> to vector<8x128xf32>
    %190 = arith.addf %188, %189 : vector<8x128xf32>
    %191 = arith.mulf %174, %190 : vector<8x128xf32>
    %192 = arith.addf %187, %191 : vector<8x128xf32>
    %193 = math.tanh %192 : vector<8x128xf32>
    %cst_107 = arith.constant 1.000000e+00 : f32
    %194 = vector.broadcast %cst_107 : f32 to vector<8x128xf32>
    %195 = arith.subf %194, %184 : vector<8x128xf32>
    %196 = arith.mulf %195, %193 : vector<8x128xf32>
    %197 = arith.mulf %184, %160 : vector<8x128xf32>
    %198 = arith.addf %196, %197 : vector<8x128xf32>
    %c1_108 = arith.constant 1 : index
    %c0_109 = arith.constant 0 : index
    %c0_110 = arith.constant 0 : index
    %199 = vector.load %arg9[%c1_108, %c0_109, %c0_110] : memref<2x8x128xf32, #tpu.memory_space<vmem>>, vector<1x8x128xf32>
    %200 = vector.shape_cast %199 : vector<1x8x128xf32> to vector<8x128xf32>
    %201 = vector.shape_cast %198 : vector<8x128xf32> to vector<1x8x128xf32>
    tpu.vector_store %arg9[%c1_108, %c0_109, %c0_110], %201 {strides = array<i32>} : memref<2x8x128xf32, #tpu.memory_space<vmem>>, vector<1x8x128xf32>,
    %c0_111 = arith.constant 0 : index
    %c1152 = arith.constant 1152 : index
    %202 = vector.load %arg7[%c0_111, %c1152] : memref<1x1408xf32, #tpu.memory_space<vmem>>, vector<1x128xf32>
    %c0_112 = arith.constant 0 : index
    %c1280 = arith.constant 1280 : index
    %203 = vector.load %arg7[%c0_112, %c1280] : memref<1x1408xf32, #tpu.memory_space<vmem>>, vector<1x128xf32>
    %204 = tpu.concatenate %198, %69 in 1 : vector<8x128xf32>, vector<8x128xf32> -> vector<8x256xf32>
    %205 = arith.truncf %204 : vector<8x256xf32> to vector<8x256xbf16>
    %c0_113 = arith.constant 0 : index
    %c0_114 = arith.constant 0 : index
    %206 = vector.load %arg6[%c0_113, %c0_114] : memref<256x128xbf16, #tpu.memory_space<vmem>>, vector<256x128xbf16>
    %cst_115 = arith.constant dense<0.000000e+00> : vector<8x128xf32>
    %207 = tpu.matmul %205, %206, %cst_115 {dimension_numbers = #tpu.dot_dimension_numbers<[1], [0], [0], [1], [0, 0, 1, 1], [], []>} : vector<8x256xbf16>, vector<256x128xbf16>, vector<8x128xf32> -> vector<8x128xf32>
    %208 = vector.broadcast %203 : vector<1x128xf32> to vector<8x128xf32>
    %209 = arith.addf %207, %208 : vector<8x128xf32>
    %210 = vector.extract_strided_slice %209 {offsets = [0, 64], sizes = [8, 1], strides = [1, 1]} : vector<8x128xf32> to vector<8x1xf32>
    %211 = vector.broadcast %202 : vector<1x128xf32> to vector<8x128xf32>
    %212 = arith.mulf %102, %211 : vector<8x128xf32>
    %cst_116 = arith.constant dense<0.000000e+00> : vector<8xf32>
    %213 = vector.multi_reduction <add>, %212, %cst_116 [1] : vector<8x128xf32> to vector<8xf32>
    %214 = vector.shape_cast %213 : vector<8xf32> to vector<8x1xf32>
    %215 = arith.addf %210, %214 : vector<8x1xf32>
    %216 = tpu.iota {dimensions = array<i32: 1>} : vector<1x128xi32>
    %c64_i32 = arith.constant 64 : i32
    %217 = vector.broadcast %c64_i32 : i32 to vector<1x128xi32>
    %218 = arith.cmpi slt, %216, %217 : vector<1x128xi32>
    %cst_117 = arith.constant -1.000000e+30 : f32
    %219 = vector.shape_cast %218 : vector<1x128xi1> to vector<1x128xi1>
    %220 = vector.broadcast %219 : vector<1x128xi1> to vector<8x128xi1>
    %221 = vector.broadcast %cst_117 : f32 to vector<8x128xf32>
    %222 = arith.select %220, %209, %221 : vector<8x128xi1>, vector<8x128xf32>
    %cst_118 = arith.constant dense<0xFF800000> : vector<8xf32>
    %223 = vector.multi_reduction <maximumf>, %222, %cst_118 [1] : vector<8x128xf32> to vector<8xf32>
    %224 = vector.shape_cast %223 : vector<8xf32> to vector<8x1xf32>
    %225 = vector.broadcast %224 : vector<8x1xf32> to vector<8x128xf32>
    %226 = arith.subf %222, %225 : vector<8x128xf32>
    %227 = math.exp %226 : vector<8x128xf32>
    %cst_119 = arith.constant dense<0.000000e+00> : vector<8xf32>
    %228 = vector.multi_reduction <add>, %227, %cst_119 [1] : vector<8x128xf32> to vector<8xf32>
    %229 = vector.shape_cast %228 : vector<8xf32> to vector<8x1xf32>
    %230 = math.log %229 : vector<8x1xf32>
    %231 = arith.addf %230, %224 : vector<8x1xf32>
    %232 = vector.broadcast %231 : vector<8x1xf32> to vector<8x128xf32>
    %233 = arith.subf %222, %232 : vector<8x128xf32>
    %cst_120 = arith.constant 0.000000e+00 : f32
    %234 = vector.broadcast %cst_120 : f32 to vector<8x1xf32>
    %235 = arith.minimumf %215, %234 : vector<8x1xf32>
    %236 = math.absf %215 : vector<8x1xf32>
    %cst_121 = arith.constant 0.000000e+00 : f32
    %237 = vector.broadcast %cst_121 : f32 to vector<8x1xf32>
    %238 = arith.subf %237, %236 : vector<8x1xf32>
    %239 = math.exp %238 : vector<8x1xf32>
    %cst_122 = arith.constant 1.000000e+00 : f32
    %240 = vector.broadcast %cst_122 : f32 to vector<8x1xf32>
    %241 = arith.addf %240, %239 : vector<8x1xf32>
    %242 = math.log %241 : vector<8x1xf32>
    %243 = arith.subf %235, %242 : vector<8x1xf32>
    %244 = vector.broadcast %243 : vector<8x1xf32> to vector<8x128xf32>
    %245 = arith.addf %233, %244 : vector<8x128xf32>
    %c0_123 = arith.constant 0 : index
    %c0_124 = arith.constant 0 : index
    %246 = vector.load %arg8[%c0_123, %c0_124] : memref<8x128xf32, #tpu.memory_space<vmem>>, vector<8x128xf32>
    tpu.vector_store %arg8[%c0_123, %c0_124], %245 {strides = array<i32>} : memref<8x128xf32, #tpu.memory_space<vmem>>, vector<8x128xf32>,
    %247 = arith.negf %215 : vector<8x1xf32>
    %248 = math.exp %247 : vector<8x1xf32>
    %cst_125 = arith.constant 1.000000e+00 : f32
    %249 = vector.broadcast %cst_125 : f32 to vector<8x1xf32>
    %250 = arith.addf %249, %248 : vector<8x1xf32>
    %251 = arith.divf %249, %250 : vector<8x1xf32>
    %cst_126 = arith.constant 0.000000e+00 : f32
    %252 = vector.broadcast %cst_126 : f32 to vector<8x120xf32>
    %253 = tpu.concatenate %65, %252 in 1 : vector<8x8xf32>, vector<8x120xf32> -> vector<8x128xf32>
    %cst_127 = arith.constant 0.000000e+00 : f32
    %254 = vector.broadcast %cst_127 : f32 to vector<8x127xf32>
    %255 = tpu.concatenate %251, %254 in 1 : vector<8x1xf32>, vector<8x127xf32> -> vector<8x128xf32>
    %256 = tpu.concatenate %69, %253, %255 in 1 : vector<8x128xf32>, vector<8x128xf32>, vector<8x128xf32> -> vector<8x384xf32>
    %c0_128 = arith.constant 0 : index
    %c0_129 = arith.constant 0 : index
    %257 = vector.load %arg10[%c0_128, %c0_129] : memref<8x384xf32, #tpu.memory_space<vmem>>, vector<8x384xf32>
    tpu.vector_store %arg10[%c0_128, %c0_129], %256 {strides = array<i32>} : memref<8x384xf32, #tpu.memory_space<vmem>>, vector<8x384xf32>,
    return
  }
}

</mosaic_0001>

<llo_original>
// kernel: attn_decoder_forward.1
$region0: #{attn_decoder_forward.1}
  #allocation0 [shape = 'u32[]', space=smem, size = 0x4, offset = 0x4, fixed_abs, tag = 'smem constant byte address 0x4 - core index']
  #allocation1 [shape = 'u32[144,128]{1,0:T(1,128)}', space=vmem, size = 0x12000, scoped, tag = 'internal scratch']
  #allocation2 [shape = 'f32[8,128]{1,0:T(8,128)}', space=vmem, size = 0x1000, scoped, tag = 'scratch operand']
  #allocation3 [shape = 's32[8]{0}', space=sflag, size = 0x20, scoped, tag = 'scratch operand']
  #allocation11 [shape = 's32[]', space=sflag, size = 0x4, offset = 0, fixed_abs, tag = 'sflag constant byte address 0x0 - dummy sync flag']
  #allocation12 [shape = 's32[]', space=sflag, size = 0x4, offset = 0, fixed_abs, tag = 'sflag constant byte address 0x0 - dummy sync flag']
  #allocation13 [shape = 's32[]', space=sflag, size = 0x4, offset = 0, fixed_abs, tag = 'sflag constant byte address 0x0 - dummy sync flag']
  #allocation14 [shape = 's32[]', space=sflag, size = 0x4, offset = 0, fixed_abs, tag = 'sflag constant byte address 0x0 - dummy sync flag']
  #allocation15 [shape = 's32[]', space=sflag, size = 0x4, offset = 0, fixed_abs, tag = 'sflag constant byte address 0x0 - dummy sync flag']
  #allocation16 [shape = 's32[]', space=sflag, size = 0x4, offset = 0, fixed_abs, tag = 'sflag constant byte address 0x0 - dummy sync flag']
  #allocation17 [shape = 's32[]', space=sflag, size = 0x4, offset = 0, fixed_abs, tag = 'sflag constant byte address 0x0 - dummy sync flag']
  #allocation18 [shape = 's32[]', space=sflag, size = 0x4, offset = 0, fixed_abs, tag = 'sflag constant byte address 0x0 - dummy sync flag']
  %s0 = inlined_call_operand.vmem [shape: s32[8], index: 0, kind: input, shape index: {}]
  %s1 = inlined_call_operand.vmem [shape: f32[64,128], index: 1, kind: input, shape index: {}]
  %s2 = inlined_call_operand.vmem [shape: f32[2,8,128], index: 2, kind: input, shape index: {}]
  %s3 = inlined_call_operand.vmem [shape: f32[8,8,128], index: 3, kind: input, shape index: {}]
  %s4 = inlined_call_operand.hbm [shape: bf16[128,128], index: 4, kind: input, shape index: {}]
  %s5 = inlined_call_operand.hbm [shape: bf16[640,384], index: 5, kind: input, shape index: {}]
  %s6 = inlined_call_operand.hbm [shape: bf16[256,128], index: 6, kind: input, shape index: {}]
  %s7 = inlined_call_operand.vmem [shape: f32[1,1408], index: 7, kind: input, shape index: {}]
  %s8 = inlined_call_operand.vmem [shape: f32[8,128], index: 8, kind: output, shape index: {0}]
  %s9 = inlined_call_operand.vmem [shape: f32[2,8,128], index: 9, kind: output, shape index: {1}]
  %s10 = inlined_call_operand.vmem [shape: f32[8,384], index: 10, kind: output, shape index: {2}]
  %11 = xla_tuple %s8, %s9, %s10
  %s12 = sld [smem:[#allocation0]]
  $region310: #{attn_decoder_forward.1} parent=0
    _
  %s14 = ssub.s32 1, %s12
  %s15 = scalar_select 0, %s14, %s12
  $region1: #{attn_decoder_forward.1} parent=0
    #allocation4 [shape = 'u8[512]{0}', space=smem, size = 0x200, scoped, tag = 'input window, operand 0, single buffered']
    #allocation5 [shape = 's32[1]{0}', space=sflag, size = 0x4, scoped, tag = 'scoped memory for attn_decoder_forward.1']
    #allocation6 [shape = 's32[1]{0}', space=sflag, size = 0x4, scoped, tag = 'scoped memory for attn_decoder_forward.1']
    #allocation7 [shape = 'u8[32768]{0}', space=vmem, size = 0x8000, scoped, tag = 'input window, operand 4, single buffered']
    #allocation8 [shape = 'u8[491520]{0}', space=vmem, size = 0x78000, scoped, tag = 'input window, operand 5, single buffered']
    #allocation9 [shape = 's32[1]{0}', space=sflag, size = 0x4, scoped, tag = 'scoped memory for attn_decoder_forward.1']
    #allocation10 [shape = 'u8[65536]{0}', space=vmem, size = 0x10000, scoped, tag = 'input window, operand 6, single buffered']
    %16 = vsyncpa [#allocation6], 0
    %17 = vsyncpa [#allocation5], 0
    %18 = vsyncpa [#allocation9], 0
    // Predicated region
    $region2: #{attn_decoder_forward.1} parent=1 // pred_check
      _
    $region3: #{attn_decoder_forward.1} parent=1 // pred_check_branch
      %20 = sbr.rel (0) target = $region5
    $region4: #{attn_decoder_forward.1} parent=1 // pred_region
      %s22 = ssub.s32 16, 16
      %23 = vsyncadd [#allocation6], %s22
      %s25 = sshll.u32 %s0, 4
      %s26 = int_to_ptr.vmem [resolvable:$true] %s25
      %28 = dma.vmem_to_smem %s26, 16, [#allocation4], [#allocation6]
    $region5: #{attn_decoder_forward.1} parent=1 // pred_fallthru
      _
    // Predicated region
    $region6: #{attn_decoder_forward.1} parent=1 // pred_check
      _
    $region7: #{attn_decoder_forward.1} parent=1 // pred_check_branch
      %30 = sbr.rel (0) target = $region9
    $region8: #{attn_decoder_forward.1} parent=1 // pred_region
      _
    $region9: #{attn_decoder_forward.1} parent=1 // pred_fallthru
      _
    // Predicated region
    $region10: #{attn_decoder_forward.1} parent=1 // pred_check
      _
    $region11: #{attn_decoder_forward.1} parent=1 // pred_check_branch
      %32 = sbr.rel (0) target = $region13
    $region12: #{attn_decoder_forward.1} parent=1 // pred_region
      _
    $region13: #{attn_decoder_forward.1} parent=1 // pred_fallthru
      _
    // Predicated region
    $region14: #{attn_decoder_forward.1} parent=1 // pred_check
      _
    $region15: #{attn_decoder_forward.1} parent=1 // pred_check_branch
      %34 = sbr.rel (0) target = $region17
    $region16: #{attn_decoder_forward.1} parent=1 // pred_region
      %s36 = ssub.s32 1024, 1024
      %37 = vsyncadd [#allocation5], %s36
      %s38 = sshll.u32 [#allocation7], 4
      %s39 = int_to_ptr.vmem [resolvable:$true] %s38
      %44 = dma.hbm_to_vmem [thread:$0]  %s4, 1024, %s39, [#allocation5], 64, 64, 4
    $region17: #{attn_decoder_forward.1} parent=1 // pred_fallthru
      _
    // Predicated region
    $region18: #{attn_decoder_forward.1} parent=1 // pred_check
      _
    $region19: #{attn_decoder_forward.1} parent=1 // pred_check_branch
      %46 = sbr.rel (0) target = $region21
    $region20: #{attn_decoder_forward.1} parent=1 // pred_region
      %s48 = ssub.s32 15360, 15360
      %49 = vsyncadd [#allocation9], %s48
      %s50 = sshll.u32 [#allocation8], 4
      %s51 = int_to_ptr.vmem [resolvable:$true] %s50
      %56 = dma.hbm_to_vmem [thread:$0]  %s5, 15360, %s51, [#allocation9], 192, 192, 12
    $region21: #{attn_decoder_forward.1} parent=1 // pred_fallthru
      _
    // Predicated region
    $region22: #{attn_decoder_forward.1} parent=1 // pred_check
      _
    $region23: #{attn_decoder_forward.1} parent=1 // pred_check_branch
      %58 = sbr.rel (0) target = $region25
    $region24: #{attn_decoder_forward.1} parent=1 // pred_region
      %s60 = ssub.s32 2048, 2048
      %61 = vsyncadd [#allocation9], %s60
      %s62 = sshll.u32 [#allocation10], 4
      %s63 = int_to_ptr.vmem [resolvable:$true] %s62
      %68 = dma.hbm_to_vmem [thread:$0]  %s6, 2048, %s63, [#allocation9], 64, 64, 4
    $region25: #{attn_decoder_forward.1} parent=1 // pred_fallthru
      _
    // Predicated region
    $region26: #{attn_decoder_forward.1} parent=1 // pred_check
      _
    $region27: #{attn_decoder_forward.1} parent=1 // pred_check_branch
      %70 = sbr.rel (0) target = $region29
    $region28: #{attn_decoder_forward.1} parent=1 // pred_region
      _
    $region29: #{attn_decoder_forward.1} parent=1 // pred_fallthru
      _
    // Predicated region
    $region30: #{attn_decoder_forward.1} parent=1 // pred_check
      _
    $region31: #{attn_decoder_forward.1} parent=1 // pred_check_branch
      %72 = sbr.rel (0) target = $region33
    $region32: #{attn_decoder_forward.1} parent=1 // pred_region
      %73 = dma.done [#allocation6], 16
    $region33: #{attn_decoder_forward.1} parent=1 // pred_fallthru
      _
    // Predicated region
    $region34: #{attn_decoder_forward.1} parent=1 // pred_check
      _
    $region35: #{attn_decoder_forward.1} parent=1 // pred_check_branch
      %75 = sbr.rel (0) target = $region37
    $region36: #{attn_decoder_forward.1} parent=1 // pred_region
      %76 = dma.done [#allocation5], 1024
    $region37: #{attn_decoder_forward.1} parent=1 // pred_fallthru
      _
    // Predicated region
    $region38: #{attn_decoder_forward.1} parent=1 // pred_check
      _
    $region39: #{attn_decoder_forward.1} parent=1 // pred_check_branch
      %78 = sbr.rel (0) target = $region41
    $region40: #{attn_decoder_forward.1} parent=1 // pred_region
      %79 = dma.done [#allocation9], 15360
    $region41: #{attn_decoder_forward.1} parent=1 // pred_fallthru
      _
    // Predicated region
    $region42: #{attn_decoder_forward.1} parent=1 // pred_check
      _
    $region43: #{attn_decoder_forward.1} parent=1 // pred_check_branch
      %81 = sbr.rel (0) target = $region45
    $region44: #{attn_decoder_forward.1} parent=1 // pred_region
      %82 = dma.done [#allocation9], 2048
    $region45: #{attn_decoder_forward.1} parent=1 // pred_fallthru
      _
    %83 = sfence
    %s85 = sld [smem:[#allocation4]]
    %s86 = scalar_lea.vmem %s1, %s85
    %p88 = scmp.lt.u32.totalorder 1, 8
    %p89 = pneg %p88
    // Predicated region
    $region46: #{attn_decoder_forward.1} parent=1 // pred_check
      _
    $region47: #{attn_decoder_forward.1} parent=1 // pred_check_branch
      %91 = sbr.rel (%p88) target = $region49
    $region48: #{attn_decoder_forward.1} parent=1 // pred_region
      %s106 = sand.u32 1, 7
      %p107 = scmp.eq.s32.totalorder %s106, 0
      %p108 = pneg %p107
      // Predicated region
      $region61: #{attn_decoder_forward.1} parent=48 // pred_check
        _
      $region62: #{attn_decoder_forward.1} parent=48 // pred_check_branch
        %110 = sbr.rel (%p107) target = $region64
      $region63: #{attn_decoder_forward.1} parent=48 // pred_region
        %s111 = sand.u32 1, 7
        %s112 = ssub.s32 1, %s111
        %s113 = scalar_lea.vmem %s86, %s112
        %s114 = ssub.s32 1, %s111
        %s115 = scalar_lea.vmem [#allocation2], %s114
        %s116 = sshllo.u32 0, %s111
        loop: start=0, step=1, limit=1
        $region65: #{attn_decoder_forward.1} parent=63 // loop_pre_header
          _
        $region66: #{attn_decoder_forward.1} parent=63 // loop_header
          %s118 = sphi 0, %s122
          %p119 = scmp.ge.s32.totalorder %s118, 1
          %s123 = sphi %s113, %s113
          %s124 = sphi %s115, %s115
        $region67: #{attn_decoder_forward.1} parent=63 // loop_header_branch
          %121 = sbr.rel (%p119) target = $region71
        $region68: #{attn_decoder_forward.1} parent=63 // loop_body
          %v125 = vld [vmem:[%s123] sm:%s116]
          %126 = vst [vmem:[%s124] sm:%s116] %v125
        $region69: #{attn_decoder_forward.1} parent=63 // loop_footer
          %s122 = sadd.s32 1, %s118
        $region70: #{attn_decoder_forward.1} parent=63 // loop_footer_branch
          %117 = sbr.rel target = $region66
        $region71: #{attn_decoder_forward.1} parent=63 // loop_exit
          _
      $region64: #{attn_decoder_forward.1} parent=48 // pred_fallthru
        _
    $region49: #{attn_decoder_forward.1} parent=1 // pred_fallthru
      _
    // Predicated region
    $region50: #{attn_decoder_forward.1} parent=1 // pred_check
      %p92 = pneg %p88
    $region51: #{attn_decoder_forward.1} parent=1 // pred_check_branch
      %94 = sbr.rel (%p92) target = $region53
    $region52: #{attn_decoder_forward.1} parent=1 // pred_region
      %s95 = sshllo.u32 0, 1
      loop: start=0, step=1, limit=1
      $region54: #{attn_decoder_forward.1} parent=52 // loop_pre_header
        _
      $region55: #{attn_decoder_forward.1} parent=52 // loop_header
        %s97 = sphi 0, %s101
        %p98 = scmp.ge.s32.totalorder %s97, 1
        %s102 = sphi %s86, %s86
        %s103 = sphi [#allocation2], [#allocation2]
      $region56: #{attn_decoder_forward.1} parent=52 // loop_header_branch
        %100 = sbr.rel (%p98) target = $region60
      $region57: #{attn_decoder_forward.1} parent=52 // loop_body
        %v104 = vld [vmem:[%s102] sm:%s95]
        %105 = vst [vmem:[%s103] sm:%s95] %v104
      $region58: #{attn_decoder_forward.1} parent=52 // loop_footer
        %s101 = sadd.s32 1, %s97
      $region59: #{attn_decoder_forward.1} parent=52 // loop_footer_branch
        %96 = sbr.rel target = $region55
      $region60: #{attn_decoder_forward.1} parent=52 // loop_exit
        _
    $region53: #{attn_decoder_forward.1} parent=1 // pred_fallthru
      _
    // Predicated region
    $region72: #{attn_decoder_forward.1} parent=1 // pred_check
      _
    $region73: #{attn_decoder_forward.1} parent=1 // pred_check_branch
      %129 = sbr.rel (0) target = $region75
    $region74: #{attn_decoder_forward.1} parent=1 // pred_region
      %130 = vsyncadd [#allocation3], 16
    $region75: #{attn_decoder_forward.1} parent=1 // pred_fallthru
      _
    %s131 = sld [smem:[#allocation4 + $0x1]]
    %s132 = scalar_lea.vmem %s1, %s131
    %s133 = scalar_lea.vmem [#allocation2], 1
    %s134 = scalar_lea.sflag [#allocation3], 1
    %p136 = scmp.lt.u32.totalorder 1, 8
    %p137 = pneg %p136
    // Predicated region
    $region76: #{attn_decoder_forward.1} parent=1 // pred_check
      _
    $region77: #{attn_decoder_forward.1} parent=1 // pred_check_branch
      %139 = sbr.rel (%p136) target = $region79
    $region78: #{attn_decoder_forward.1} parent=1 // pred_region
      %s154 = sand.u32 1, 7
      %p155 = scmp.eq.s32.totalorder %s154, 0
      %p156 = pneg %p155
      // Predicated region
      $region91: #{attn_decoder_forward.1} parent=78 // pred_check
        _
      $region92: #{attn_decoder_forward.1} parent=78 // pred_check_branch
        %158 = sbr.rel (%p155) target = $region94
      $region93: #{attn_decoder_forward.1} parent=78 // pred_region
        %s159 = sand.u32 1, 7
        %s160 = ssub.s32 1, %s159
        %s161 = scalar_lea.vmem %s132, %s160
        %s162 = ssub.s32 1, %s159
        %s163 = scalar_lea.vmem %s133, %s162 [#allocation2]
        %s164 = sshllo.u32 0, %s159
        loop: start=0, step=1, limit=1
        $region95: #{attn_decoder_forward.1} parent=93 // loop_pre_header
          _
        $region96: #{attn_decoder_forward.1} parent=93 // loop_header
          %s166 = sphi 0, %s170
          %p167 = scmp.ge.s32.totalorder %s166, 1
          %s171 = sphi %s161, %s161
          %s172 = sphi %s163, %s163
        $region97: #{attn_decoder_forward.1} parent=93 // loop_header_branch
          %169 = sbr.rel (%p167) target = $region101
        $region98: #{attn_decoder_forward.1} parent=93 // loop_body
          %v173 = vld [vmem:[%s171] sm:%s164]
          %174 = vst [vmem:[%s172] sm:%s164] %v173
        $region99: #{attn_decoder_forward.1} parent=93 // loop_footer
          %s170 = sadd.s32 1, %s166
        $region100: #{attn_decoder_forward.1} parent=93 // loop_footer_branch
          %165 = sbr.rel target = $region96
        $region101: #{attn_decoder_forward.1} parent=93 // loop_exit
          _
      $region94: #{attn_decoder_forward.1} parent=78 // pred_fallthru
        _
    $region79: #{attn_decoder_forward.1} parent=1 // pred_fallthru
      _
    // Predicated region
    $region80: #{attn_decoder_forward.1} parent=1 // pred_check
      %p140 = pneg %p136
    $region81: #{attn_decoder_forward.1} parent=1 // pred_check_branch
      %142 = sbr.rel (%p140) target = $region83
    $region82: #{attn_decoder_forward.1} parent=1 // pred_region
      %s143 = sshllo.u32 0, 1
      loop: start=0, step=1, limit=1
      $region84: #{attn_decoder_forward.1} parent=82 // loop_pre_header
        _
      $region85: #{attn_decoder_forward.1} parent=82 // loop_header
        %s145 = sphi 0, %s149
        %p146 = scmp.ge.s32.totalorder %s145, 1
        %s150 = sphi %s132, %s132
        %s151 = sphi %s133, %s133
      $region86: #{attn_decoder_forward.1} parent=82 // loop_header_branch
        %148 = sbr.rel (%p146) target = $region90
      $region87: #{attn_decoder_forward.1} parent=82 // loop_body
        %v152 = vld [vmem:[%s150] sm:%s143]
        %153 = vst [vmem:[%s151] sm:%s143] %v152
      $region88: #{attn_decoder_forward.1} parent=82 // loop_footer
        %s149 = sadd.s32 1, %s145
      $region89: #{attn_decoder_forward.1} parent=82 // loop_footer_branch
        %144 = sbr.rel target = $region85
      $region90: #{attn_decoder_forward.1} parent=82 // loop_exit
        _
    $region83: #{attn_decoder_forward.1} parent=1 // pred_fallthru
      _
    // Predicated region
    $region102: #{attn_decoder_forward.1} parent=1 // pred_check
      _
    $region103: #{attn_decoder_forward.1} parent=1 // pred_check_branch
      %177 = sbr.rel (0) target = $region105
    $region104: #{attn_decoder_forward.1} parent=1 // pred_region
      %178 = vsyncadd %s134, 16
    $region105: #{attn_decoder_forward.1} parent=1 // pred_fallthru
      _
    %s179 = sld [smem:[#allocation4 + $0x2]]
    %s180 = scalar_lea.vmem %s1, %s179
    %s181 = scalar_lea.vmem [#allocation2], 2
    %s182 = scalar_lea.sflag [#allocation3], 2
    %p184 = scmp.lt.u32.totalorder 1, 8
    %p185 = pneg %p184
    // Predicated region
    $region106: #{attn_decoder_forward.1} parent=1 // pred_check
      _
    $region107: #{attn_decoder_forward.1} parent=1 // pred_check_branch
      %187 = sbr.rel (%p184) target = $region109
    $region108: #{attn_decoder_forward.1} parent=1 // pred_region
      %s202 = sand.u32 1, 7
      %p203 = scmp.eq.s32.totalorder %s202, 0
      %p204 = pneg %p203
      // Predicated region
      $region121: #{attn_decoder_forward.1} parent=108 // pred_check
        _
      $region122: #{attn_decoder_forward.1} parent=108 // pred_check_branch
        %206 = sbr.rel (%p203) target = $region124
      $region123: #{attn_decoder_forward.1} parent=108 // pred_region
        %s207 = sand.u32 1, 7
        %s208 = ssub.s32 1, %s207
        %s209 = scalar_lea.vmem %s180, %s208
        %s210 = ssub.s32 1, %s207
        %s211 = scalar_lea.vmem %s181, %s210 [#allocation2]
        %s212 = sshllo.u32 0, %s207
        loop: start=0, step=1, limit=1
        $region125: #{attn_decoder_forward.1} parent=123 // loop_pre_header
          _
        $region126: #{attn_decoder_forward.1} parent=123 // loop_header
          %s214 = sphi 0, %s218
          %p215 = scmp.ge.s32.totalorder %s214, 1
          %s219 = sphi %s209, %s209
          %s220 = sphi %s211, %s211
        $region127: #{attn_decoder_forward.1} parent=123 // loop_header_branch
          %217 = sbr.rel (%p215) target = $region131
        $region128: #{attn_decoder_forward.1} parent=123 // loop_body
          %v221 = vld [vmem:[%s219] sm:%s212]
          %222 = vst [vmem:[%s220] sm:%s212] %v221
        $region129: #{attn_decoder_forward.1} parent=123 // loop_footer
          %s218 = sadd.s32 1, %s214
        $region130: #{attn_decoder_forward.1} parent=123 // loop_footer_branch
          %213 = sbr.rel target = $region126
        $region131: #{attn_decoder_forward.1} parent=123 // loop_exit
          _
      $region124: #{attn_decoder_forward.1} parent=108 // pred_fallthru
        _
    $region109: #{attn_decoder_forward.1} parent=1 // pred_fallthru
      _
    // Predicated region
    $region110: #{attn_decoder_forward.1} parent=1 // pred_check
      %p188 = pneg %p184
    $region111: #{attn_decoder_forward.1} parent=1 // pred_check_branch
      %190 = sbr.rel (%p188) target = $region113
    $region112: #{attn_decoder_forward.1} parent=1 // pred_region
      %s191 = sshllo.u32 0, 1
      loop: start=0, step=1, limit=1
      $region114: #{attn_decoder_forward.1} parent=112 // loop_pre_header
        _
      $region115: #{attn_decoder_forward.1} parent=112 // loop_header
        %s193 = sphi 0, %s197
        %p194 = scmp.ge.s32.totalorder %s193, 1
        %s198 = sphi %s180, %s180
        %s199 = sphi %s181, %s181
      $region116: #{attn_decoder_forward.1} parent=112 // loop_header_branch
        %196 = sbr.rel (%p194) target = $region120
      $region117: #{attn_decoder_forward.1} parent=112 // loop_body
        %v200 = vld [vmem:[%s198] sm:%s191]
        %201 = vst [vmem:[%s199] sm:%s191] %v200
      $region118: #{attn_decoder_forward.1} parent=112 // loop_footer
        %s197 = sadd.s32 1, %s193
      $region119: #{attn_decoder_forward.1} parent=112 // loop_footer_branch
        %192 = sbr.rel target = $region115
      $region120: #{attn_decoder_forward.1} parent=112 // loop_exit
        _
    $region113: #{attn_decoder_forward.1} parent=1 // pred_fallthru
      _
    // Predicated region
    $region132: #{attn_decoder_forward.1} parent=1 // pred_check
      _
    $region133: #{attn_decoder_forward.1} parent=1 // pred_check_branch
      %225 = sbr.rel (0) target = $region135
    $region134: #{attn_decoder_forward.1} parent=1 // pred_region
      %226 = vsyncadd %s182, 16
    $region135: #{attn_decoder_forward.1} parent=1 // pred_fallthru
      _
    %s227 = sld [smem:[#allocation4 + $0x3]]
    %s228 = scalar_lea.vmem %s1, %s227
    %s229 = scalar_lea.vmem [#allocation2], 3
    %s230 = scalar_lea.sflag [#allocation3], 3
    %p232 = scmp.lt.u32.totalorder 1, 8
    %p233 = pneg %p232
    // Predicated region
    $region136: #{attn_decoder_forward.1} parent=1 // pred_check
      _
    $region137: #{attn_decoder_forward.1} parent=1 // pred_check_branch
      %235 = sbr.rel (%p232) target = $region139
    $region138: #{attn_decoder_forward.1} parent=1 // pred_region
      %s250 = sand.u32 1, 7
      %p251 = scmp.eq.s32.totalorder %s250, 0
      %p252 = pneg %p251
      // Predicated region
      $region151: #{attn_decoder_forward.1} parent=138 // pred_check
        _
      $region152: #{attn_decoder_forward.1} parent=138 // pred_check_branch
        %254 = sbr.rel (%p251) target = $region154
      $region153: #{attn_decoder_forward.1} parent=138 // pred_region
        %s255 = sand.u32 1, 7
        %s256 = ssub.s32 1, %s255
        %s257 = scalar_lea.vmem %s228, %s256
        %s258 = ssub.s32 1, %s255
        %s259 = scalar_lea.vmem %s229, %s258 [#allocation2]
        %s260 = sshllo.u32 0, %s255
        loop: start=0, step=1, limit=1
        $region155: #{attn_decoder_forward.1} parent=153 // loop_pre_header
          _
        $region156: #{attn_decoder_forward.1} parent=153 // loop_header
          %s262 = sphi 0, %s266
          %p263 = scmp.ge.s32.totalorder %s262, 1
          %s267 = sphi %s257, %s257
          %s268 = sphi %s259, %s259
        $region157: #{attn_decoder_forward.1} parent=153 // loop_header_branch
          %265 = sbr.rel (%p263) target = $region161
        $region158: #{attn_decoder_forward.1} parent=153 // loop_body
          %v269 = vld [vmem:[%s267] sm:%s260]
          %270 = vst [vmem:[%s268] sm:%s260] %v269
        $region159: #{attn_decoder_forward.1} parent=153 // loop_footer
          %s266 = sadd.s32 1, %s262
        $region160: #{attn_decoder_forward.1} parent=153 // loop_footer_branch
          %261 = sbr.rel target = $region156
        $region161: #{attn_decoder_forward.1} parent=153 // loop_exit
          _
      $region154: #{attn_decoder_forward.1} parent=138 // pred_fallthru
        _
    $region139: #{attn_decoder_forward.1} parent=1 // pred_fallthru
      _
    // Predicated region
    $region140: #{attn_decoder_forward.1} parent=1 // pred_check
      %p236 = pneg %p232
    $region141: #{attn_decoder_forward.1} parent=1 // pred_check_branch
      %238 = sbr.rel (%p236) target = $region143
    $region142: #{attn_decoder_forward.1} parent=1 // pred_region
      %s239 = sshllo.u32 0, 1
      loop: start=0, step=1, limit=1
      $region144: #{attn_decoder_forward.1} parent=142 // loop_pre_header
        _
      $region145: #{attn_decoder_forward.1} parent=142 // loop_header
        %s241 = sphi 0, %s245
        %p242 = scmp.ge.s32.totalorder %s241, 1
        %s246 = sphi %s228, %s228
        %s247 = sphi %s229, %s229
      $region146: #{attn_decoder_forward.1} parent=142 // loop_header_branch
        %244 = sbr.rel (%p242) target = $region150
      $region147: #{attn_decoder_forward.1} parent=142 // loop_body
        %v248 = vld [vmem:[%s246] sm:%s239]
        %249 = vst [vmem:[%s247] sm:%s239] %v248
      $region148: #{attn_decoder_forward.1} parent=142 // loop_footer
        %s245 = sadd.s32 1, %s241
      $region149: #{attn_decoder_forward.1} parent=142 // loop_footer_branch
        %240 = sbr.rel target = $region145
      $region150: #{attn_decoder_forward.1} parent=142 // loop_exit
        _
    $region143: #{attn_decoder_forward.1} parent=1 // pred_fallthru
      _
    // Predicated region
    $region162: #{attn_decoder_forward.1} parent=1 // pred_check
      _
    $region163: #{attn_decoder_forward.1} parent=1 // pred_check_branch
      %273 = sbr.rel (0) target = $region165
    $region164: #{attn_decoder_forward.1} parent=1 // pred_region
      %274 = vsyncadd %s230, 16
    $region165: #{attn_decoder_forward.1} parent=1 // pred_fallthru
      _
    %s275 = sld [smem:[#allocation4 + $0x4]]
    %s276 = scalar_lea.vmem %s1, %s275
    %s277 = scalar_lea.vmem [#allocation2], 4
    %s278 = scalar_lea.sflag [#allocation3], 4
    %p280 = scmp.lt.u32.totalorder 1, 8
    %p281 = pneg %p280
    // Predicated region
    $region166: #{attn_decoder_forward.1} parent=1 // pred_check
      _
    $region167: #{attn_decoder_forward.1} parent=1 // pred_check_branch
      %283 = sbr.rel (%p280) target = $region169
    $region168: #{attn_decoder_forward.1} parent=1 // pred_region
      %s298 = sand.u32 1, 7
      %p299 = scmp.eq.s32.totalorder %s298, 0
      %p300 = pneg %p299
      // Predicated region
      $region181: #{attn_decoder_forward.1} parent=168 // pred_check
        _
      $region182: #{attn_decoder_forward.1} parent=168 // pred_check_branch
        %302 = sbr.rel (%p299) target = $region184
      $region183: #{attn_decoder_forward.1} parent=168 // pred_region
        %s303 = sand.u32 1, 7
        %s304 = ssub.s32 1, %s303
        %s305 = scalar_lea.vmem %s276, %s304
        %s306 = ssub.s32 1, %s303
        %s307 = scalar_lea.vmem %s277, %s306 [#allocation2]
        %s308 = sshllo.u32 0, %s303
        loop: start=0, step=1, limit=1
        $region185: #{attn_decoder_forward.1} parent=183 // loop_pre_header
          _
        $region186: #{attn_decoder_forward.1} parent=183 // loop_header
          %s310 = sphi 0, %s314
          %p311 = scmp.ge.s32.totalorder %s310, 1
          %s315 = sphi %s305, %s305
          %s316 = sphi %s307, %s307
        $region187: #{attn_decoder_forward.1} parent=183 // loop_header_branch
          %313 = sbr.rel (%p311) target = $region191
        $region188: #{attn_decoder_forward.1} parent=183 // loop_body
          %v317 = vld [vmem:[%s315] sm:%s308]
          %318 = vst [vmem:[%s316] sm:%s308] %v317
        $region189: #{attn_decoder_forward.1} parent=183 // loop_footer
          %s314 = sadd.s32 1, %s310
        $region190: #{attn_decoder_forward.1} parent=183 // loop_footer_branch
          %309 = sbr.rel target = $region186
        $region191: #{attn_decoder_forward.1} parent=183 // loop_exit
          _
      $region184: #{attn_decoder_forward.1} parent=168 // pred_fallthru
        _
    $region169: #{attn_decoder_forward.1} parent=1 // pred_fallthru
      _
    // Predicated region
    $region170: #{attn_decoder_forward.1} parent=1 // pred_check
      %p284 = pneg %p280
    $region171: #{attn_decoder_forward.1} parent=1 // pred_check_branch
      %286 = sbr.rel (%p284) target = $region173
    $region172: #{attn_decoder_forward.1} parent=1 // pred_region
      %s287 = sshllo.u32 0, 1
      loop: start=0, step=1, limit=1
      $region174: #{attn_decoder_forward.1} parent=172 // loop_pre_header
        _
      $region175: #{attn_decoder_forward.1} parent=172 // loop_header
        %s289 = sphi 0, %s293
        %p290 = scmp.ge.s32.totalorder %s289, 1
        %s294 = sphi %s276, %s276
        %s295 = sphi %s277, %s277
      $region176: #{attn_decoder_forward.1} parent=172 // loop_header_branch
        %292 = sbr.rel (%p290) target = $region180
      $region177: #{attn_decoder_forward.1} parent=172 // loop_body
        %v296 = vld [vmem:[%s294] sm:%s287]
        %297 = vst [vmem:[%s295] sm:%s287] %v296
      $region178: #{attn_decoder_forward.1} parent=172 // loop_footer
        %s293 = sadd.s32 1, %s289
      $region179: #{attn_decoder_forward.1} parent=172 // loop_footer_branch
        %288 = sbr.rel target = $region175
      $region180: #{attn_decoder_forward.1} parent=172 // loop_exit
        _
    $region173: #{attn_decoder_forward.1} parent=1 // pred_fallthru
      _
    // Predicated region
    $region192: #{attn_decoder_forward.1} parent=1 // pred_check
      _
    $region193: #{attn_decoder_forward.1} parent=1 // pred_check_branch
      %321 = sbr.rel (0) target = $region195
    $region194: #{attn_decoder_forward.1} parent=1 // pred_region
      %322 = vsyncadd %s278, 16
    $region195: #{attn_decoder_forward.1} parent=1 // pred_fallthru
      _
    %s323 = sld [smem:[#allocation4 + $0x5]]
    %s324 = scalar_lea.vmem %s1, %s323
    %s325 = scalar_lea.vmem [#allocation2], 5
    %s326 = scalar_lea.sflag [#allocation3], 5
    %p328 = scmp.lt.u32.totalorder 1, 8
    %p329 = pneg %p328
    // Predicated region
    $region196: #{attn_decoder_forward.1} parent=1 // pred_check
      _
    $region197: #{attn_decoder_forward.1} parent=1 // pred_check_branch
      %331 = sbr.rel (%p328) target = $region199
    $region198: #{attn_decoder_forward.1} parent=1 // pred_region
      %s346 = sand.u32 1, 7
      %p347 = scmp.eq.s32.totalorder %s346, 0
      %p348 = pneg %p347
      // Predicated region
      $region211: #{attn_decoder_forward.1} parent=198 // pred_check
        _
      $region212: #{attn_decoder_forward.1} parent=198 // pred_check_branch
        %350 = sbr.rel (%p347) target = $region214
      $region213: #{attn_decoder_forward.1} parent=198 // pred_region
        %s351 = sand.u32 1, 7
        %s352 = ssub.s32 1, %s351
        %s353 = scalar_lea.vmem %s324, %s352
        %s354 = ssub.s32 1, %s351
        %s355 = scalar_lea.vmem %s325, %s354 [#allocation2]
        %s356 = sshllo.u32 0, %s351
        loop: start=0, step=1, limit=1
        $region215: #{attn_decoder_forward.1} parent=213 // loop_pre_header
          _
        $region216: #{attn_decoder_forward.1} parent=213 // loop_header
          %s358 = sphi 0, %s362
          %p359 = scmp.ge.s32.totalorder %s358, 1
          %s363 = sphi %s353, %s353
          %s364 = sphi %s355, %s355
        $region217: #{attn_decoder_forward.1} parent=213 // loop_header_branch
          %361 = sbr.rel (%p359) target = $region221
        $region218: #{attn_decoder_forward.1} parent=213 // loop_body
          %v365 = vld [vmem:[%s363] sm:%s356]
          %366 = vst [vmem:[%s364] sm:%s356] %v365
        $region219: #{attn_decoder_forward.1} parent=213 // loop_footer
          %s362 = sadd.s32 1, %s358
        $region220: #{attn_decoder_forward.1} parent=213 // loop_footer_branch
          %357 = sbr.rel target = $region216
        $region221: #{attn_decoder_forward.1} parent=213 // loop_exit
          _
      $region214: #{attn_decoder_forward.1} parent=198 // pred_fallthru
        _
    $region199: #{attn_decoder_forward.1} parent=1 // pred_fallthru
      _
    // Predicated region
    $region200: #{attn_decoder_forward.1} parent=1 // pred_check
      %p332 = pneg %p328
    $region201: #{attn_decoder_forward.1} parent=1 // pred_check_branch
      %334 = sbr.rel (%p332) target = $region203
    $region202: #{attn_decoder_forward.1} parent=1 // pred_region
      %s335 = sshllo.u32 0, 1
      loop: start=0, step=1, limit=1
      $region204: #{attn_decoder_forward.1} parent=202 // loop_pre_header
        _
      $region205: #{attn_decoder_forward.1} parent=202 // loop_header
        %s337 = sphi 0, %s341
        %p338 = scmp.ge.s32.totalorder %s337, 1
        %s342 = sphi %s324, %s324
        %s343 = sphi %s325, %s325
      $region206: #{attn_decoder_forward.1} parent=202 // loop_header_branch
        %340 = sbr.rel (%p338) target = $region210
      $region207: #{attn_decoder_forward.1} parent=202 // loop_body
        %v344 = vld [vmem:[%s342] sm:%s335]
        %345 = vst [vmem:[%s343] sm:%s335] %v344
      $region208: #{attn_decoder_forward.1} parent=202 // loop_footer
        %s341 = sadd.s32 1, %s337
      $region209: #{attn_decoder_forward.1} parent=202 // loop_footer_branch
        %336 = sbr.rel target = $region205
      $region210: #{attn_decoder_forward.1} parent=202 // loop_exit
        _
    $region203: #{attn_decoder_forward.1} parent=1 // pred_fallthru
      _
    // Predicated region
    $region222: #{attn_decoder_forward.1} parent=1 // pred_check
      _
    $region223: #{attn_decoder_forward.1} parent=1 // pred_check_branch
      %369 = sbr.rel (0) target = $region225
    $region224: #{attn_decoder_forward.1} parent=1 // pred_region
      %370 = vsyncadd %s326, 16
    $region225: #{attn_decoder_forward.1} parent=1 // pred_fallthru
      _
    %s371 = sld [smem:[#allocation4 + $0x6]]
    %s372 = scalar_lea.vmem %s1, %s371
    %s373 = scalar_lea.vmem [#allocation2], 6
    %s374 = scalar_lea.sflag [#allocation3], 6
    %p376 = scmp.lt.u32.totalorder 1, 8
    %p377 = pneg %p376
    // Predicated region
    $region226: #{attn_decoder_forward.1} parent=1 // pred_check
      _
    $region227: #{attn_decoder_forward.1} parent=1 // pred_check_branch
      %379 = sbr.rel (%p376) target = $region229
    $region228: #{attn_decoder_forward.1} parent=1 // pred_region
      %s394 = sand.u32 1, 7
      %p395 = scmp.eq.s32.totalorder %s394, 0
      %p396 = pneg %p395
      // Predicated region
      $region241: #{attn_decoder_forward.1} parent=228 // pred_check
        _
      $region242: #{attn_decoder_forward.1} parent=228 // pred_check_branch
        %398 = sbr.rel (%p395) target = $region244
      $region243: #{attn_decoder_forward.1} parent=228 // pred_region
        %s399 = sand.u32 1, 7
        %s400 = ssub.s32 1, %s399
        %s401 = scalar_lea.vmem %s372, %s400
        %s402 = ssub.s32 1, %s399
        %s403 = scalar_lea.vmem %s373, %s402 [#allocation2]
        %s404 = sshllo.u32 0, %s399
        loop: start=0, step=1, limit=1
        $region245: #{attn_decoder_forward.1} parent=243 // loop_pre_header
          _
        $region246: #{attn_decoder_forward.1} parent=243 // loop_header
          %s406 = sphi 0, %s410
          %p407 = scmp.ge.s32.totalorder %s406, 1
          %s411 = sphi %s401, %s401
          %s412 = sphi %s403, %s403
        $region247: #{attn_decoder_forward.1} parent=243 // loop_header_branch
          %409 = sbr.rel (%p407) target = $region251
        $region248: #{attn_decoder_forward.1} parent=243 // loop_body
          %v413 = vld [vmem:[%s411] sm:%s404]
          %414 = vst [vmem:[%s412] sm:%s404] %v413
        $region249: #{attn_decoder_forward.1} parent=243 // loop_footer
          %s410 = sadd.s32 1, %s406
        $region250: #{attn_decoder_forward.1} parent=243 // loop_footer_branch
          %405 = sbr.rel target = $region246
        $region251: #{attn_decoder_forward.1} parent=243 // loop_exit
          _
      $region244: #{attn_decoder_forward.1} parent=228 // pred_fallthru
        _
    $region229: #{attn_decoder_forward.1} parent=1 // pred_fallthru
      _
    // Predicated region
    $region230: #{attn_decoder_forward.1} parent=1 // pred_check
      %p380 = pneg %p376
    $region231: #{attn_decoder_forward.1} parent=1 // pred_check_branch
      %382 = sbr.rel (%p380) target = $region233
    $region232: #{attn_decoder_forward.1} parent=1 // pred_region
      %s383 = sshllo.u32 0, 1
      loop: start=0, step=1, limit=1
      $region234: #{attn_decoder_forward.1} parent=232 // loop_pre_header
        _
      $region235: #{attn_decoder_forward.1} parent=232 // loop_header
        %s385 = sphi 0, %s389
        %p386 = scmp.ge.s32.totalorder %s385, 1
        %s390 = sphi %s372, %s372
        %s391 = sphi %s373, %s373
      $region236: #{attn_decoder_forward.1} parent=232 // loop_header_branch
        %388 = sbr.rel (%p386) target = $region240
      $region237: #{attn_decoder_forward.1} parent=232 // loop_body
        %v392 = vld [vmem:[%s390] sm:%s383]
        %393 = vst [vmem:[%s391] sm:%s383] %v392
      $region238: #{attn_decoder_forward.1} parent=232 // loop_footer
        %s389 = sadd.s32 1, %s385
      $region239: #{attn_decoder_forward.1} parent=232 // loop_footer_branch
        %384 = sbr.rel target = $region235
      $region240: #{attn_decoder_forward.1} parent=232 // loop_exit
        _
    $region233: #{attn_decoder_forward.1} parent=1 // pred_fallthru
      _
    // Predicated region
    $region252: #{attn_decoder_forward.1} parent=1 // pred_check
      _
    $region253: #{attn_decoder_forward.1} parent=1 // pred_check_branch
      %417 = sbr.rel (0) target = $region255
    $region254: #{attn_decoder_forward.1} parent=1 // pred_region
      %418 = vsyncadd %s374, 16
    $region255: #{attn_decoder_forward.1} parent=1 // pred_fallthru
      _
    %s419 = sld [smem:[#allocation4 + $0x7]]
    %s420 = scalar_lea.vmem %s1, %s419
    %s421 = scalar_lea.vmem [#allocation2], 7
    %s422 = scalar_lea.sflag [#allocation3], 7
    %p424 = scmp.lt.u32.totalorder 1, 8
    %p425 = pneg %p424
    // Predicated region
    $region256: #{attn_decoder_forward.1} parent=1 // pred_check
      _
    $region257: #{attn_decoder_forward.1} parent=1 // pred_check_branch
      %427 = sbr.rel (%p424) target = $region259
    $region258: #{attn_decoder_forward.1} parent=1 // pred_region
      %s442 = sand.u32 1, 7
      %p443 = scmp.eq.s32.totalorder %s442, 0
      %p444 = pneg %p443
      // Predicated region
      $region271: #{attn_decoder_forward.1} parent=258 // pred_check
        _
      $region272: #{attn_decoder_forward.1} parent=258 // pred_check_branch
        %446 = sbr.rel (%p443) target = $region274
      $region273: #{attn_decoder_forward.1} parent=258 // pred_region
        %s447 = sand.u32 1, 7
        %s448 = ssub.s32 1, %s447
        %s449 = scalar_lea.vmem %s420, %s448
        %s450 = ssub.s32 1, %s447
        %s451 = scalar_lea.vmem %s421, %s450 [#allocation2]
        %s452 = sshllo.u32 0, %s447
        loop: start=0, step=1, limit=1
        $region275: #{attn_decoder_forward.1} parent=273 // loop_pre_header
          _
        $region276: #{attn_decoder_forward.1} parent=273 // loop_header
          %s454 = sphi 0, %s458
          %p455 = scmp.ge.s32.totalorder %s454, 1
          %s459 = sphi %s449, %s449
          %s460 = sphi %s451, %s451
        $region277: #{attn_decoder_forward.1} parent=273 // loop_header_branch
          %457 = sbr.rel (%p455) target = $region281
        $region278: #{attn_decoder_forward.1} parent=273 // loop_body
          %v461 = vld [vmem:[%s459] sm:%s452]
          %462 = vst [vmem:[%s460] sm:%s452] %v461
        $region279: #{attn_decoder_forward.1} parent=273 // loop_footer
          %s458 = sadd.s32 1, %s454
        $region280: #{attn_decoder_forward.1} parent=273 // loop_footer_branch
          %453 = sbr.rel target = $region276
        $region281: #{attn_decoder_forward.1} parent=273 // loop_exit
          _
      $region274: #{attn_decoder_forward.1} parent=258 // pred_fallthru
        _
    $region259: #{attn_decoder_forward.1} parent=1 // pred_fallthru
      _
    // Predicated region
    $region260: #{attn_decoder_forward.1} parent=1 // pred_check
      %p428 = pneg %p424
    $region261: #{attn_decoder_forward.1} parent=1 // pred_check_branch
      %430 = sbr.rel (%p428) target = $region263
    $region262: #{attn_decoder_forward.1} parent=1 // pred_region
      %s431 = sshllo.u32 0, 1
      loop: start=0, step=1, limit=1
      $region264: #{attn_decoder_forward.1} parent=262 // loop_pre_header
        _
      $region265: #{attn_decoder_forward.1} parent=262 // loop_header
        %s433 = sphi 0, %s437
        %p434 = scmp.ge.s32.totalorder %s433, 1
        %s438 = sphi %s420, %s420
        %s439 = sphi %s421, %s421
      $region266: #{attn_decoder_forward.1} parent=262 // loop_header_branch
        %436 = sbr.rel (%p434) target = $region270
      $region267: #{attn_decoder_forward.1} parent=262 // loop_body
        %v440 = vld [vmem:[%s438] sm:%s431]
        %441 = vst [vmem:[%s439] sm:%s431] %v440
      $region268: #{attn_decoder_forward.1} parent=262 // loop_footer
        %s437 = sadd.s32 1, %s433
      $region269: #{attn_decoder_forward.1} parent=262 // loop_footer_branch
        %432 = sbr.rel target = $region265
      $region270: #{attn_decoder_forward.1} parent=262 // loop_exit
        _
    $region263: #{attn_decoder_forward.1} parent=1 // pred_fallthru
      _
    // Predicated region
    $region282: #{attn_decoder_forward.1} parent=1 // pred_check
      _
    $region283: #{attn_decoder_forward.1} parent=1 // pred_check_branch
      %465 = sbr.rel (0) target = $region285
    $region284: #{attn_decoder_forward.1} parent=1 // pred_region
      %466 = vsyncadd %s422, 16
    $region285: #{attn_decoder_forward.1} parent=1 // pred_fallthru
      _
    %s467 = scalar_lea.vmem %s2, 8
    %v468 = vld [vmem:[%s467] sm:$0xff]
    %v469 = vld [vmem:[%s3] sm:$0xff]
    %v470 = vld [vmem:[%s3 + $0x8] sm:$0xff]
    %v471 = vld [vmem:[%s3 + $0x10] sm:$0xff]
    %v472 = vld [vmem:[%s3 + $0x18] sm:$0xff]
    %v473 = vld [vmem:[%s3 + $0x20] sm:$0xff]
    %v474 = vld [vmem:[%s3 + $0x28] sm:$0xff]
    %v475 = vld [vmem:[%s3 + $0x30] sm:$0xff]
    %v476 = vld [vmem:[%s3 + $0x38] sm:$0xff]
    %v477 = vld [vmem:[%s7] sm:$0x1]
    %v478 = vpack.c.bf16 %v468, %v468
    %v479 = vld [vmem:[#allocation7] sm:$0xf]
    %v480 = vld [vmem:[#allocation7 + $0x4] sm:$0xf]
    %v481 = vld [vmem:[#allocation7 + $0x8] sm:$0xf]
    %v482 = vld [vmem:[#allocation7 + $0xc] sm:$0xf]
    %v483 = vld [vmem:[#allocation7 + $0x10] sm:$0xf]
    %v484 = vld [vmem:[#allocation7 + $0x14] sm:$0xf]
    %v485 = vld [vmem:[#allocation7 + $0x18] sm:$0xf]
    %v486 = vld [vmem:[#allocation7 + $0x1c] sm:$0xf]
    %v487 = vld [vmem:[#allocation7 + $0x20] sm:$0xf]
    %v488 = vld [vmem:[#allocation7 + $0x24] sm:$0xf]
    %v489 = vld [vmem:[#allocation7 + $0x28] sm:$0xf]
    %v490 = vld [vmem:[#allocation7 + $0x2c] sm:$0xf]
    %v491 = vld [vmem:[#allocation7 + $0x30] sm:$0xf]
    %v492 = vld [vmem:[#allocation7 + $0x34] sm:$0xf]
    %v493 = vld [vmem:[#allocation7 + $0x38] sm:$0xf]
    %v494 = vld [vmem:[#allocation7 + $0x3c] sm:$0xf]
    %v511 = vunpack.c.l.b16 %v479
    %v512 = vunpack.c.l.b16 %v480
    %v513 = vunpack.c.l.b16 %v481
    %v514 = vunpack.c.l.b16 %v482
    %v515 = vunpack.c.l.b16 %v483
    %v516 = vunpack.c.l.b16 %v484
    %v517 = vunpack.c.l.b16 %v485
    %v518 = vunpack.c.l.b16 %v486
    %v519 = vunpack.c.l.b16 %v487
    %v520 = vunpack.c.l.b16 %v488
    %v521 = vunpack.c.l.b16 %v489
    %v522 = vunpack.c.l.b16 %v490
    %v523 = vunpack.c.l.b16 %v491
    %v524 = vunpack.c.l.b16 %v492
    %v525 = vunpack.c.l.b16 %v493
    %v526 = vunpack.c.l.b16 %v494
    %v527 = vpack.c.b16 %v512, %v511
    %v528 = vpack.c.b16 %v514, %v513
    %v529 = vpack.c.b16 %v516, %v515
    %v530 = vpack.c.b16 %v518, %v517
    %v531 = vpack.c.b16 %v520, %v519
    %v532 = vpack.c.b16 %v522, %v521
    %v533 = vpack.c.b16 %v524, %v523
    %v534 = vpack.c.b16 %v526, %v525
    %543 = vmatprep.subr.bf16.mxu0 0
    %544 = vmatpush1.bf16.msra.mxu0 %v527
    %545 = vmatprep.subr.bf16.mxu0 0
    %546 = vmatpush1.bf16.msra.mxu0 %v528
    %547 = vmatprep.subr.bf16.mxu0 0
    %548 = vmatpush1.bf16.msra.mxu0 %v529
    %549 = vmatprep.subr.bf16.mxu0 0
    %550 = vmatpush1.bf16.msra.mxu0 %v530
    %551 = vmatprep.subr.bf16.mxu0 0
    %552 = vmatpush1.bf16.msra.mxu0 %v531
    %553 = vmatprep.subr.bf16.mxu0 0
    %554 = vmatpush1.bf16.msra.mxu0 %v532
    %555 = vmatprep.subr.bf16.mxu0 0
    %556 = vmatpush1.bf16.msra.mxu0 %v533
    %557 = vmatprep.subr.bf16.mxu0 0
    %558 = vmatpush1.bf16.msra.mxu0 %v534
    %559 = vmatprep.subr.bf16.mxu0 0
    %560 = vmatpush1.bf16.msra.mxu0 0
    %561 = vmatprep.subr.bf16.mxu0 0
    %562 = vmatpush1.bf16.msra.mxu0 0
    %563 = vmatprep.subr.bf16.mxu0 0
    %564 = vmatpush1.bf16.msra.mxu0 0
    %565 = vmatprep.subr.bf16.mxu0 0
    %566 = vmatpush1.bf16.msra.mxu0 0
    %567 = vmatprep.subr.bf16.mxu0 0
    %568 = vmatpush1.bf16.msra.mxu0 0
    %569 = vmatprep.subr.bf16.mxu0 0
    %570 = vmatpush1.bf16.msra.mxu0 0
    %571 = vmatprep.subr.bf16.mxu0 0
    %572 = vmatpush1.bf16.msra.mxu0 0
    %573 = vmatprep.subr.bf16.mxu0 0
    %574 = vmatpush1.bf16.msra.mxu0 0
    %575 = vmatprep.mubr.bf16.mxu0 0
    %576 = vmatmul.mubr.bf16.gmra.mrb[0].mxu0 %v478
    %v577 = vpop.f32.mrb[0].mxu0
    %v578 = vadd.f32 0.0, %v577
    %v579 = vpop.f32.mrb[0].mxu0
    %v580 = vpop.f32.mrb[0].mxu0
    %v581 = vpop.f32.mrb[0].mxu0
    %582 = vdwg.mxu0
    %v584 = vlaneseq
    %v585 = vshrl.u32 %v584, 7
    %v586 = vsub.s32 0, %v585
    %v587 = vrot.slane %v477, %v586
    %v589 = vmul.f32 %v468, %v587
    %590 = vadd.xlane.f32.xlu0 %v589
    %v591 = vpop.xlane.xlu0 %590
    %v593 = vcombine.high %v578, %v578
    %v595 = vunpack.c.l.s4 1966171168
    %v596 = vunpack.c.0.s8 %v595
    %v597 = vlaneseq
    %v598 = vshrl.u32 %v597, 7
    %v599 = vsub.s32 %v596, %v598
    %v600 = vrot.slane %v578, %v599
    %v602 = vunpack.c.l.s4 1966171168
    %v603 = vunpack.c.0.s8 %v602
    %v604 = vlaneseq
    %v605 = vshrl.u32 %v604, 7
    %v606 = vsub.s32 %v603, %v605
    %v607 = vrot.slane %v593, %v606
    %v608 = vcombine.high %v600, %v600
    %v609 = vcombine.high %v607, %v607
    %v611 = vunpack.c.l.s4 1966171168
    %v612 = vunpack.c.0.s8 %v611
    %v613 = vlaneseq
    %v614 = vshrl.u32 %v613, 7
    %v615 = vsub.s32 %v612, %v614
    %v616 = vrot.slane %v600, %v615
    %v618 = vunpack.c.l.s4 1966171168
    %v619 = vunpack.c.0.s8 %v618
    %v620 = vlaneseq
    %v621 = vshrl.u32 %v620, 7
    %v622 = vsub.s32 %v619, %v621
    %v623 = vrot.slane %v607, %v622
    %v625 = vunpack.c.l.s4 1966171168
    %v626 = vunpack.c.0.s8 %v625
    %v627 = vlaneseq
    %v628 = vshrl.u32 %v627, 7
    %v629 = vsub.s32 %v626, %v628
    %v630 = vrot.slane %v608, %v629
    %v632 = vunpack.c.l.s4 1966171168
    %v633 = vunpack.c.0.s8 %v632
    %v634 = vlaneseq
    %v635 = vshrl.u32 %v634, 7
    %v636 = vsub.s32 %v633, %v635
    %v637 = vrot.slane %v609, %v636
    %v638 = vcombine.high %v616, %v616
    %v639 = vcombine.high %v623, %v623
    %v640 = vcombine.high %v630, %v630
    %v641 = vcombine.high %v637, %v637
    %v642 = vlaneseq
    %v643 = vshrl.u32 %v642, 7
    %v644 = vsub.s32 0, %v643
    %v645 = vrot.slane %v616, %v644
    %v646 = vlaneseq
    %v647 = vshrl.u32 %v646, 7
    %v648 = vsub.s32 0, %v647
    %v649 = vrot.slane %v630, %v648
    %v650 = vlaneseq
    %v651 = vshrl.u32 %v650, 7
    %v652 = vsub.s32 0, %v651
    %v653 = vrot.slane %v638, %v652
    %v654 = vlaneseq
    %v655 = vshrl.u32 %v654, 7
    %v656 = vsub.s32 0, %v655
    %v657 = vrot.slane %v640, %v656
    %v658 = vlaneseq
    %v659 = vshrl.u32 %v658, 7
    %v660 = vsub.s32 0, %v659
    %v661 = vrot.slane %v623, %v660
    %v662 = vlaneseq
    %v663 = vshrl.u32 %v662, 7
    %v664 = vsub.s32 0, %v663
    %v665 = vrot.slane %v637, %v664
    %v666 = vlaneseq
    %v667 = vshrl.u32 %v666, 7
    %v668 = vsub.s32 0, %v667
    %v669 = vrot.slane %v639, %v668
    %v670 = vlaneseq
    %v671 = vshrl.u32 %v670, 7
    %v672 = vsub.s32 0, %v671
    %v673 = vrot.slane %v641, %v672
    %v682 = vmul.f32 %v645, %v469
    %v683 = vmul.f32 %v649, %v470
    %v684 = vmul.f32 %v653, %v471
    %v685 = vmul.f32 %v657, %v472
    %v686 = vmul.f32 %v661, %v473
    %v687 = vmul.f32 %v665, %v474
    %v688 = vmul.f32 %v669, %v475
    %v689 = vmul.f32 %v673, %v476
    %690 = vadd.xlane.f32.xlu0 %v682
    %v691 = vpop.xlane.xlu0 %690
    %692 = vadd.xlane.f32.xlu0 %v683
    %v693 = vpop.xlane.xlu0 %692
    %694 = vadd.xlane.f32.xlu0 %v684
    %v695 = vpop.xlane.xlu0 %694
    %696 = vadd.xlane.f32.xlu0 %v685
    %v697 = vpop.xlane.xlu0 %696
    %698 = vadd.xlane.f32.xlu0 %v686
    %v699 = vpop.xlane.xlu0 %698
    %700 = vadd.xlane.f32.xlu0 %v687
    %v701 = vpop.xlane.xlu0 %700
    %702 = vadd.xlane.f32.xlu0 %v688
    %v703 = vpop.xlane.xlu0 %702
    %704 = vadd.xlane.f32.xlu0 %v689
    %v705 = vpop.xlane.xlu0 %704
    %v707 = vlaneseq
    %v708 = vshrl.u32 %v707, 7
    %v709 = vsub.s32 0, %v708
    %v710 = vrot.slane %v591, %v709
    %v711 = vlaneseq
    %v712 = vshrl.u32 %v711, 7
    %v713 = vsub.s32 1, %v712
    %v714 = vrot.slane %v591, %v713
    %v715 = vlaneseq
    %v716 = vshrl.u32 %v715, 7
    %v717 = vsub.s32 2, %v716
    %v718 = vrot.slane %v591, %v717
    %v719 = vlaneseq
    %v720 = vshrl.u32 %v719, 7
    %v721 = vsub.s32 3, %v720
    %v722 = vrot.slane %v591, %v721
    %v723 = vlaneseq
    %v724 = vshrl.u32 %v723, 7
    %v725 = vsub.s32 4, %v724
    %v726 = vrot.slane %v591, %v725
    %v727 = vlaneseq
    %v728 = vshrl.u32 %v727, 7
    %v729 = vsub.s32 5, %v728
    %v730 = vrot.slane %v591, %v729
    %v731 = vlaneseq
    %v732 = vshrl.u32 %v731, 7
    %v733 = vsub.s32 6, %v732
    %v734 = vrot.slane %v591, %v733
    %v735 = vlaneseq
    %v736 = vshrl.u32 %v735, 7
    %v737 = vsub.s32 7, %v736
    %v738 = vrot.slane %v591, %v737
    %v747 = vadd.f32 %v691, %v710
    %v748 = vadd.f32 %v693, %v714
    %v749 = vadd.f32 %v695, %v718
    %v750 = vadd.f32 %v697, %v722
    %v751 = vadd.f32 %v699, %v726
    %v752 = vadd.f32 %v701, %v730
    %v753 = vadd.f32 %v703, %v734
    %v754 = vadd.f32 %v705, %v738
    %763 = vset.pattern.permute.xlu0 0
    %764 = vperm.xlu0 %763, %v747
    %v765 = vpop.permute.xlu0 %764
    %766 = vset.pattern.permute.xlu0 0
    %767 = vperm.xlu0 %766, %v748
    %v768 = vpop.permute.xlu0 %767
    %769 = vset.pattern.permute.xlu0 0
    %770 = vperm.xlu0 %769, %v749
    %v771 = vpop.permute.xlu0 %770
    %772 = vset.pattern.permute.xlu0 0
    %773 = vperm.xlu0 %772, %v750
    %v774 = vpop.permute.xlu0 %773
    %775 = vset.pattern.permute.xlu0 0
    %776 = vperm.xlu0 %775, %v751
    %v777 = vpop.permute.xlu0 %776
    %778 = vset.pattern.permute.xlu0 0
    %779 = vperm.xlu0 %778, %v752
    %v780 = vpop.permute.xlu0 %779
    %781 = vset.pattern.permute.xlu0 0
    %782 = vperm.xlu0 %781, %v753
    %v783 = vpop.permute.xlu0 %782
    %784 = vset.pattern.permute.xlu0 0
    %785 = vperm.xlu0 %784, %v754
    %v786 = vpop.permute.xlu0 %785
    %v787 = vlaneseq
    %v788 = vand.u32 %v787, 127
    %v789 = vlaneseq
    %v790 = vshrl.u32 %v789, 7
    %v791 = vsub.s32 %v788, %v790
    %v792 = vrot.slane %v765, %v791
    %v793 = vlaneseq
    %v794 = vshrl.u32 %v793, 7
    %v795 = vsub.s32 %v788, %v794
    %v796 = vrot.slane %v768, %v795
    %v797 = vlaneseq
    %v798 = vshrl.u32 %v797, 7
    %v799 = vsub.s32 %v788, %v798
    %v800 = vrot.slane %v771, %v799
    %v801 = vlaneseq
    %v802 = vshrl.u32 %v801, 7
    %v803 = vsub.s32 %v788, %v802
    %v804 = vrot.slane %v774, %v803
    %v805 = vlaneseq
    %v806 = vshrl.u32 %v805, 7
    %v807 = vsub.s32 %v788, %v806
    %v808 = vrot.slane %v777, %v807
    %v809 = vlaneseq
    %v810 = vshrl.u32 %v809, 7
    %v811 = vsub.s32 %v788, %v810
    %v812 = vrot.slane %v780, %v811
    %v813 = vlaneseq
    %v814 = vshrl.u32 %v813, 7
    %v815 = vsub.s32 %v788, %v814
    %v816 = vrot.slane %v783, %v815
    %v817 = vlaneseq
    %v818 = vshrl.u32 %v817, 7
    %v819 = vsub.s32 %v788, %v818
    %v820 = vrot.slane %v786, %v819
    %vm821 = vcmask 1041409
    %v822 = vsel %vm821, %v796, %v792
    %vm823 = vcmask 1042434
    %v824 = vsel %vm823, %v800, %v822
    %vm825 = vcmask 1043459
    %v826 = vsel %vm825, %v804, %v824
    %vm827 = vcmask 1044484
    %v828 = vsel %vm827, %v808, %v826
    %vm829 = vcmask 1045509
    %v830 = vsel %vm829, %v812, %v828
    %vm831 = vcmask 1046534
    %v832 = vsel %vm831, %v816, %v830
    %vm833 = vcmask 1047559
    %v834 = vsel %vm833, %v820, %v832
    %vm836 = vcmask 64512
    %v837 = vsel %vm836, %v834, -inf
    %838 = vmax.xlane.f32.xlu0 %v837
    %v839 = vpop.xlane.xlu0 %838
    %v841 = vlaneseq
    %v842 = vshrl.u32 %v841, 7
    %v843 = vsub.s32 0, %v842
    %v844 = vrot.slane %v839, %v843
    %v845 = vlaneseq
    %v846 = vshrl.u32 %v845, 7
    %v847 = vsub.s32 1, %v846
    %v848 = vrot.slane %v839, %v847
    %v849 = vlaneseq
    %v850 = vshrl.u32 %v849, 7
    %v851 = vsub.s32 2, %v850
    %v852 = vrot.slane %v839, %v851
    %v853 = vlaneseq
    %v854 = vshrl.u32 %v853, 7
    %v855 = vsub.s32 3, %v854
    %v856 = vrot.slane %v839, %v855
    %v857 = vlaneseq
    %v858 = vshrl.u32 %v857, 7
    %v859 = vsub.s32 4, %v858
    %v860 = vrot.slane %v839, %v859
    %v861 = vlaneseq
    %v862 = vshrl.u32 %v861, 7
    %v863 = vsub.s32 5, %v862
    %v864 = vrot.slane %v839, %v863
    %v865 = vlaneseq
    %v866 = vshrl.u32 %v865, 7
    %v867 = vsub.s32 6, %v866
    %v868 = vrot.slane %v839, %v867
    %v869 = vlaneseq
    %v870 = vshrl.u32 %v869, 7
    %v871 = vsub.s32 7, %v870
    %v872 = vrot.slane %v839, %v871
    %v881 = vsub.f32 %v747, %v844
    %v882 = vsub.f32 %v748, %v848
    %v883 = vsub.f32 %v749, %v852
    %v884 = vsub.f32 %v750, %v856
    %v885 = vsub.f32 %v751, %v860
    %v886 = vsub.f32 %v752, %v864
    %v887 = vsub.f32 %v753, %v868
    %v888 = vsub.f32 %v754, %v872
    %v889 = vmul.f32 %v881, 1.442695
    %v890 = vpow.pop %v889
    %v891 = vmul.f32 %v882, 1.442695
    %v892 = vpow.pop %v891
    %v893 = vmul.f32 %v883, 1.442695
    %v894 = vpow.pop %v893
    %v895 = vmul.f32 %v884, 1.442695
    %v896 = vpow.pop %v895
    %v897 = vmul.f32 %v885, 1.442695
    %v898 = vpow.pop %v897
    %v899 = vmul.f32 %v886, 1.442695
    %v900 = vpow.pop %v899
    %v901 = vmul.f32 %v887, 1.442695
    %v902 = vpow.pop %v901
    %v903 = vmul.f32 %v888, 1.442695
    %v904 = vpow.pop %v903
    %913 = vset.pattern.permute.xlu0 0
    %914 = vperm.xlu0 %913, %v890
    %v915 = vpop.permute.xlu0 %914
    %916 = vset.pattern.permute.xlu0 0
    %917 = vperm.xlu0 %916, %v892
    %v918 = vpop.permute.xlu0 %917
    %919 = vset.pattern.permute.xlu0 0
    %920 = vperm.xlu0 %919, %v894
    %v921 = vpop.permute.xlu0 %920
    %922 = vset.pattern.permute.xlu0 0
    %923 = vperm.xlu0 %922, %v896
    %v924 = vpop.permute.xlu0 %923
    %925 = vset.pattern.permute.xlu0 0
    %926 = vperm.xlu0 %925, %v898
    %v927 = vpop.permute.xlu0 %926
    %928 = vset.pattern.permute.xlu0 0
    %929 = vperm.xlu0 %928, %v900
    %v930 = vpop.permute.xlu0 %929
    %931 = vset.pattern.permute.xlu0 0
    %932 = vperm.xlu0 %931, %v902
    %v933 = vpop.permute.xlu0 %932
    %934 = vset.pattern.permute.xlu0 0
    %935 = vperm.xlu0 %934, %v904
    %v936 = vpop.permute.xlu0 %935
    %v937 = vlaneseq
    %v938 = vshrl.u32 %v937, 7
    %v939 = vsub.s32 %v788, %v938
    %v940 = vrot.slane %v915, %v939
    %v941 = vlaneseq
    %v942 = vshrl.u32 %v941, 7
    %v943 = vsub.s32 %v788, %v942
    %v944 = vrot.slane %v918, %v943
    %v945 = vlaneseq
    %v946 = vshrl.u32 %v945, 7
    %v947 = vsub.s32 %v788, %v946
    %v948 = vrot.slane %v921, %v947
    %v949 = vlaneseq
    %v950 = vshrl.u32 %v949, 7
    %v951 = vsub.s32 %v788, %v950
    %v952 = vrot.slane %v924, %v951
    %v953 = vlaneseq
    %v954 = vshrl.u32 %v953, 7
    %v955 = vsub.s32 %v788, %v954
    %v956 = vrot.slane %v927, %v955
    %v957 = vlaneseq
    %v958 = vshrl.u32 %v957, 7
    %v959 = vsub.s32 %v788, %v958
    %v960 = vrot.slane %v930, %v959
    %v961 = vlaneseq
    %v962 = vshrl.u32 %v961, 7
    %v963 = vsub.s32 %v788, %v962
    %v964 = vrot.slane %v933, %v963
    %v965 = vlaneseq
    %v966 = vshrl.u32 %v965, 7
    %v967 = vsub.s32 %v788, %v966
    %v968 = vrot.slane %v936, %v967
    %v969 = vsel %vm821, %v944, %v940
    %v970 = vsel %vm823, %v948, %v969
    %v971 = vsel %vm825, %v952, %v970
    %v972 = vsel %vm827, %v956, %v971
    %v973 = vsel %vm829, %v960, %v972
    %v974 = vsel %vm831, %v964, %v973
    %v975 = vsel %vm833, %v968, %v974
    %v977 = vsel %vm836, %v975, 0.0
    %978 = vadd.xlane.f32.xlu0 %v977
    %v979 = vpop.xlane.xlu0 %978
    %v981 = vlaneseq
    %v982 = vshrl.u32 %v981, 7
    %v983 = vsub.s32 0, %v982
    %v984 = vrot.slane %v979, %v983
    %v985 = vlaneseq
    %v986 = vshrl.u32 %v985, 7
    %v987 = vsub.s32 1, %v986
    %v988 = vrot.slane %v979, %v987
    %v989 = vlaneseq
    %v990 = vshrl.u32 %v989, 7
    %v991 = vsub.s32 2, %v990
    %v992 = vrot.slane %v979, %v991
    %v993 = vlaneseq
    %v994 = vshrl.u32 %v993, 7
    %v995 = vsub.s32 3, %v994
    %v996 = vrot.slane %v979, %v995
    %v997 = vlaneseq
    %v998 = vshrl.u32 %v997, 7
    %v999 = vsub.s32 4, %v998
    %v1000 = vrot.slane %v979, %v999
    %v1001 = vlaneseq
    %v1002 = vshrl.u32 %v1001, 7
    %v1003 = vsub.s32 5, %v1002
    %v1004 = vrot.slane %v979, %v1003
    %v1005 = vlaneseq
    %v1006 = vshrl.u32 %v1005, 7
    %v1007 = vsub.s32 6, %v1006
    %v1008 = vrot.slane %v979, %v1007
    %v1009 = vlaneseq
    %v1010 = vshrl.u32 %v1009, 7
    %v1011 = vsub.s32 7, %v1010
    %v1012 = vrot.slane %v979, %v1011
    %v1021 = vrcp.pop %v984
    %v1022 = vmul.f32 %v890, %v1021
    %v1023 = vrcp.pop %v988
    %v1024 = vmul.f32 %v892, %v1023
    %v1025 = vrcp.pop %v992
    %v1026 = vmul.f32 %v894, %v1025
    %v1027 = vrcp.pop %v996
    %v1028 = vmul.f32 %v896, %v1027
    %v1029 = vrcp.pop %v1000
    %v1030 = vmul.f32 %v898, %v1029
    %v1031 = vrcp.pop %v1004
    %v1032 = vmul.f32 %v900, %v1031
    %v1033 = vrcp.pop %v1008
    %v1034 = vmul.f32 %v902, %v1033
    %v1035 = vrcp.pop %v1012
    %v1036 = vmul.f32 %v904, %v1035
    %1038 = vset.pattern.permute.xlu0 0
    %1039 = vperm.xlu0 %1038, %v1022
    %v1040 = vpop.permute.xlu0 %1039
    %1043 = vset.pattern.permute.xlu0 0
    %1044 = vperm.xlu0 %1043, %v1024
    %v1045 = vpop.permute.xlu0 %1044
    %1048 = vset.pattern.permute.xlu0 0
    %1049 = vperm.xlu0 %1048, %v1026
    %v1050 = vpop.permute.xlu0 %1049
    %1053 = vset.pattern.permute.xlu0 0
    %1054 = vperm.xlu0 %1053, %v1028
    %v1055 = vpop.permute.xlu0 %1054
    %1058 = vset.pattern.permute.xlu0 0
    %1059 = vperm.xlu0 %1058, %v1030
    %v1060 = vpop.permute.xlu0 %1059
    %1063 = vset.pattern.permute.xlu0 0
    %1064 = vperm.xlu0 %1063, %v1032
    %v1065 = vpop.permute.xlu0 %1064
    %1068 = vset.pattern.permute.xlu0 0
    %1069 = vperm.xlu0 %1068, %v1034
    %v1070 = vpop.permute.xlu0 %1069
    %1073 = vset.pattern.permute.xlu0 0
    %1074 = vperm.xlu0 %1073, %v1036
    %v1075 = vpop.permute.xlu0 %1074
    %v1077 = vmul.f32 %v1040, %v469
    %v1078 = vmul.f32 %v1045, %v470
    %v1079 = vmul.f32 %v1050, %v471
    %v1080 = vmul.f32 %v1055, %v472
    %v1081 = vmul.f32 %v1060, %v473
    %v1082 = vmul.f32 %v1065, %v474
    %v1083 = vmul.f32 %v1070, %v475
    %v1084 = vmul.f32 %v1075, %v476
    %v1085 = vrot.slane %v1077, 4
    %v1086 = vadd.f32 %v1077, %v1085
    %v1087 = vrot.slane %v1086, 2
    %v1088 = vadd.f32 %v1086, %v1087
    %v1089 = vrot.slane %v1088, 1
    %v1090 = vadd.f32 %v1088, %v1089
    %v1091 = vrot.slane %v1078, 4
    %v1092 = vadd.f32 %v1078, %v1091
    %v1093 = vrot.slane %v1092, 2
    %v1094 = vadd.f32 %v1092, %v1093
    %v1095 = vrot.slane %v1094, 1
    %v1096 = vadd.f32 %v1094, %v1095
    %v1097 = vrot.slane %v1079, 4
    %v1098 = vadd.f32 %v1079, %v1097
    %v1099 = vrot.slane %v1098, 2
    %v1100 = vadd.f32 %v1098, %v1099
    %v1101 = vrot.slane %v1100, 1
    %v1102 = vadd.f32 %v1100, %v1101
    %v1103 = vrot.slane %v1080, 4
    %v1104 = vadd.f32 %v1080, %v1103
    %v1105 = vrot.slane %v1104, 2
    %v1106 = vadd.f32 %v1104, %v1105
    %v1107 = vrot.slane %v1106, 1
    %v1108 = vadd.f32 %v1106, %v1107
    %v1109 = vrot.slane %v1081, 4
    %v1110 = vadd.f32 %v1081, %v1109
    %v1111 = vrot.slane %v1110, 2
    %v1112 = vadd.f32 %v1110, %v1111
    %v1113 = vrot.slane %v1112, 1
    %v1114 = vadd.f32 %v1112, %v1113
    %v1115 = vrot.slane %v1082, 4
    %v1116 = vadd.f32 %v1082, %v1115
    %v1117 = vrot.slane %v1116, 2
    %v1118 = vadd.f32 %v1116, %v1117
    %v1119 = vrot.slane %v1118, 1
    %v1120 = vadd.f32 %v1118, %v1119
    %v1121 = vrot.slane %v1083, 4
    %v1122 = vadd.f32 %v1083, %v1121
    %v1123 = vrot.slane %v1122, 2
    %v1124 = vadd.f32 %v1122, %v1123
    %v1125 = vrot.slane %v1124, 1
    %v1126 = vadd.f32 %v1124, %v1125
    %v1127 = vrot.slane %v1084, 4
    %v1128 = vadd.f32 %v1084, %v1127
    %v1129 = vrot.slane %v1128, 2
    %v1130 = vadd.f32 %v1128, %v1129
    %v1131 = vrot.slane %v1130, 1
    %v1132 = vadd.f32 %v1130, %v1131
    %s1133 = smul.u32 1, 1
    %s1134 = sshll.u32 %s1133, 4
    %1135 = dma.done [#allocation3], %s1134
    %s1136 = sshll.u32 %s1133, 4
    %1137 = dma.done %s134, %s1136
    %s1138 = sshll.u32 %s1133, 4
    %1139 = dma.done %s182, %s1138
    %s1140 = sshll.u32 %s1133, 4
    %1141 = dma.done %s230, %s1140
    %s1142 = sshll.u32 %s1133, 4
    %1143 = dma.done %s278, %s1142
    %s1144 = sshll.u32 %s1133, 4
    %1145 = dma.done %s326, %s1144
    %s1146 = sshll.u32 %s1133, 4
    %1147 = dma.done %s374, %s1146
    %s1148 = sshll.u32 %s1133, 4
    %1149 = dma.done %s422, %s1148
    %v1150 = vld [vmem:[#allocation2] sm:$0xff]
    %v1159 = vsel %vm821, %v1096, %v1090
    %v1160 = vsel %vm823, %v1102, %v1159
    %v1161 = vsel %vm825, %v1108, %v1160
    %v1162 = vsel %vm827, %v1114, %v1161
    %v1163 = vsel %vm829, %v1120, %v1162
    %v1164 = vsel %vm831, %v1126, %v1163
    %v1165 = vsel %vm833, %v1132, %v1164
    %v1167 = vld [vmem:[#allocation8] sm:$0xff]
    %v1168 = vld [vmem:[#allocation8 + $0x8] sm:$0xf]
    %v1169 = vld [vmem:[#allocation8 + $0xc] sm:$0xff]
    %v1170 = vld [vmem:[#allocation8 + $0x14] sm:$0xf]
    %v1171 = vld [vmem:[#allocation8 + $0x18] sm:$0xff]
    %v1172 = vld [vmem:[#allocation8 + $0x20] sm:$0xf]
    %v1173 = vld [vmem:[#allocation8 + $0x24] sm:$0xff]
    %v1174 = vld [vmem:[#allocation8 + $0x2c] sm:$0xf]
    %v1175 = vld [vmem:[#allocation8 + $0x30] sm:$0xff]
    %v1176 = vld [vmem:[#allocation8 + $0x38] sm:$0xf]
    %v1177 = vld [vmem:[#allocation8 + $0x3c] sm:$0xff]
    %v1178 = vld [vmem:[#allocation8 + $0x44] sm:$0xf]
    %v1179 = vld [vmem:[#allocation8 + $0x48] sm:$0xff]
    %v1180 = vld [vmem:[#allocation8 + $0x50] sm:$0xf]
    %v1181 = vld [vmem:[#allocation8 + $0x54] sm:$0xff]
    %v1182 = vld [vmem:[#allocation8 + $0x5c] sm:$0xf]
    %v1183 = vld [vmem:[#allocation8 + $0x60] sm:$0xff]
    %v1184 = vld [vmem:[#allocation8 + $0x68] sm:$0xf]
    %v1185 = vld [vmem:[#allocation8 + $0x6c] sm:$0xff]
    %v1186 = vld [vmem:[#allocation8 + $0x74] sm:$0xf]
    %v1187 = vld [vmem:[#allocation8 + $0x78] sm:$0xff]
    %v1188 = vld [vmem:[#allocation8 + $0x80] sm:$0xf]
    %v1189 = vld [vmem:[#allocation8 + $0x84] sm:$0xff]
    %v1190 = vld [vmem:[#allocation8 + $0x8c] sm:$0xf]
    %v1191 = vld [vmem:[#allocation8 + $0x90] sm:$0xff]
    %v1192 = vld [vmem:[#allocation8 + $0x98] sm:$0xf]
    %v1193 = vld [vmem:[#allocation8 + $0x9c] sm:$0xff]
    %v1194 = vld [vmem:[#allocation8 + $0xa4] sm:$0xf]
    %v1195 = vld [vmem:[#allocation8 + $0xa8] sm:$0xff]
    %v1196 = vld [vmem:[#allocation8 + $0xb0] sm:$0xf]
    %v1197 = vld [vmem:[#allocation8 + $0xb4] sm:$0xff]
    %v1198 = vld [vmem:[#allocation8 + $0xbc] sm:$0xf]
    %v1199 = vld [vmem:[#allocation8 + $0xc0] sm:$0xff]
    %v1200 = vld [vmem:[#allocation8 + $0xc8] sm:$0xf]
    %v1201 = vld [vmem:[#allocation8 + $0xcc] sm:$0xff]
    %v1202 = vld [vmem:[#allocation8 + $0xd4] sm:$0xf]
    %v1203 = vld [vmem:[#allocation8 + $0xd8] sm:$0xff]
    %v1204 = vld [vmem:[#allocation8 + $0xe0] sm:$0xf]
    %v1205 = vld [vmem:[#allocation8 + $0xe4] sm:$0xff]
    %v1206 = vld [vmem:[#allocation8 + $0xec] sm:$0xf]
    %v1207 = vld [vmem:[#allocation8 + $0xf0] sm:$0xff]
    %v1208 = vld [vmem:[#allocation8 + $0xf8] sm:$0xf]
    %v1209 = vld [vmem:[#allocation8 + $0xfc] sm:$0xff]
    %v1210 = vld [vmem:[#allocation8 + $0x104] sm:$0xf]
    %v1211 = vld [vmem:[#allocation8 + $0x108] sm:$0xff]
    %v1212 = vld [vmem:[#allocation8 + $0x110] sm:$0xf]
    %v1213 = vld [vmem:[#allocation8 + $0x114] sm:$0xff]
    %v1214 = vld [vmem:[#allocation8 + $0x11c] sm:$0xf]
    %v1215 = vld [vmem:[#allocation8 + $0x120] sm:$0xff]
    %v1216 = vld [vmem:[#allocation8 + $0x128] sm:$0xf]
    %v1217 = vld [vmem:[#allocation8 + $0x12c] sm:$0xff]
    %v1218 = vld [vmem:[#allocation8 + $0x134] sm:$0xf]
    %v1219 = vld [vmem:[#allocation8 + $0x138] sm:$0xff]
    %v1220 = vld [vmem:[#allocation8 + $0x140] sm:$0xf]
    %v1221 = vld [vmem:[#allocation8 + $0x144] sm:$0xff]
    %v1222 = vld [vmem:[#allocation8 + $0x14c] sm:$0xf]
    %v1223 = vld [vmem:[#allocation8 + $0x150] sm:$0xff]
    %v1224 = vld [vmem:[#allocation8 + $0x158] sm:$0xf]
    %v1225 = vld [vmem:[#allocation8 + $0x15c] sm:$0xff]
    %v1226 = vld [vmem:[#allocation8 + $0x164] sm:$0xf]
    %v1227 = vld [vmem:[#allocation8 + $0x168] sm:$0xff]
    %v1228 = vld [vmem:[#allocation8 + $0x170] sm:$0xf]
    %v1229 = vld [vmem:[#allocation8 + $0x174] sm:$0xff]
    %v1230 = vld [vmem:[#allocation8 + $0x17c] sm:$0xf]
    %v1231 = vld [vmem:[#allocation8 + $0x180] sm:$0xff]
    %v1232 = vld [vmem:[#allocation8 + $0x188] sm:$0xf]
    %v1233 = vld [vmem:[#allocation8 + $0x18c] sm:$0xff]
    %v1234 = vld [vmem:[#allocation8 + $0x194] sm:$0xf]
    %v1235 = vld [vmem:[#allocation8 + $0x198] sm:$0xff]
    %v1236 = vld [vmem:[#allocation8 + $0x1a0] sm:$0xf]
    %v1237 = vld [vmem:[#allocation8 + $0x1a4] sm:$0xff]
    %v1238 = vld [vmem:[#allocation8 + $0x1ac] sm:$0xf]
    %v1239 = vld [vmem:[#allocation8 + $0x1b0] sm:$0xff]
    %v1240 = vld [vmem:[#allocation8 + $0x1b8] sm:$0xf]
    %v1241 = vld [vmem:[#allocation8 + $0x1bc] sm:$0xff]
    %v1242 = vld [vmem:[#allocation8 + $0x1c4] sm:$0xf]
    %v1243 = vld [vmem:[#allocation8 + $0x1c8] sm:$0xff]
    %v1244 = vld [vmem:[#allocation8 + $0x1d0] sm:$0xf]
    %v1245 = vld [vmem:[#allocation8 + $0x1d4] sm:$0xff]
    %v1246 = vld [vmem:[#allocation8 + $0x1dc] sm:$0xf]
    %v1247 = vld [vmem:[#allocation8 + $0x1e0] sm:$0xff]
    %v1248 = vld [vmem:[#allocation8 + $0x1e8] sm:$0xf]
    %v1249 = vld [vmem:[#allocation8 + $0x1ec] sm:$0xff]
    %v1250 = vld [vmem:[#allocation8 + $0x1f4] sm:$0xf]
    %v1251 = vld [vmem:[#allocation8 + $0x1f8] sm:$0xff]
    %v1252 = vld [vmem:[#allocation8 + $0x200] sm:$0xf]
    %v1253 = vld [vmem:[#allocation8 + $0x204] sm:$0xff]
    %v1254 = vld [vmem:[#allocation8 + $0x20c] sm:$0xf]
    %v1255 = vld [vmem:[#allocation8 + $0x210] sm:$0xff]
    %v1256 = vld [vmem:[#allocation8 + $0x218] sm:$0xf]
    %v1257 = vld [vmem:[#allocation8 + $0x21c] sm:$0xff]
    %v1258 = vld [vmem:[#allocation8 + $0x224] sm:$0xf]
    %v1259 = vld [vmem:[#allocation8 + $0x228] sm:$0xff]
    %v1260 = vld [vmem:[#allocation8 + $0x230] sm:$0xf]
    %v1261 = vld [vmem:[#allocation8 + $0x234] sm:$0xff]
    %v1262 = vld [vmem:[#allocation8 + $0x23c] sm:$0xf]
    %v1263 = vld [vmem:[%s7 + $0x1] sm:$0x1]
    %v1264 = vld [vmem:[%s7 + $0x2] sm:$0x1]
    %v1265 = vld [vmem:[%s7 + $0x3] sm:$0x1]
    %v1266 = vld [vmem:[%s7 + $0x4] sm:$0x1]
    %v1267 = vld [vmem:[%s2] sm:$0xff]
    %v1268 = vpack.c.bf16 %v1150, %v1150
    %v1269 = vpack.c.bf16 %v1165, %v1165
    %v1334 = vunpack.c.l.b16 %v1167
    %v1335 = vunpack.c.h.b16 %v1167
    %v1336 = vunpack.c.l.b16 %v1168
    %v1337 = vunpack.c.l.b16 %v1169
    %v1338 = vunpack.c.h.b16 %v1169
    %v1339 = vunpack.c.l.b16 %v1170
    %v1340 = vunpack.c.l.b16 %v1171
    %v1341 = vunpack.c.h.b16 %v1171
    %v1342 = vunpack.c.l.b16 %v1172
    %v1343 = vunpack.c.l.b16 %v1173
    %v1344 = vunpack.c.h.b16 %v1173
    %v1345 = vunpack.c.l.b16 %v1174
    %v1346 = vunpack.c.l.b16 %v1175
    %v1347 = vunpack.c.h.b16 %v1175
    %v1348 = vunpack.c.l.b16 %v1176
    %v1349 = vunpack.c.l.b16 %v1177
    %v1350 = vunpack.c.h.b16 %v1177
    %v1351 = vunpack.c.l.b16 %v1178
    %v1352 = vunpack.c.l.b16 %v1179
    %v1353 = vunpack.c.h.b16 %v1179
    %v1354 = vunpack.c.l.b16 %v1180
    %v1355 = vunpack.c.l.b16 %v1181
    %v1356 = vunpack.c.h.b16 %v1181
    %v1357 = vunpack.c.l.b16 %v1182
    %v1358 = vunpack.c.l.b16 %v1183
    %v1359 = vunpack.c.h.b16 %v1183
    %v1360 = vunpack.c.l.b16 %v1184
    %v1361 = vunpack.c.l.b16 %v1185
    %v1362 = vunpack.c.h.b16 %v1185
    %v1363 = vunpack.c.l.b16 %v1186
    %v1364 = vunpack.c.l.b16 %v1187
    %v1365 = vunpack.c.h.b16 %v1187
    %v1366 = vunpack.c.l.b16 %v1188
    %v1367 = vunpack.c.l.b16 %v1189
    %v1368 = vunpack.c.h.b16 %v1189
    %v1369 = vunpack.c.l.b16 %v1190
    %v1370 = vunpack.c.l.b16 %v1191
    %v1371 = vunpack.c.h.b16 %v1191
    %v1372 = vunpack.c.l.b16 %v1192
    %v1373 = vunpack.c.l.b16 %v1193
    %v1374 = vunpack.c.h.b16 %v1193
    %v1375 = vunpack.c.l.b16 %v1194
    %v1376 = vunpack.c.l.b16 %v1195
    %v1377 = vunpack.c.h.b16 %v1195
    %v1378 = vunpack.c.l.b16 %v1196
    %v1379 = vunpack.c.l.b16 %v1197
    %v1380 = vunpack.c.h.b16 %v1197
    %v1381 = vunpack.c.l.b16 %v1198
    %v1382 = vunpack.c.l.b16 %v1199
    %v1383 = vunpack.c.h.b16 %v1199
    %v1384 = vunpack.c.l.b16 %v1200
    %v1385 = vunpack.c.l.b16 %v1201
    %v1386 = vunpack.c.h.b16 %v1201
    %v1387 = vunpack.c.l.b16 %v1202
    %v1388 = vunpack.c.l.b16 %v1203
    %v1389 = vunpack.c.h.b16 %v1203
    %v1390 = vunpack.c.l.b16 %v1204
    %v1391 = vunpack.c.l.b16 %v1205
    %v1392 = vunpack.c.h.b16 %v1205
    %v1393 = vunpack.c.l.b16 %v1206
    %v1394 = vunpack.c.l.b16 %v1207
    %v1395 = vunpack.c.h.b16 %v1207
    %v1396 = vunpack.c.l.b16 %v1208
    %v1397 = vunpack.c.l.b16 %v1209
    %v1398 = vunpack.c.h.b16 %v1209
    %v1399 = vunpack.c.l.b16 %v1210
    %v1400 = vunpack.c.l.b16 %v1211
    %v1401 = vunpack.c.h.b16 %v1211
    %v1402 = vunpack.c.l.b16 %v1212
    %v1403 = vunpack.c.l.b16 %v1213
    %v1404 = vunpack.c.h.b16 %v1213
    %v1405 = vunpack.c.l.b16 %v1214
    %v1406 = vunpack.c.l.b16 %v1215
    %v1407 = vunpack.c.h.b16 %v1215
    %v1408 = vunpack.c.l.b16 %v1216
    %v1409 = vunpack.c.l.b16 %v1217
    %v1410 = vunpack.c.h.b16 %v1217
    %v1411 = vunpack.c.l.b16 %v1218
    %v1412 = vunpack.c.l.b16 %v1219
    %v1413 = vunpack.c.h.b16 %v1219
    %v1414 = vunpack.c.l.b16 %v1220
    %v1415 = vunpack.c.l.b16 %v1221
    %v1416 = vunpack.c.h.b16 %v1221
    %v1417 = vunpack.c.l.b16 %v1222
    %v1418 = vunpack.c.l.b16 %v1223
    %v1419 = vunpack.c.h.b16 %v1223
    %v1420 = vunpack.c.l.b16 %v1224
    %v1421 = vunpack.c.l.b16 %v1225
    %v1422 = vunpack.c.h.b16 %v1225
    %v1423 = vunpack.c.l.b16 %v1226
    %v1424 = vunpack.c.l.b16 %v1227
    %v1425 = vunpack.c.h.b16 %v1227
    %v1426 = vunpack.c.l.b16 %v1228
    %v1427 = vunpack.c.l.b16 %v1229
    %v1428 = vunpack.c.h.b16 %v1229
    %v1429 = vunpack.c.l.b16 %v1230
    %v1430 = vpack.c.b16 %v1337, %v1334
    %v1431 = vpack.c.b16 %v1338, %v1335
    %v1432 = vpack.c.b16 %v1339, %v1336
    %v1433 = vpack.c.b16 %v1343, %v1340
    %v1434 = vpack.c.b16 %v1344, %v1341
    %v1435 = vpack.c.b16 %v1345, %v1342
    %v1436 = vpack.c.b16 %v1349, %v1346
    %v1437 = vpack.c.b16 %v1350, %v1347
    %v1438 = vpack.c.b16 %v1351, %v1348
    %v1439 = vpack.c.b16 %v1355, %v1352
    %v1440 = vpack.c.b16 %v1356, %v1353
    %v1441 = vpack.c.b16 %v1357, %v1354
    %v1442 = vpack.c.b16 %v1361, %v1358
    %v1443 = vpack.c.b16 %v1362, %v1359
    %v1444 = vpack.c.b16 %v1363, %v1360
    %v1445 = vpack.c.b16 %v1367, %v1364
    %v1446 = vpack.c.b16 %v1368, %v1365
    %v1447 = vpack.c.b16 %v1369, %v1366
    %v1448 = vpack.c.b16 %v1373, %v1370
    %v1449 = vpack.c.b16 %v1374, %v1371
    %v1450 = vpack.c.b16 %v1375, %v1372
    %v1451 = vpack.c.b16 %v1379, %v1376
    %v1452 = vpack.c.b16 %v1380, %v1377
    %v1453 = vpack.c.b16 %v1381, %v1378
    %v1454 = vpack.c.b16 %v1385, %v1382
    %v1455 = vpack.c.b16 %v1386, %v1383
    %v1456 = vpack.c.b16 %v1387, %v1384
    %v1457 = vpack.c.b16 %v1391, %v1388
    %v1458 = vpack.c.b16 %v1392, %v1389
    %v1459 = vpack.c.b16 %v1393, %v1390
    %v1460 = vpack.c.b16 %v1397, %v1394
    %v1461 = vpack.c.b16 %v1398, %v1395
    %v1462 = vpack.c.b16 %v1399, %v1396
    %v1463 = vpack.c.b16 %v1403, %v1400
    %v1464 = vpack.c.b16 %v1404, %v1401
    %v1465 = vpack.c.b16 %v1405, %v1402
    %v1466 = vpack.c.b16 %v1409, %v1406
    %v1467 = vpack.c.b16 %v1410, %v1407
    %v1468 = vpack.c.b16 %v1411, %v1408
    %v1469 = vpack.c.b16 %v1415, %v1412
    %v1470 = vpack.c.b16 %v1416, %v1413
    %v1471 = vpack.c.b16 %v1417, %v1414
    %v1472 = vpack.c.b16 %v1421, %v1418
    %v1473 = vpack.c.b16 %v1422, %v1419
    %v1474 = vpack.c.b16 %v1423, %v1420
    %v1475 = vpack.c.b16 %v1427, %v1424
    %v1476 = vpack.c.b16 %v1428, %v1425
    %v1477 = vpack.c.b16 %v1429, %v1426
    %1526 = vmatprep.subr.bf16.mxu0 %v1431
    %1527 = vmatpush1.bf16.msra.mxu0 %v1430
    %1528 = vmatprep.subr.bf16.mxu0 %v1434
    %1529 = vmatpush1.bf16.msra.mxu0 %v1433
    %1530 = vmatprep.subr.bf16.mxu0 %v1437
    %1531 = vmatpush1.bf16.msra.mxu0 %v1436
    %1532 = vmatprep.subr.bf16.mxu0 %v1440
    %1533 = vmatpush1.bf16.msra.mxu0 %v1439
    %1534 = vmatprep.subr.bf16.mxu0 %v1443
    %1535 = vmatpush1.bf16.msra.mxu0 %v1442
    %1536 = vmatprep.subr.bf16.mxu0 %v1446
    %1537 = vmatpush1.bf16.msra.mxu0 %v1445
    %1538 = vmatprep.subr.bf16.mxu0 %v1449
    %1539 = vmatpush1.bf16.msra.mxu0 %v1448
    %1540 = vmatprep.subr.bf16.mxu0 %v1452
    %1541 = vmatpush1.bf16.msra.mxu0 %v1451
    %1542 = vmatprep.subr.bf16.mxu0 %v1455
    %1543 = vmatpush1.bf16.msra.mxu0 %v1454
    %1544 = vmatprep.subr.bf16.mxu0 %v1458
    %1545 = vmatpush1.bf16.msra.mxu0 %v1457
    %1546 = vmatprep.subr.bf16.mxu0 %v1461
    %1547 = vmatpush1.bf16.msra.mxu0 %v1460
    %1548 = vmatprep.subr.bf16.mxu0 %v1464
    %1549 = vmatpush1.bf16.msra.mxu0 %v1463
    %1550 = vmatprep.subr.bf16.mxu0 %v1467
    %1551 = vmatpush1.bf16.msra.mxu0 %v1466
    %1552 = vmatprep.subr.bf16.mxu0 %v1470
    %1553 = vmatpush1.bf16.msra.mxu0 %v1469
    %1554 = vmatprep.subr.bf16.mxu0 %v1473
    %1555 = vmatpush1.bf16.msra.mxu0 %v1472
    %1556 = vmatprep.subr.bf16.mxu0 %v1476
    %1557 = vmatpush1.bf16.msra.mxu0 %v1475
    %1558 = vmatprep.mubr.bf16.mxu0 %v1269
    %1559 = vmatmul.mubr.bf16.gmra.mrb[0].mxu0 %v1268
    %v1560 = vpop.f32.mrb[0].mxu0
    %v1561 = vadd.f32 0.0, %v1560
    %v1562 = vpop.f32.mrb[0].mxu0
    %v1563 = vadd.f32 0.0, %v1562
    %v1564 = vpop.f32.mrb[0].mxu0
    %v1565 = vpop.f32.mrb[0].mxu0
    %1566 = vdwg.mxu0
    %1567 = vmatprep.subr.bf16.mxu0 0
    %1568 = vmatpush1.bf16.msra.mxu0 %v1432
    %1569 = vmatprep.subr.bf16.mxu0 0
    %1570 = vmatpush1.bf16.msra.mxu0 %v1435
    %1571 = vmatprep.subr.bf16.mxu0 0
    %1572 = vmatpush1.bf16.msra.mxu0 %v1438
    %1573 = vmatprep.subr.bf16.mxu0 0
    %1574 = vmatpush1.bf16.msra.mxu0 %v1441
    %1575 = vmatprep.subr.bf16.mxu0 0
    %1576 = vmatpush1.bf16.msra.mxu0 %v1444
    %1577 = vmatprep.subr.bf16.mxu0 0
    %1578 = vmatpush1.bf16.msra.mxu0 %v1447
    %1579 = vmatprep.subr.bf16.mxu0 0
    %1580 = vmatpush1.bf16.msra.mxu0 %v1450
    %1581 = vmatprep.subr.bf16.mxu0 0
    %1582 = vmatpush1.bf16.msra.mxu0 %v1453
    %1583 = vmatprep.subr.bf16.mxu0 0
    %1584 = vmatpush1.bf16.msra.mxu0 %v1456
    %1585 = vmatprep.subr.bf16.mxu0 0
    %1586 = vmatpush1.bf16.msra.mxu0 %v1459
    %1587 = vmatprep.subr.bf16.mxu0 0
    %1588 = vmatpush1.bf16.msra.mxu0 %v1462
    %1589 = vmatprep.subr.bf16.mxu0 0
    %1590 = vmatpush1.bf16.msra.mxu0 %v1465
    %1591 = vmatprep.subr.bf16.mxu0 0
    %1592 = vmatpush1.bf16.msra.mxu0 %v1468
    %1593 = vmatprep.subr.bf16.mxu0 0
    %1594 = vmatpush1.bf16.msra.mxu0 %v1471
    %1595 = vmatprep.subr.bf16.mxu0 0
    %1596 = vmatpush1.bf16.msra.mxu0 %v1474
    %1597 = vmatprep.subr.bf16.mxu0 0
    %1598 = vmatpush1.bf16.msra.mxu0 %v1477
    %1599 = vmatprep.mubr.bf16.mxu0 %v1269
    %1600 = vmatmul.mubr.bf16.gmra.mrb[0].mxu0 %v1268
    %v1601 = vpop.f32.mrb[0].mxu0
    %v1602 = vadd.f32 0.0, %v1601
    %v1603 = vpop.f32.mrb[0].mxu0
    %v1604 = vpop.f32.mrb[0].mxu0
    %v1605 = vpop.f32.mrb[0].mxu0
    %1606 = vdwg.mxu0
    %v1607 = vpack.c.bf16 %v1267, %v1267
    %v1640 = vunpack.c.l.b16 %v1231
    %v1641 = vunpack.c.h.b16 %v1231
    %v1642 = vunpack.c.l.b16 %v1232
    %v1643 = vunpack.c.l.b16 %v1233
    %v1644 = vunpack.c.h.b16 %v1233
    %v1645 = vunpack.c.l.b16 %v1234
    %v1646 = vunpack.c.l.b16 %v1235
    %v1647 = vunpack.c.h.b16 %v1235
    %v1648 = vunpack.c.l.b16 %v1236
    %v1649 = vunpack.c.l.b16 %v1237
    %v1650 = vunpack.c.h.b16 %v1237
    %v1651 = vunpack.c.l.b16 %v1238
    %v1652 = vunpack.c.l.b16 %v1239
    %v1653 = vunpack.c.h.b16 %v1239
    %v1654 = vunpack.c.l.b16 %v1240
    %v1655 = vunpack.c.l.b16 %v1241
    %v1656 = vunpack.c.h.b16 %v1241
    %v1657 = vunpack.c.l.b16 %v1242
    %v1658 = vunpack.c.l.b16 %v1243
    %v1659 = vunpack.c.h.b16 %v1243
    %v1660 = vunpack.c.l.b16 %v1244
    %v1661 = vunpack.c.l.b16 %v1245
    %v1662 = vunpack.c.h.b16 %v1245
    %v1663 = vunpack.c.l.b16 %v1246
    %v1664 = vunpack.c.l.b16 %v1247
    %v1665 = vunpack.c.h.b16 %v1247
    %v1666 = vunpack.c.l.b16 %v1248
    %v1667 = vunpack.c.l.b16 %v1249
    %v1668 = vunpack.c.h.b16 %v1249
    %v1669 = vunpack.c.l.b16 %v1250
    %v1670 = vunpack.c.l.b16 %v1251
    %v1671 = vunpack.c.h.b16 %v1251
    %v1672 = vunpack.c.l.b16 %v1252
    %v1673 = vunpack.c.l.b16 %v1253
    %v1674 = vunpack.c.h.b16 %v1253
    %v1675 = vunpack.c.l.b16 %v1254
    %v1676 = vunpack.c.l.b16 %v1255
    %v1677 = vunpack.c.h.b16 %v1255
    %v1678 = vunpack.c.l.b16 %v1256
    %v1679 = vunpack.c.l.b16 %v1257
    %v1680 = vunpack.c.h.b16 %v1257
    %v1681 = vunpack.c.l.b16 %v1258
    %v1682 = vunpack.c.l.b16 %v1259
    %v1683 = vunpack.c.h.b16 %v1259
    %v1684 = vunpack.c.l.b16 %v1260
    %v1685 = vunpack.c.l.b16 %v1261
    %v1686 = vunpack.c.h.b16 %v1261
    %v1687 = vunpack.c.l.b16 %v1262
    %v1688 = vpack.c.b16 %v1643, %v1640
    %v1689 = vpack.c.b16 %v1644, %v1641
    %v1690 = vpack.c.b16 %v1645, %v1642
    %v1691 = vpack.c.b16 %v1649, %v1646
    %v1692 = vpack.c.b16 %v1650, %v1647
    %v1693 = vpack.c.b16 %v1651, %v1648
    %v1694 = vpack.c.b16 %v1655, %v1652
    %v1695 = vpack.c.b16 %v1656, %v1653
    %v1696 = vpack.c.b16 %v1657, %v1654
    %v1697 = vpack.c.b16 %v1661, %v1658
    %v1698 = vpack.c.b16 %v1662, %v1659
    %v1699 = vpack.c.b16 %v1663, %v1660
    %v1700 = vpack.c.b16 %v1667, %v1664
    %v1701 = vpack.c.b16 %v1668, %v1665
    %v1702 = vpack.c.b16 %v1669, %v1666
    %v1703 = vpack.c.b16 %v1673, %v1670
    %v1704 = vpack.c.b16 %v1674, %v1671
    %v1705 = vpack.c.b16 %v1675, %v1672
    %v1706 = vpack.c.b16 %v1679, %v1676
    %v1707 = vpack.c.b16 %v1680, %v1677
    %v1708 = vpack.c.b16 %v1681, %v1678
    %v1709 = vpack.c.b16 %v1685, %v1682
    %v1710 = vpack.c.b16 %v1686, %v1683
    %v1711 = vpack.c.b16 %v1687, %v1684
    %1736 = vmatprep.subr.bf16.mxu0 %v1689
    %1737 = vmatpush1.bf16.msra.mxu0 %v1688
    %1738 = vmatprep.subr.bf16.mxu0 %v1692
    %1739 = vmatpush1.bf16.msra.mxu0 %v1691
    %1740 = vmatprep.subr.bf16.mxu0 %v1695
    %1741 = vmatpush1.bf16.msra.mxu0 %v1694
    %1742 = vmatprep.subr.bf16.mxu0 %v1698
    %1743 = vmatpush1.bf16.msra.mxu0 %v1697
    %1744 = vmatprep.subr.bf16.mxu0 %v1701
    %1745 = vmatpush1.bf16.msra.mxu0 %v1700
    %1746 = vmatprep.subr.bf16.mxu0 %v1704
    %1747 = vmatpush1.bf16.msra.mxu0 %v1703
    %1748 = vmatprep.subr.bf16.mxu0 %v1707
    %1749 = vmatpush1.bf16.msra.mxu0 %v1706
    %1750 = vmatprep.subr.bf16.mxu0 %v1710
    %1751 = vmatpush1.bf16.msra.mxu0 %v1709
    %1752 = vmatprep.subr.bf16.mxu0 0
    %1753 = vmatpush1.bf16.msra.mxu0 0
    %1754 = vmatprep.subr.bf16.mxu0 0
    %1755 = vmatpush1.bf16.msra.mxu0 0
    %1756 = vmatprep.subr.bf16.mxu0 0
    %1757 = vmatpush1.bf16.msra.mxu0 0
    %1758 = vmatprep.subr.bf16.mxu0 0
    %1759 = vmatpush1.bf16.msra.mxu0 0
    %1760 = vmatprep.subr.bf16.mxu0 0
    %1761 = vmatpush1.bf16.msra.mxu0 0
    %1762 = vmatprep.subr.bf16.mxu0 0
    %1763 = vmatpush1.bf16.msra.mxu0 0
    %1764 = vmatprep.subr.bf16.mxu0 0
    %1765 = vmatpush1.bf16.msra.mxu0 0
    %1766 = vmatprep.subr.bf16.mxu0 0
    %1767 = vmatpush1.bf16.msra.mxu0 0
    %1768 = vmatprep.mubr.bf16.mxu0 0
    %1769 = vmatmul.mubr.bf16.gmra.mrb[0].mxu0 %v1607
    %v1770 = vpop.f32.mrb[0].mxu0
    %v1771 = vadd.f32 0.0, %v1770
    %v1772 = vpop.f32.mrb[0].mxu0
    %v1773 = vadd.f32 0.0, %v1772
    %v1774 = vpop.f32.mrb[0].mxu0
    %v1775 = vpop.f32.mrb[0].mxu0
    %1776 = vdwg.mxu0
    %1777 = vmatprep.subr.bf16.mxu0 0
    %1778 = vmatpush1.bf16.msra.mxu0 %v1690
    %1779 = vmatprep.subr.bf16.mxu0 0
    %1780 = vmatpush1.bf16.msra.mxu0 %v1693
    %1781 = vmatprep.subr.bf16.mxu0 0
    %1782 = vmatpush1.bf16.msra.mxu0 %v1696
    %1783 = vmatprep.subr.bf16.mxu0 0
    %1784 = vmatpush1.bf16.msra.mxu0 %v1699
    %1785 = vmatprep.subr.bf16.mxu0 0
    %1786 = vmatpush1.bf16.msra.mxu0 %v1702
    %1787 = vmatprep.subr.bf16.mxu0 0
    %1788 = vmatpush1.bf16.msra.mxu0 %v1705
    %1789 = vmatprep.subr.bf16.mxu0 0
    %1790 = vmatpush1.bf16.msra.mxu0 %v1708
    %1791 = vmatprep.subr.bf16.mxu0 0
    %1792 = vmatpush1.bf16.msra.mxu0 %v1711
    %1793 = vmatprep.subr.bf16.mxu0 0
    %1794 = vmatpush1.bf16.msra.mxu0 0
    %1795 = vmatprep.subr.bf16.mxu0 0
    %1796 = vmatpush1.bf16.msra.mxu0 0
    %1797 = vmatprep.subr.bf16.mxu0 0
    %1798 = vmatpush1.bf16.msra.mxu0 0
    %1799 = vmatprep.subr.bf16.mxu0 0
    %1800 = vmatpush1.bf16.msra.mxu0 0
    %1801 = vmatprep.subr.bf16.mxu0 0
    %1802 = vmatpush1.bf16.msra.mxu0 0
    %1803 = vmatprep.subr.bf16.mxu0 0
    %1804 = vmatpush1.bf16.msra.mxu0 0
    %1805 = vmatprep.subr.bf16.mxu0 0
    %1806 = vmatpush1.bf16.msra.mxu0 0
    %1807 = vmatprep.subr.bf16.mxu0 0
    %1808 = vmatpush1.bf16.msra.mxu0 0
    %1809 = vmatprep.mubr.bf16.mxu0 0
    %1810 = vmatmul.mubr.bf16.gmra.mrb[0].mxu0 %v1607
    %v1811 = vpop.f32.mrb[0].mxu0
    %v1812 = vadd.f32 0.0, %v1811
    %v1813 = vpop.f32.mrb[0].mxu0
    %v1814 = vpop.f32.mrb[0].mxu0
    %v1815 = vpop.f32.mrb[0].mxu0
    %1816 = vdwg.mxu0
    %v1817 = vadd.f32 %v1561, %v1771
    %v1819 = vlaneseq
    %v1820 = vshrl.u32 %v1819, 7
    %v1821 = vsub.s32 0, %v1820
    %v1822 = vrot.slane %v1263, %v1821
    %v1824 = vadd.f32 %v1817, %v1822
    %v1825 = vxor.u32 %v1824, 2147483648
    %v1826 = vmul.f32 %v1825, 1.442695
    %v1827 = vpow.pop %v1826
    %v1828 = vadd.f32 %v1827, 1.0
    %v1829 = vrcp.pop %v1828
    %v1830 = vmul.f32 1.0, %v1829
    %v1831 = vadd.f32 %v1563, %v1773
    %v1833 = vlaneseq
    %v1834 = vshrl.u32 %v1833, 7
    %v1835 = vsub.s32 0, %v1834
    %v1836 = vrot.slane %v1264, %v1835
    %v1838 = vadd.f32 %v1831, %v1836
    %v1839 = vxor.u32 %v1838, 2147483648
    %v1840 = vmul.f32 %v1839, 1.442695
    %v1841 = vpow.pop %v1840
    %v1842 = vadd.f32 %v1841, 1.0
    %v1843 = vrcp.pop %v1842
    %v1844 = vmul.f32 1.0, %v1843
    %v1846 = vlaneseq
    %v1847 = vshrl.u32 %v1846, 7
    %v1848 = vsub.s32 0, %v1847
    %v1849 = vrot.slane %v1265, %v1848
    %v1851 = vadd.f32 %v1602, %v1849
    %v1853 = vlaneseq
    %v1854 = vshrl.u32 %v1853, 7
    %v1855 = vsub.s32 0, %v1854
    %v1856 = vrot.slane %v1266, %v1855
    %v1858 = vadd.f32 %v1812, %v1856
    %v1859 = vmul.f32 %v1830, %v1858
    %v1860 = vadd.f32 %v1851, %v1859
    %v1861 = vtanh.pop %v1860
    %v1862 = vsub.f32 1.0, %v1844
    %v1863 = vmul.f32 %v1862, %v1861
    %v1864 = vmul.f32 %v1844, %v1267
    %v1865 = vadd.f32 %v1863, %v1864
    %1866 = vst [vmem:[%s9] sm:$0xff] %v1865
    %v1867 = vld [vmem:[#allocation8 + $0x240] sm:$0xff]
    %v1868 = vld [vmem:[#allocation8 + $0x248] sm:$0xf]
    %v1869 = vld [vmem:[#allocation8 + $0x24c] sm:$0xff]
    %v1870 = vld [vmem:[#allocation8 + $0x254] sm:$0xf]
    %v1871 = vld [vmem:[#allocation8 + $0x258] sm:$0xff]
    %v1872 = vld [vmem:[#allocation8 + $0x260] sm:$0xf]
    %v1873 = vld [vmem:[#allocation8 + $0x264] sm:$0xff]
    %v1874 = vld [vmem:[#allocation8 + $0x26c] sm:$0xf]
    %v1875 = vld [vmem:[#allocation8 + $0x270] sm:$0xff]
    %v1876 = vld [vmem:[#allocation8 + $0x278] sm:$0xf]
    %v1877 = vld [vmem:[#allocation8 + $0x27c] sm:$0xff]
    %v1878 = vld [vmem:[#allocation8 + $0x284] sm:$0xf]
    %v1879 = vld [vmem:[#allocation8 + $0x288] sm:$0xff]
    %v1880 = vld [vmem:[#allocation8 + $0x290] sm:$0xf]
    %v1881 = vld [vmem:[#allocation8 + $0x294] sm:$0xff]
    %v1882 = vld [vmem:[#allocation8 + $0x29c] sm:$0xf]
    %v1883 = vld [vmem:[#allocation8 + $0x2a0] sm:$0xff]
    %v1884 = vld [vmem:[#allocation8 + $0x2a8] sm:$0xf]
    %v1885 = vld [vmem:[#allocation8 + $0x2ac] sm:$0xff]
    %v1886 = vld [vmem:[#allocation8 + $0x2b4] sm:$0xf]
    %v1887 = vld [vmem:[#allocation8 + $0x2b8] sm:$0xff]
    %v1888 = vld [vmem:[#allocation8 + $0x2c0] sm:$0xf]
    %v1889 = vld [vmem:[#allocation8 + $0x2c4] sm:$0xff]
    %v1890 = vld [vmem:[#allocation8 + $0x2cc] sm:$0xf]
    %v1891 = vld [vmem:[#allocation8 + $0x2d0] sm:$0xff]
    %v1892 = vld [vmem:[#allocation8 + $0x2d8] sm:$0xf]
    %v1893 = vld [vmem:[#allocation8 + $0x2dc] sm:$0xff]
    %v1894 = vld [vmem:[#allocation8 + $0x2e4] sm:$0xf]
    %v1895 = vld [vmem:[#allocation8 + $0x2e8] sm:$0xff]
    %v1896 = vld [vmem:[#allocation8 + $0x2f0] sm:$0xf]
    %v1897 = vld [vmem:[#allocation8 + $0x2f4] sm:$0xff]
    %v1898 = vld [vmem:[#allocation8 + $0x2fc] sm:$0xf]
    %v1899 = vld [vmem:[#allocation8 + $0x300] sm:$0xff]
    %v1900 = vld [vmem:[#allocation8 + $0x308] sm:$0xf]
    %v1901 = vld [vmem:[#allocation8 + $0x30c] sm:$0xff]
    %v1902 = vld [vmem:[#allocation8 + $0x314] sm:$0xf]
    %v1903 = vld [vmem:[#allocation8 + $0x318] sm:$0xff]
    %v1904 = vld [vmem:[#allocation8 + $0x320] sm:$0xf]
    %v1905 = vld [vmem:[#allocation8 + $0x324] sm:$0xff]
    %v1906 = vld [vmem:[#allocation8 + $0x32c] sm:$0xf]
    %v1907 = vld [vmem:[#allocation8 + $0x330] sm:$0xff]
    %v1908 = vld [vmem:[#allocation8 + $0x338] sm:$0xf]
    %v1909 = vld [vmem:[#allocation8 + $0x33c] sm:$0xff]
    %v1910 = vld [vmem:[#allocation8 + $0x344] sm:$0xf]
    %v1911 = vld [vmem:[#allocation8 + $0x348] sm:$0xff]
    %v1912 = vld [vmem:[#allocation8 + $0x350] sm:$0xf]
    %v1913 = vld [vmem:[#allocation8 + $0x354] sm:$0xff]
    %v1914 = vld [vmem:[#allocation8 + $0x35c] sm:$0xf]
    %v1915 = vld [vmem:[#allocation8 + $0x360] sm:$0xff]
    %v1916 = vld [vmem:[#allocation8 + $0x368] sm:$0xf]
    %v1917 = vld [vmem:[#allocation8 + $0x36c] sm:$0xff]
    %v1918 = vld [vmem:[#allocation8 + $0x374] sm:$0xf]
    %v1919 = vld [vmem:[#allocation8 + $0x378] sm:$0xff]
    %v1920 = vld [vmem:[#allocation8 + $0x380] sm:$0xf]
    %v1921 = vld [vmem:[#allocation8 + $0x384] sm:$0xff]
    %v1922 = vld [vmem:[#allocation8 + $0x38c] sm:$0xf]
    %v1923 = vld [vmem:[#allocation8 + $0x390] sm:$0xff]
    %v1924 = vld [vmem:[#allocation8 + $0x398] sm:$0xf]
    %v1925 = vld [vmem:[#allocation8 + $0x39c] sm:$0xff]
    %v1926 = vld [vmem:[#allocation8 + $0x3a4] sm:$0xf]
    %v1927 = vld [vmem:[#allocation8 + $0x3a8] sm:$0xff]
    %v1928 = vld [vmem:[#allocation8 + $0x3b0] sm:$0xf]
    %v1929 = vld [vmem:[#allocation8 + $0x3b4] sm:$0xff]
    %v1930 = vld [vmem:[#allocation8 + $0x3bc] sm:$0xf]
    %v1931 = vld [vmem:[%s7 + $0x5] sm:$0x1]
    %v1932 = vld [vmem:[%s7 + $0x6] sm:$0x1]
    %v1933 = vld [vmem:[%s7 + $0x7] sm:$0x1]
    %v1934 = vld [vmem:[%s7 + $0x8] sm:$0x1]
    %v1935 = vld [vmem:[%s467] sm:$0xff]
    %v1936 = vpack.c.bf16 %v1865, %v1865
    %v1969 = vunpack.c.l.b16 %v1867
    %v1970 = vunpack.c.h.b16 %v1867
    %v1971 = vunpack.c.l.b16 %v1868
    %v1972 = vunpack.c.l.b16 %v1869
    %v1973 = vunpack.c.h.b16 %v1869
    %v1974 = vunpack.c.l.b16 %v1870
    %v1975 = vunpack.c.l.b16 %v1871
    %v1976 = vunpack.c.h.b16 %v1871
    %v1977 = vunpack.c.l.b16 %v1872
    %v1978 = vunpack.c.l.b16 %v1873
    %v1979 = vunpack.c.h.b16 %v1873
    %v1980 = vunpack.c.l.b16 %v1874
    %v1981 = vunpack.c.l.b16 %v1875
    %v1982 = vunpack.c.h.b16 %v1875
    %v1983 = vunpack.c.l.b16 %v1876
    %v1984 = vunpack.c.l.b16 %v1877
    %v1985 = vunpack.c.h.b16 %v1877
    %v1986 = vunpack.c.l.b16 %v1878
    %v1987 = vunpack.c.l.b16 %v1879
    %v1988 = vunpack.c.h.b16 %v1879
    %v1989 = vunpack.c.l.b16 %v1880
    %v1990 = vunpack.c.l.b16 %v1881
    %v1991 = vunpack.c.h.b16 %v1881
    %v1992 = vunpack.c.l.b16 %v1882
    %v1993 = vunpack.c.l.b16 %v1883
    %v1994 = vunpack.c.h.b16 %v1883
    %v1995 = vunpack.c.l.b16 %v1884
    %v1996 = vunpack.c.l.b16 %v1885
    %v1997 = vunpack.c.h.b16 %v1885
    %v1998 = vunpack.c.l.b16 %v1886
    %v1999 = vunpack.c.l.b16 %v1887
    %v2000 = vunpack.c.h.b16 %v1887
    %v2001 = vunpack.c.l.b16 %v1888
    %v2002 = vunpack.c.l.b16 %v1889
    %v2003 = vunpack.c.h.b16 %v1889
    %v2004 = vunpack.c.l.b16 %v1890
    %v2005 = vunpack.c.l.b16 %v1891
    %v2006 = vunpack.c.h.b16 %v1891
    %v2007 = vunpack.c.l.b16 %v1892
    %v2008 = vunpack.c.l.b16 %v1893
    %v2009 = vunpack.c.h.b16 %v1893
    %v2010 = vunpack.c.l.b16 %v1894
    %v2011 = vunpack.c.l.b16 %v1895
    %v2012 = vunpack.c.h.b16 %v1895
    %v2013 = vunpack.c.l.b16 %v1896
    %v2014 = vunpack.c.l.b16 %v1897
    %v2015 = vunpack.c.h.b16 %v1897
    %v2016 = vunpack.c.l.b16 %v1898
    %v2017 = vpack.c.b16 %v1972, %v1969
    %v2018 = vpack.c.b16 %v1973, %v1970
    %v2019 = vpack.c.b16 %v1974, %v1971
    %v2020 = vpack.c.b16 %v1978, %v1975
    %v2021 = vpack.c.b16 %v1979, %v1976
    %v2022 = vpack.c.b16 %v1980, %v1977
    %v2023 = vpack.c.b16 %v1984, %v1981
    %v2024 = vpack.c.b16 %v1985, %v1982
    %v2025 = vpack.c.b16 %v1986, %v1983
    %v2026 = vpack.c.b16 %v1990, %v1987
    %v2027 = vpack.c.b16 %v1991, %v1988
    %v2028 = vpack.c.b16 %v1992, %v1989
    %v2029 = vpack.c.b16 %v1996, %v1993
    %v2030 = vpack.c.b16 %v1997, %v1994
    %v2031 = vpack.c.b16 %v1998, %v1995
    %v2032 = vpack.c.b16 %v2002, %v1999
    %v2033 = vpack.c.b16 %v2003, %v2000
    %v2034 = vpack.c.b16 %v2004, %v2001
    %v2035 = vpack.c.b16 %v2008, %v2005
    %v2036 = vpack.c.b16 %v2009, %v2006
    %v2037 = vpack.c.b16 %v2010, %v2007
    %v2038 = vpack.c.b16 %v2014, %v2011
    %v2039 = vpack.c.b16 %v2015, %v2012
    %v2040 = vpack.c.b16 %v2016, %v2013
    %2065 = vmatprep.subr.bf16.mxu0 %v2018
    %2066 = vmatpush1.bf16.msra.mxu0 %v2017
    %2067 = vmatprep.subr.bf16.mxu0 %v2021
    %2068 = vmatpush1.bf16.msra.mxu0 %v2020
    %2069 = vmatprep.subr.bf16.mxu0 %v2024
    %2070 = vmatpush1.bf16.msra.mxu0 %v2023
    %2071 = vmatprep.subr.bf16.mxu0 %v2027
    %2072 = vmatpush1.bf16.msra.mxu0 %v2026
    %2073 = vmatprep.subr.bf16.mxu0 %v2030
    %2074 = vmatpush1.bf16.msra.mxu0 %v2029
    %2075 = vmatprep.subr.bf16.mxu0 %v2033
    %2076 = vmatpush1.bf16.msra.mxu0 %v2032
    %2077 = vmatprep.subr.bf16.mxu0 %v2036
    %2078 = vmatpush1.bf16.msra.mxu0 %v2035
    %2079 = vmatprep.subr.bf16.mxu0 %v2039
    %2080 = vmatpush1.bf16.msra.mxu0 %v2038
    %2081 = vmatprep.subr.bf16.mxu0 0
    %2082 = vmatpush1.bf16.msra.mxu0 0
    %2083 = vmatprep.subr.bf16.mxu0 0
    %2084 = vmatpush1.bf16.msra.mxu0 0
    %2085 = vmatprep.subr.bf16.mxu0 0
    %2086 = vmatpush1.bf16.msra.mxu0 0
    %2087 = vmatprep.subr.bf16.mxu0 0
    %2088 = vmatpush1.bf16.msra.mxu0 0
    %2089 = vmatprep.subr.bf16.mxu0 0
    %2090 = vmatpush1.bf16.msra.mxu0 0
    %2091 = vmatprep.subr.bf16.mxu0 0
    %2092 = vmatpush1.bf16.msra.mxu0 0
    %2093 = vmatprep.subr.bf16.mxu0 0
    %2094 = vmatpush1.bf16.msra.mxu0 0
    %2095 = vmatprep.subr.bf16.mxu0 0
    %2096 = vmatpush1.bf16.msra.mxu0 0
    %2097 = vmatprep.mubr.bf16.mxu0 0
    %2098 = vmatmul.mubr.bf16.gmra.mrb[0].mxu0 %v1936
    %v2099 = vpop.f32.mrb[0].mxu0
    %v2100 = vadd.f32 0.0, %v2099
    %v2101 = vpop.f32.mrb[0].mxu0
    %v2102 = vadd.f32 0.0, %v2101
    %v2103 = vpop.f32.mrb[0].mxu0
    %v2104 = vpop.f32.mrb[0].mxu0
    %2105 = vdwg.mxu0
    %2106 = vmatprep.subr.bf16.mxu0 0
    %2107 = vmatpush1.bf16.msra.mxu0 %v2019
    %2108 = vmatprep.subr.bf16.mxu0 0
    %2109 = vmatpush1.bf16.msra.mxu0 %v2022
    %2110 = vmatprep.subr.bf16.mxu0 0
    %2111 = vmatpush1.bf16.msra.mxu0 %v2025
    %2112 = vmatprep.subr.bf16.mxu0 0
    %2113 = vmatpush1.bf16.msra.mxu0 %v2028
    %2114 = vmatprep.subr.bf16.mxu0 0
    %2115 = vmatpush1.bf16.msra.mxu0 %v2031
    %2116 = vmatprep.subr.bf16.mxu0 0
    %2117 = vmatpush1.bf16.msra.mxu0 %v2034
    %2118 = vmatprep.subr.bf16.mxu0 0
    %2119 = vmatpush1.bf16.msra.mxu0 %v2037
    %2120 = vmatprep.subr.bf16.mxu0 0
    %2121 = vmatpush1.bf16.msra.mxu0 %v2040
    %2122 = vmatprep.subr.bf16.mxu0 0
    %2123 = vmatpush1.bf16.msra.mxu0 0
    %2124 = vmatprep.subr.bf16.mxu0 0
    %2125 = vmatpush1.bf16.msra.mxu0 0
    %2126 = vmatprep.subr.bf16.mxu0 0
    %2127 = vmatpush1.bf16.msra.mxu0 0
    %2128 = vmatprep.subr.bf16.mxu0 0
    %2129 = vmatpush1.bf16.msra.mxu0 0
    %2130 = vmatprep.subr.bf16.mxu0 0
    %2131 = vmatpush1.bf16.msra.mxu0 0
    %2132 = vmatprep.subr.bf16.mxu0 0
    %2133 = vmatpush1.bf16.msra.mxu0 0
    %2134 = vmatprep.subr.bf16.mxu0 0
    %2135 = vmatpush1.bf16.msra.mxu0 0
    %2136 = vmatprep.subr.bf16.mxu0 0
    %2137 = vmatpush1.bf16.msra.mxu0 0
    %2138 = vmatprep.mubr.bf16.mxu0 0
    %2139 = vmatmul.mubr.bf16.gmra.mrb[0].mxu0 %v1936
    %v2140 = vpop.f32.mrb[0].mxu0
    %v2141 = vadd.f32 0.0, %v2140
    %v2142 = vpop.f32.mrb[0].mxu0
    %v2143 = vpop.f32.mrb[0].mxu0
    %v2144 = vpop.f32.mrb[0].mxu0
    %2145 = vdwg.mxu0
    %v2146 = vpack.c.bf16 %v1935, %v1935
    %v2179 = vunpack.c.l.b16 %v1899
    %v2180 = vunpack.c.h.b16 %v1899
    %v2181 = vunpack.c.l.b16 %v1900
    %v2182 = vunpack.c.l.b16 %v1901
    %v2183 = vunpack.c.h.b16 %v1901
    %v2184 = vunpack.c.l.b16 %v1902
    %v2185 = vunpack.c.l.b16 %v1903
    %v2186 = vunpack.c.h.b16 %v1903
    %v2187 = vunpack.c.l.b16 %v1904
    %v2188 = vunpack.c.l.b16 %v1905
    %v2189 = vunpack.c.h.b16 %v1905
    %v2190 = vunpack.c.l.b16 %v1906
    %v2191 = vunpack.c.l.b16 %v1907
    %v2192 = vunpack.c.h.b16 %v1907
    %v2193 = vunpack.c.l.b16 %v1908
    %v2194 = vunpack.c.l.b16 %v1909
    %v2195 = vunpack.c.h.b16 %v1909
    %v2196 = vunpack.c.l.b16 %v1910
    %v2197 = vunpack.c.l.b16 %v1911
    %v2198 = vunpack.c.h.b16 %v1911
    %v2199 = vunpack.c.l.b16 %v1912
    %v2200 = vunpack.c.l.b16 %v1913
    %v2201 = vunpack.c.h.b16 %v1913
    %v2202 = vunpack.c.l.b16 %v1914
    %v2203 = vunpack.c.l.b16 %v1915
    %v2204 = vunpack.c.h.b16 %v1915
    %v2205 = vunpack.c.l.b16 %v1916
    %v2206 = vunpack.c.l.b16 %v1917
    %v2207 = vunpack.c.h.b16 %v1917
    %v2208 = vunpack.c.l.b16 %v1918
    %v2209 = vunpack.c.l.b16 %v1919
    %v2210 = vunpack.c.h.b16 %v1919
    %v2211 = vunpack.c.l.b16 %v1920
    %v2212 = vunpack.c.l.b16 %v1921
    %v2213 = vunpack.c.h.b16 %v1921
    %v2214 = vunpack.c.l.b16 %v1922
    %v2215 = vunpack.c.l.b16 %v1923
    %v2216 = vunpack.c.h.b16 %v1923
    %v2217 = vunpack.c.l.b16 %v1924
    %v2218 = vunpack.c.l.b16 %v1925
    %v2219 = vunpack.c.h.b16 %v1925
    %v2220 = vunpack.c.l.b16 %v1926
    %v2221 = vunpack.c.l.b16 %v1927
    %v2222 = vunpack.c.h.b16 %v1927
    %v2223 = vunpack.c.l.b16 %v1928
    %v2224 = vunpack.c.l.b16 %v1929
    %v2225 = vunpack.c.h.b16 %v1929
    %v2226 = vunpack.c.l.b16 %v1930
    %v2227 = vpack.c.b16 %v2182, %v2179
    %v2228 = vpack.c.b16 %v2183, %v2180
    %v2229 = vpack.c.b16 %v2184, %v2181
    %v2230 = vpack.c.b16 %v2188, %v2185
    %v2231 = vpack.c.b16 %v2189, %v2186
    %v2232 = vpack.c.b16 %v2190, %v2187
    %v2233 = vpack.c.b16 %v2194, %v2191
    %v2234 = vpack.c.b16 %v2195, %v2192
    %v2235 = vpack.c.b16 %v2196, %v2193
    %v2236 = vpack.c.b16 %v2200, %v2197
    %v2237 = vpack.c.b16 %v2201, %v2198
    %v2238 = vpack.c.b16 %v2202, %v2199
    %v2239 = vpack.c.b16 %v2206, %v2203
    %v2240 = vpack.c.b16 %v2207, %v2204
    %v2241 = vpack.c.b16 %v2208, %v2205
    %v2242 = vpack.c.b16 %v2212, %v2209
    %v2243 = vpack.c.b16 %v2213, %v2210
    %v2244 = vpack.c.b16 %v2214, %v2211
    %v2245 = vpack.c.b16 %v2218, %v2215
    %v2246 = vpack.c.b16 %v2219, %v2216
    %v2247 = vpack.c.b16 %v2220, %v2217
    %v2248 = vpack.c.b16 %v2224, %v2221
    %v2249 = vpack.c.b16 %v2225, %v2222
    %v2250 = vpack.c.b16 %v2226, %v2223
    %2275 = vmatprep.subr.bf16.mxu0 %v2228
    %2276 = vmatpush1.bf16.msra.mxu0 %v2227
    %2277 = vmatprep.subr.bf16.mxu0 %v2231
    %2278 = vmatpush1.bf16.msra.mxu0 %v2230
    %2279 = vmatprep.subr.bf16.mxu0 %v2234
    %2280 = vmatpush1.bf16.msra.mxu0 %v2233
    %2281 = vmatprep.subr.bf16.mxu0 %v2237
    %2282 = vmatpush1.bf16.msra.mxu0 %v2236
    %2283 = vmatprep.subr.bf16.mxu0 %v2240
    %2284 = vmatpush1.bf16.msra.mxu0 %v2239
    %2285 = vmatprep.subr.bf16.mxu0 %v2243
    %2286 = vmatpush1.bf16.msra.mxu0 %v2242
    %2287 = vmatprep.subr.bf16.mxu0 %v2246
    %2288 = vmatpush1.bf16.msra.mxu0 %v2245
    %2289 = vmatprep.subr.bf16.mxu0 %v2249
    %2290 = vmatpush1.bf16.msra.mxu0 %v2248
    %2291 = vmatprep.subr.bf16.mxu0 0
    %2292 = vmatpush1.bf16.msra.mxu0 0
    %2293 = vmatprep.subr.bf16.mxu0 0
    %2294 = vmatpush1.bf16.msra.mxu0 0
    %2295 = vmatprep.subr.bf16.mxu0 0
    %2296 = vmatpush1.bf16.msra.mxu0 0
    %2297 = vmatprep.subr.bf16.mxu0 0
    %2298 = vmatpush1.bf16.msra.mxu0 0
    %2299 = vmatprep.subr.bf16.mxu0 0
    %2300 = vmatpush1.bf16.msra.mxu0 0
    %2301 = vmatprep.subr.bf16.mxu0 0
    %2302 = vmatpush1.bf16.msra.mxu0 0
    %2303 = vmatprep.subr.bf16.mxu0 0
    %2304 = vmatpush1.bf16.msra.mxu0 0
    %2305 = vmatprep.subr.bf16.mxu0 0
    %2306 = vmatpush1.bf16.msra.mxu0 0
    %2307 = vmatprep.mubr.bf16.mxu0 0
    %2308 = vmatmul.mubr.bf16.gmra.mrb[0].mxu0 %v2146
    %v2309 = vpop.f32.mrb[0].mxu0
    %v2310 = vadd.f32 0.0, %v2309
    %v2311 = vpop.f32.mrb[0].mxu0
    %v2312 = vadd.f32 0.0, %v2311
    %v2313 = vpop.f32.mrb[0].mxu0
    %v2314 = vpop.f32.mrb[0].mxu0
    %2315 = vdwg.mxu0
    %2316 = vmatprep.subr.bf16.mxu0 0
    %2317 = vmatpush1.bf16.msra.mxu0 %v2229
    %2318 = vmatprep.subr.bf16.mxu0 0
    %2319 = vmatpush1.bf16.msra.mxu0 %v2232
    %2320 = vmatprep.subr.bf16.mxu0 0
    %2321 = vmatpush1.bf16.msra.mxu0 %v2235
    %2322 = vmatprep.subr.bf16.mxu0 0
    %2323 = vmatpush1.bf16.msra.mxu0 %v2238
    %2324 = vmatprep.subr.bf16.mxu0 0
    %2325 = vmatpush1.bf16.msra.mxu0 %v2241
    %2326 = vmatprep.subr.bf16.mxu0 0
    %2327 = vmatpush1.bf16.msra.mxu0 %v2244
    %2328 = vmatprep.subr.bf16.mxu0 0
    %2329 = vmatpush1.bf16.msra.mxu0 %v2247
    %2330 = vmatprep.subr.bf16.mxu0 0
    %2331 = vmatpush1.bf16.msra.mxu0 %v2250
    %2332 = vmatprep.subr.bf16.mxu0 0
    %2333 = vmatpush1.bf16.msra.mxu0 0
    %2334 = vmatprep.subr.bf16.mxu0 0
    %2335 = vmatpush1.bf16.msra.mxu0 0
    %2336 = vmatprep.subr.bf16.mxu0 0
    %2337 = vmatpush1.bf16.msra.mxu0 0
    %2338 = vmatprep.subr.bf16.mxu0 0
    %2339 = vmatpush1.bf16.msra.mxu0 0
    %2340 = vmatprep.subr.bf16.mxu0 0
    %2341 = vmatpush1.bf16.msra.mxu0 0
    %2342 = vmatprep.subr.bf16.mxu0 0
    %2343 = vmatpush1.bf16.msra.mxu0 0
    %2344 = vmatprep.subr.bf16.mxu0 0
    %2345 = vmatpush1.bf16.msra.mxu0 0
    %2346 = vmatprep.subr.bf16.mxu0 0
    %2347 = vmatpush1.bf16.msra.mxu0 0
    %2348 = vmatprep.mubr.bf16.mxu0 0
    %2349 = vmatmul.mubr.bf16.gmra.mrb[0].mxu0 %v2146
    %v2350 = vpop.f32.mrb[0].mxu0
    %v2351 = vadd.f32 0.0, %v2350
    %v2352 = vpop.f32.mrb[0].mxu0
    %v2353 = vpop.f32.mrb[0].mxu0
    %v2354 = vpop.f32.mrb[0].mxu0
    %2355 = vdwg.mxu0
    %v2356 = vadd.f32 %v2100, %v2310
    %v2358 = vlaneseq
    %v2359 = vshrl.u32 %v2358, 7
    %v2360 = vsub.s32 0, %v2359
    %v2361 = vrot.slane %v1931, %v2360
    %v2363 = vadd.f32 %v2356, %v2361
    %v2364 = vxor.u32 %v2363, 2147483648
    %v2365 = vmul.f32 %v2364, 1.442695
    %v2366 = vpow.pop %v2365
    %v2367 = vadd.f32 %v2366, 1.0
    %v2368 = vrcp.pop %v2367
    %v2369 = vmul.f32 1.0, %v2368
    %v2370 = vadd.f32 %v2102, %v2312
    %v2372 = vlaneseq
    %v2373 = vshrl.u32 %v2372, 7
    %v2374 = vsub.s32 0, %v2373
    %v2375 = vrot.slane %v1932, %v2374
    %v2377 = vadd.f32 %v2370, %v2375
    %v2378 = vxor.u32 %v2377, 2147483648
    %v2379 = vmul.f32 %v2378, 1.442695
    %v2380 = vpow.pop %v2379
    %v2381 = vadd.f32 %v2380, 1.0
    %v2382 = vrcp.pop %v2381
    %v2383 = vmul.f32 1.0, %v2382
    %v2385 = vlaneseq
    %v2386 = vshrl.u32 %v2385, 7
    %v2387 = vsub.s32 0, %v2386
    %v2388 = vrot.slane %v1933, %v2387
    %v2390 = vadd.f32 %v2141, %v2388
    %v2392 = vlaneseq
    %v2393 = vshrl.u32 %v2392, 7
    %v2394 = vsub.s32 0, %v2393
    %v2395 = vrot.slane %v1934, %v2394
    %v2397 = vadd.f32 %v2351, %v2395
    %v2398 = vmul.f32 %v2369, %v2397
    %v2399 = vadd.f32 %v2390, %v2398
    %v2400 = vtanh.pop %v2399
    %v2401 = vsub.f32 1.0, %v2383
    %v2402 = vmul.f32 %v2401, %v2400
    %v2403 = vmul.f32 %v2383, %v1935
    %v2404 = vadd.f32 %v2402, %v2403
    %s2405 = scalar_lea.vmem %s9, 8
    %2406 = vst [vmem:[%s2405] sm:$0xff] %v2404
    %v2407 = vld [vmem:[%s7 + $0x9] sm:$0x1]
    %v2408 = vld [vmem:[%s7 + $0xa] sm:$0x1]
    %v2409 = vpack.c.bf16 %v2404, %v2404
    %v2410 = vld [vmem:[#allocation10] sm:$0xf]
    %v2411 = vld [vmem:[#allocation10 + $0x4] sm:$0xf]
    %v2412 = vld [vmem:[#allocation10 + $0x8] sm:$0xf]
    %v2413 = vld [vmem:[#allocation10 + $0xc] sm:$0xf]
    %v2414 = vld [vmem:[#allocation10 + $0x10] sm:$0xf]
    %v2415 = vld [vmem:[#allocation10 + $0x14] sm:$0xf]
    %v2416 = vld [vmem:[#allocation10 + $0x18] sm:$0xf]
    %v2417 = vld [vmem:[#allocation10 + $0x1c] sm:$0xf]
    %v2418 = vld [vmem:[#allocation10 + $0x20] sm:$0xf]
    %v2419 = vld [vmem:[#allocation10 + $0x24] sm:$0xf]
    %v2420 = vld [vmem:[#allocation10 + $0x28] sm:$0xf]
    %v2421 = vld [vmem:[#allocation10 + $0x2c] sm:$0xf]
    %v2422 = vld [vmem:[#allocation10 + $0x30] sm:$0xf]
    %v2423 = vld [vmem:[#allocation10 + $0x34] sm:$0xf]
    %v2424 = vld [vmem:[#allocation10 + $0x38] sm:$0xf]
    %v2425 = vld [vmem:[#allocation10 + $0x3c] sm:$0xf]
    %v2426 = vld [vmem:[#allocation10 + $0x40] sm:$0xf]
    %v2427 = vld [vmem:[#allocation10 + $0x44] sm:$0xf]
    %v2428 = vld [vmem:[#allocation10 + $0x48] sm:$0xf]
    %v2429 = vld [vmem:[#allocation10 + $0x4c] sm:$0xf]
    %v2430 = vld [vmem:[#allocation10 + $0x50] sm:$0xf]
    %v2431 = vld [vmem:[#allocation10 + $0x54] sm:$0xf]
    %v2432 = vld [vmem:[#allocation10 + $0x58] sm:$0xf]
    %v2433 = vld [vmem:[#allocation10 + $0x5c] sm:$0xf]
    %v2434 = vld [vmem:[#allocation10 + $0x60] sm:$0xf]
    %v2435 = vld [vmem:[#allocation10 + $0x64] sm:$0xf]
    %v2436 = vld [vmem:[#allocation10 + $0x68] sm:$0xf]
    %v2437 = vld [vmem:[#allocation10 + $0x6c] sm:$0xf]
    %v2438 = vld [vmem:[#allocation10 + $0x70] sm:$0xf]
    %v2439 = vld [vmem:[#allocation10 + $0x74] sm:$0xf]
    %v2440 = vld [vmem:[#allocation10 + $0x78] sm:$0xf]
    %v2441 = vld [vmem:[#allocation10 + $0x7c] sm:$0xf]
    %v2443 = vlaneseq
    %v2444 = vshrl.u32 %v2443, 7
    %v2445 = vsub.s32 0, %v2444
    %v2446 = vrot.slane %v2408, %v2445
    %v2480 = vunpack.c.l.b16 %v2410
    %v2481 = vunpack.c.l.b16 %v2411
    %v2482 = vunpack.c.l.b16 %v2412
    %v2483 = vunpack.c.l.b16 %v2413
    %v2484 = vunpack.c.l.b16 %v2414
    %v2485 = vunpack.c.l.b16 %v2415
    %v2486 = vunpack.c.l.b16 %v2416
    %v2487 = vunpack.c.l.b16 %v2417
    %v2488 = vunpack.c.l.b16 %v2418
    %v2489 = vunpack.c.l.b16 %v2419
    %v2490 = vunpack.c.l.b16 %v2420
    %v2491 = vunpack.c.l.b16 %v2421
    %v2492 = vunpack.c.l.b16 %v2422
    %v2493 = vunpack.c.l.b16 %v2423
    %v2494 = vunpack.c.l.b16 %v2424
    %v2495 = vunpack.c.l.b16 %v2425
    %v2496 = vunpack.c.l.b16 %v2426
    %v2497 = vunpack.c.l.b16 %v2427
    %v2498 = vunpack.c.l.b16 %v2428
    %v2499 = vunpack.c.l.b16 %v2429
    %v2500 = vunpack.c.l.b16 %v2430
    %v2501 = vunpack.c.l.b16 %v2431
    %v2502 = vunpack.c.l.b16 %v2432
    %v2503 = vunpack.c.l.b16 %v2433
    %v2504 = vunpack.c.l.b16 %v2434
    %v2505 = vunpack.c.l.b16 %v2435
    %v2506 = vunpack.c.l.b16 %v2436
    %v2507 = vunpack.c.l.b16 %v2437
    %v2508 = vunpack.c.l.b16 %v2438
    %v2509 = vunpack.c.l.b16 %v2439
    %v2510 = vunpack.c.l.b16 %v2440
    %v2511 = vunpack.c.l.b16 %v2441
    %v2512 = vpack.c.b16 %v2481, %v2480
    %v2513 = vpack.c.b16 %v2483, %v2482
    %v2514 = vpack.c.b16 %v2485, %v2484
    %v2515 = vpack.c.b16 %v2487, %v2486
    %v2516 = vpack.c.b16 %v2489, %v2488
    %v2517 = vpack.c.b16 %v2491, %v2490
    %v2518 = vpack.c.b16 %v2493, %v2492
    %v2519 = vpack.c.b16 %v2495, %v2494
    %v2520 = vpack.c.b16 %v2497, %v2496
    %v2521 = vpack.c.b16 %v2499, %v2498
    %v2522 = vpack.c.b16 %v2501, %v2500
    %v2523 = vpack.c.b16 %v2503, %v2502
    %v2524 = vpack.c.b16 %v2505, %v2504
    %v2525 = vpack.c.b16 %v2507, %v2506
    %v2526 = vpack.c.b16 %v2509, %v2508
    %v2527 = vpack.c.b16 %v2511, %v2510
    %2544 = vmatprep.subr.bf16.mxu0 0
    %2545 = vmatpush1.bf16.msra.mxu0 %v2512
    %2546 = vmatprep.subr.bf16.mxu0 0
    %2547 = vmatpush1.bf16.msra.mxu0 %v2513
    %2548 = vmatprep.subr.bf16.mxu0 0
    %2549 = vmatpush1.bf16.msra.mxu0 %v2514
    %2550 = vmatprep.subr.bf16.mxu0 0
    %2551 = vmatpush1.bf16.msra.mxu0 %v2515
    %2552 = vmatprep.subr.bf16.mxu0 0
    %2553 = vmatpush1.bf16.msra.mxu0 %v2516
    %2554 = vmatprep.subr.bf16.mxu0 0
    %2555 = vmatpush1.bf16.msra.mxu0 %v2517
    %2556 = vmatprep.subr.bf16.mxu0 0
    %2557 = vmatpush1.bf16.msra.mxu0 %v2518
    %2558 = vmatprep.subr.bf16.mxu0 0
    %2559 = vmatpush1.bf16.msra.mxu0 %v2519
    %2560 = vmatprep.subr.bf16.mxu0 0
    %2561 = vmatpush1.bf16.msra.mxu0 %v2520
    %2562 = vmatprep.subr.bf16.mxu0 0
    %2563 = vmatpush1.bf16.msra.mxu0 %v2521
    %2564 = vmatprep.subr.bf16.mxu0 0
    %2565 = vmatpush1.bf16.msra.mxu0 %v2522
    %2566 = vmatprep.subr.bf16.mxu0 0
    %2567 = vmatpush1.bf16.msra.mxu0 %v2523
    %2568 = vmatprep.subr.bf16.mxu0 0
    %2569 = vmatpush1.bf16.msra.mxu0 %v2524
    %2570 = vmatprep.subr.bf16.mxu0 0
    %2571 = vmatpush1.bf16.msra.mxu0 %v2525
    %2572 = vmatprep.subr.bf16.mxu0 0
    %2573 = vmatpush1.bf16.msra.mxu0 %v2526
    %2574 = vmatprep.subr.bf16.mxu0 0
    %2575 = vmatpush1.bf16.msra.mxu0 %v2527
    %2576 = vmatprep.mubr.bf16.mxu0 %v1269
    %2577 = vmatmul.mubr.bf16.gmra.mrb[0].mxu0 %v2409
    %v2578 = vpop.f32.mrb[0].mxu0
    %v2579 = vadd.f32 %v2446, %v2578
    %v2580 = vpop.f32.mrb[0].mxu0
    %v2581 = vpop.f32.mrb[0].mxu0
    %v2582 = vpop.f32.mrb[0].mxu0
    %2583 = vdwg.mxu0
    %v2585 = vlaneseq
    %v2586 = vshrl.u32 %v2585, 7
    %v2587 = vsub.s32 0, %v2586
    %v2588 = vrot.slane %v2407, %v2587
    %v2590 = vmul.f32 %v1150, %v2588
    %2591 = vadd.xlane.f32.xlu0 %v2590
    %v2592 = vpop.xlane.xlu0 %2591
    %v2593 = vadd.f32 %v2579, %v2592
    %vm2594 = vcmp.lt.s32.totalorder %v788, 64
    %v2595 = vsel %vm2594, 1, 0
    %vm2596 = vcmp.eq.s32.totalorder %v2595, 1
    %v2597 = vsel %vm2596, %v2579, -1e+30
    %2598 = vmax.xlane.f32.xlu0 %v2597
    %v2599 = vpop.xlane.xlu0 %2598
    %v2600 = vsub.f32 %v2597, %v2599
    %v2601 = vmul.f32 %v2600, 1.442695
    %v2602 = vpow.pop %v2601
    %2603 = vadd.xlane.f32.xlu0 %v2602
    %v2604 = vpop.xlane.xlu0 %2603
    %v2605 = vlog2.pop %v2604
    %v2606 = vmul.f32 %v2605, 0.6931472
    %v2607 = vadd.f32 %v2606, %v2599
    %v2608 = vsub.f32 %v2597, %v2607
    %v2609 = vmin.f32 %v2593, 0.0
    %v2610 = vand.u32 2147483647, %v2593
    %v2611 = vsub.f32 0.0, %v2610
    %v2612 = vmul.f32 %v2611, 1.442695
    %v2613 = vpow.pop %v2612
    %v2614 = vadd.f32 %v2613, 1.0
    %v2615 = vlog2.pop %v2614
    %v2616 = vmul.f32 %v2615, 0.6931472
    %v2617 = vsub.f32 %v2609, %v2616
    %2619 = vset.pattern.permute.xlu0 64
    %2620 = vperm.xlu0 %2619, %v2617
    %v2621 = vpop.permute.xlu0 %2620
    %v2623 = vadd.f32 %v2608, %v2621
    %2624 = vst [vmem:[%s8] sm:$0xff] %v2623
    %v2625 = vxor.u32 %v2593, 2147483648
    %v2626 = vmul.f32 %v2625, 1.442695
    %v2627 = vpow.pop %v2626
    %v2628 = vadd.f32 %v2627, 1.0
    %v2629 = vrcp.pop %v2628
    %v2630 = vmul.f32 1.0, %v2629
    %v2631 = vlaneseq
    %v2632 = vshrl.u32 %v2631, 7
    %v2633 = vsub.s32 %v788, %v2632
    %v2634 = vrot.slane %v1040, %v2633
    %v2635 = vlaneseq
    %v2636 = vshrl.u32 %v2635, 7
    %v2637 = vsub.s32 %v788, %v2636
    %v2638 = vrot.slane %v1045, %v2637
    %v2639 = vlaneseq
    %v2640 = vshrl.u32 %v2639, 7
    %v2641 = vsub.s32 %v788, %v2640
    %v2642 = vrot.slane %v1050, %v2641
    %v2643 = vlaneseq
    %v2644 = vshrl.u32 %v2643, 7
    %v2645 = vsub.s32 %v788, %v2644
    %v2646 = vrot.slane %v1055, %v2645
    %v2647 = vlaneseq
    %v2648 = vshrl.u32 %v2647, 7
    %v2649 = vsub.s32 %v788, %v2648
    %v2650 = vrot.slane %v1060, %v2649
    %v2651 = vlaneseq
    %v2652 = vshrl.u32 %v2651, 7
    %v2653 = vsub.s32 %v788, %v2652
    %v2654 = vrot.slane %v1065, %v2653
    %v2655 = vlaneseq
    %v2656 = vshrl.u32 %v2655, 7
    %v2657 = vsub.s32 %v788, %v2656
    %v2658 = vrot.slane %v1070, %v2657
    %v2659 = vlaneseq
    %v2660 = vshrl.u32 %v2659, 7
    %v2661 = vsub.s32 %v788, %v2660
    %v2662 = vrot.slane %v1075, %v2661
    %v2663 = vsel %vm821, %v2638, %v2634
    %v2664 = vsel %vm823, %v2642, %v2663
    %v2665 = vsel %vm825, %v2646, %v2664
    %v2666 = vsel %vm827, %v2650, %v2665
    %v2667 = vsel %vm829, %v2654, %v2666
    %v2668 = vsel %vm831, %v2658, %v2667
    %v2669 = vsel %vm833, %v2662, %v2668
    %v2671 = vsel %vm836, %v2669, 0.0
    %2673 = vrot.lane.b32.xlu0 %v2630, 64
    %v2674 = vpop.permute.xlu0 %2673
    %vm2676 = vcmask 7168
    %v2677 = vsel %vm2676, %v2674, 0.0
    %2678 = vst [vmem:[%s10] sm:$0xff] %v1165
    %2679 = vst [vmem:[%s10 + $0x8] sm:$0xff] %v2671
    %2680 = vst [vmem:[%s10 + $0x10] sm:$0xff] %v2677
    // Predicated region
    $region286: #{attn_decoder_forward.1} parent=1 // pred_check
      _
    $region287: #{attn_decoder_forward.1} parent=1 // pred_check_branch
      %2682 = sbr.rel (0) target = $region289
    $region288: #{attn_decoder_forward.1} parent=1 // pred_region
      _
    $region289: #{attn_decoder_forward.1} parent=1 // pred_fallthru
      _
    // Predicated region
    $region290: #{attn_decoder_forward.1} parent=1 // pred_check
      _
    $region291: #{attn_decoder_forward.1} parent=1 // pred_check_branch
      %2684 = sbr.rel (0) target = $region293
    $region292: #{attn_decoder_forward.1} parent=1 // pred_region
      _
    $region293: #{attn_decoder_forward.1} parent=1 // pred_fallthru
      _
    // Predicated region
    $region294: #{attn_decoder_forward.1} parent=1 // pred_check
      _
    $region295: #{attn_decoder_forward.1} parent=1 // pred_check_branch
      %2686 = sbr.rel (0) target = $region297
    $region296: #{attn_decoder_forward.1} parent=1 // pred_region
      _
    $region297: #{attn_decoder_forward.1} parent=1 // pred_fallthru
      _
    // Predicated region
    $region298: #{attn_decoder_forward.1} parent=1 // pred_check
      _
    $region299: #{attn_decoder_forward.1} parent=1 // pred_check_branch
      %2688 = sbr.rel (0) target = $region301
    $region300: #{attn_decoder_forward.1} parent=1 // pred_region
      _
    $region301: #{attn_decoder_forward.1} parent=1 // pred_fallthru
      _
    // Predicated region
    $region302: #{attn_decoder_forward.1} parent=1 // pred_check
      _
    $region303: #{attn_decoder_forward.1} parent=1 // pred_check_branch
      %2690 = sbr.rel (0) target = $region305
    $region304: #{attn_decoder_forward.1} parent=1 // pred_region
      _
    $region305: #{attn_decoder_forward.1} parent=1 // pred_fallthru
      _
    // Predicated region
    $region306: #{attn_decoder_forward.1} parent=1 // pred_check
      _
    $region307: #{attn_decoder_forward.1} parent=1 // pred_check_branch
      %2692 = sbr.rel (0) target = $region309
    $region308: #{attn_decoder_forward.1} parent=1 // pred_region
      _
    $region309: #{attn_decoder_forward.1} parent=1 // pred_fallthru
      _
    %2693 = vsyncpa [#allocation5], 1
    %2694 = vsyncpa [#allocation9], 1
    %2695 = vsyncpa [#allocation6], 1
  %2696 = vsyncmov [#allocation3]
  %s2697 = vpop.sfrf %2696
  %p2698 = scmp.eq.s32.totalorder %s2697, 0
  %p2699 = pneg %p2698
  %2701 = shalt.err (%p2699)
  %s2702 = scalar_lea.sflag [#allocation3], 1
  %2703 = vsyncmov %s2702
  %s2704 = vpop.sfrf %2703
  %p2705 = scmp.eq.s32.totalorder %s2704, 0
  %p2706 = pneg %p2705
  %2708 = shalt.err (%p2706)
  %s2709 = scalar_lea.sflag [#allocation3], 2
  %2710 = vsyncmov %s2709
  %s2711 = vpop.sfrf %2710
  %p2712 = scmp.eq.s32.totalorder %s2711, 0
  %p2713 = pneg %p2712
  %2715 = shalt.err (%p2713)
  %s2716 = scalar_lea.sflag [#allocation3], 3
  %2717 = vsyncmov %s2716
  %s2718 = vpop.sfrf %2717
  %p2719 = scmp.eq.s32.totalorder %s2718, 0
  %p2720 = pneg %p2719
  %2722 = shalt.err (%p2720)
  %s2723 = scalar_lea.sflag [#allocation3], 4
  %2724 = vsyncmov %s2723
  %s2725 = vpop.sfrf %2724
  %p2726 = scmp.eq.s32.totalorder %s2725, 0
  %p2727 = pneg %p2726
  %2729 = shalt.err (%p2727)
  %s2730 = scalar_lea.sflag [#allocation3], 5
  %2731 = vsyncmov %s2730
  %s2732 = vpop.sfrf %2731
  %p2733 = scmp.eq.s32.totalorder %s2732, 0
  %p2734 = pneg %p2733
  %2736 = shalt.err (%p2734)
  %s2737 = scalar_lea.sflag [#allocation3], 6
  %2738 = vsyncmov %s2737
  %s2739 = vpop.sfrf %2738
  %p2740 = scmp.eq.s32.totalorder %s2739, 0
  %p2741 = pneg %p2740
  %2743 = shalt.err (%p2741)
  %s2744 = scalar_lea.sflag [#allocation3], 7
  %2745 = vsyncmov %s2744
  %s2746 = vpop.sfrf %2745
  %p2747 = scmp.eq.s32.totalorder %s2746, 0
  %p2748 = pneg %p2747
  %2750 = shalt.err (%p2748)

</llo_original>
